<compile_context>
chip_gen: v6e
topology: v6e:2x2x1
jax: 0.10.0
libtpu: 0.0.40
codegen_flags: <defaults>
</compile_context>

<pallas_src>
import math
import numpy as np
import jax
import jax.numpy as jnp
from jax.experimental import pallas as pl
from jax.experimental.pallas import tpu as pltpu

# ---------------- configuration (small shapes, consistent with the module) ---
B = 2            # batch
S = 8            # sequence length
D = 128          # d_model
NHEAD = 4        # nhead
HD = D // NHEAD  # head dim
FF = 256         # dim_feedforward
NLAYERS = 2      # num_encoder_layers
V = 384          # vocab.n_tokens
D4 = D // 4      # fc3 width
LANE = 128       # lane-dense padding for the head output

# dummy vocab: only the Note-Velocity id range matters for forward()
VEL_LO = 300     # vocab.token2id['Note-Velocity-MELODY_1']
VEL_HI = 350     # vocab.token2id['Note-Velocity-PIANO_126']


def _layer_norm(x, gamma, beta, eps=1e-5):
    mu = jnp.mean(x, axis=-1, keepdims=True)
    var = jnp.mean((x - mu) ** 2, axis=-1, keepdims=True)
    return (x - mu) * jax.lax.rsqrt(var + eps) * gamma + beta


# ------------------------- fused forward kernel ------------------------------
def fused_kernel(ids_ref,                                   # VMEM (B*S, 1) int32
                 emb_ref, pe_ref,                           # VMEM tables
                 wqkv_ref, bqkv_ref, wo_ref, bo_ref,        # stacked per-layer
                 g1_ref, be1_ref, w1_ref, b1_ref, w2_ref, b2_ref,
                 g2_ref, be2_ref,
                 gf_ref, bf_ref,                            # final encoder LN
                 fw1_ref, fb1_ref, fw2_ref, fb2_ref,        # MLP head
                 fw3_ref, fb3_ref, fw4_ref, fb4_ref,
                 out_ref):
    n = B * S

    # ---- token embedding (vectorized one-hot on MXU) + positional encoding --
    ids = ids_ref[...]                                       # (N, 1) int32
    lane_iota = jax.lax.broadcasted_iota(jnp.int32, (n, V), 1)
    onehot = (lane_iota == ids).astype(jnp.bfloat16)         # (N, V) single compare
    # NOTE: embedding is added to PE unscaled (no sqrt(d_model) factor), as in
    # the reference forward() reading.
    x = jnp.dot(onehot, emb_ref[...],
                preferred_element_type=jnp.float32)          # (N, D) f32
    x = x + jnp.concatenate([pe_ref[...]] * B, axis=0)       # add PE per batch

    # ---- transformer encoder layers (post-norm, relu FFN, eval mode) --------
    for l in range(NLAYERS):
        qkv = jnp.dot(x.astype(jnp.bfloat16), wqkv_ref[l],
                      preferred_element_type=jnp.float32) + bqkv_ref[l]  # (N,3D)
        qkv_bf = qkv.astype(jnp.bfloat16)

        # scores for all (batch, head) pairs, stacked on the sublane axis so
        # the softmax VPU/XLU/EUP ops are issued once for the whole layer.
        score_blocks = []
        v_blocks = []
        for b in range(B):
            r0 = b * S
            for h in range(NHEAD):
                qh = qkv_bf[r0:r0 + S, h * HD:(h + 1) * HD]
                kh = qkv_bf[r0:r0 + S, D + h * HD:D + (h + 1) * HD]
                vh = qkv_bf[r0:r0 + S, 2 * D + h * HD:2 * D + (h + 1) * HD]
                # 1/sqrt(HD) is folded into the Q block of wqkv at init time.
                s = jax.lax.dot_general(qh, kh, (((1,), (1,)), ((), ())),
                                        preferred_element_type=jnp.float32)
                score_blocks.append(s)                       # (S, S)
                v_blocks.append(vh)                          # (S, HD) bf16
        s_all = jnp.concatenate(score_blocks, axis=0)        # (B*NHEAD*S, S)
        s_all = s_all - jnp.max(s_all, axis=-1, keepdims=True)
        p_all = jnp.exp(s_all)
        p_all = p_all * pl.reciprocal(jnp.sum(p_all, axis=-1, keepdims=True),
                                      approx=True)
        p_all = p_all.astype(jnp.bfloat16)

        # PV per head, lane-concat heads, sublane-concat batches, then one
        # (N, D) @ (D, D) output projection (no per-head wo lane slices).
        ctx_rows = []
        for b in range(B):
            head_ctx = []
            for h in range(NHEAD):
                idx = b * NHEAD + h
                p = p_all[idx * S:(idx + 1) * S, :]
                head_ctx.append(jnp.dot(p, v_blocks[idx],
                                        preferred_element_type=jnp.float32))
            ctx_rows.append(jnp.concatenate(head_ctx, axis=1))   # (S, D)
        ctx_all = jnp.concatenate(ctx_rows, axis=0)              # (N, D)

        attn = jnp.dot(ctx_all.astype(jnp.bfloat16), wo_ref[l],
                       preferred_element_type=jnp.float32) + bo_ref[l]

        # residual + norm1 (dropout = identity in eval mode)
        y = _layer_norm(x + attn, g1_ref[l], be1_ref[l])
        # feed-forward
        h1 = jnp.dot(y.astype(jnp.bfloat16), w1_ref[l],
                     preferred_element_type=jnp.float32) + b1_ref[l]
        h1 = jnp.maximum(h1, 0.0)
        ff = jnp.dot(h1.astype(jnp.bfloat16), w2_ref[l],
                     preferred_element_type=jnp.float32) + b2_ref[l]
        # residual + norm2
        x = _layer_norm(y + ff, g2_ref[l], be2_ref[l])

    # ---- final encoder LayerNorm on token 0 of each batch + MLP head --------
    # B=2 rows: two 1-row slices + concat (epilogue, negligible cost here).
    x0 = jnp.concatenate([x[b * S:b * S + 1, :] for b in range(B)], axis=0)
    x0 = _layer_norm(x0, gf_ref[...], bf_ref[...])            # (B, D)
    h = jnp.dot(x0.astype(jnp.bfloat16), fw1_ref[...],
                preferred_element_type=jnp.float32) + fb1_ref[...]
    h = jnp.maximum(h, 0.0)
    h = jnp.dot(h.astype(jnp.bfloat16), fw2_ref[...],
                preferred_element_type=jnp.float32) + fb2_ref[...]
    h = jnp.maximum(h, 0.0)
    h = jnp.dot(h.astype(jnp.bfloat16), fw3_ref[...],
                preferred_element_type=jnp.float32) + fb3_ref[...]
    h = jnp.maximum(h, 0.0)
    out_ref[...] = jnp.dot(h.astype(jnp.bfloat16), fw4_ref[...],
                           preferred_element_type=jnp.float32) + fb4_ref[...]


# ------------------------- wrapper -------------------------------------------
def _forward(src, params):
    # src: (B, S) int32 token ids
    src = src.astype(jnp.int32)
    # src_mask(): zero the Note-Velocity id range (done in the wrapper so the
    # kernel gets a ready-to-compare (N, 1) id column).
    masked = jnp.where(jnp.logical_and(src >= VEL_LO, src <= VEL_HI), 0, src)
    ids = masked.reshape(B * S, 1)

    args = (ids, params["emb"], params["pe"],
            params["wqkv"], params["bqkv"], params["wo"], params["bo"],
            params["g1"], params["be1"], params["w1"], params["b1"],
            params["w2"], params["b2"], params["g2"], params["be2"],
            params["gf"], params["bf"],
            params["fw1"], params["fb1"], params["fw2"], params["fb2"],
            params["fw3"], params["fb3"], params["fw4"], params["fb4"])
    in_specs = [pl.BlockSpec(memory_space=pltpu.MemorySpace.VMEM)
                for _ in range(len(args))]
    out = pl.pallas_call(
        fused_kernel,
        out_shape=jax.ShapeDtypeStruct((B, LANE), jnp.float32),
        in_specs=in_specs,
        out_specs=pl.BlockSpec(memory_space=pltpu.MemorySpace.VMEM),
    )(*args)
    return out[:, :2]                     # lane-dense kernel output -> (B, 2)


pitch_discriminator_forward = jax.jit(_forward)


# ------------------------- parameter setup -----------------------------------
def sinusoidal_pe(seq_len, d_model):
    pe = np.zeros((seq_len, d_model), dtype=np.float32)
    pos = np.arange(seq_len, dtype=np.float32)[:, None]
    div = np.exp(np.arange(0, d_model, 2, dtype=np.float32)
                 * (-math.log(10000.0) / d_model))
    pe[:, 0::2] = np.sin(pos * div)
    pe[:, 1::2] = np.cos(pos * div)
    return jnp.asarray(pe)


def init_params(key):
    def wf32(k, shape, scale=0.02):
        return scale * jax.random.normal(k, shape, jnp.float32)

    keys = iter(jax.random.split(key, 32))
    inv_sqrt_hd = 1.0 / math.sqrt(HD)

    # stacked encoder-layer matmul weights (leading NLAYERS axis), bf16.
    # 1/sqrt(head_dim) is folded into the Q block of wqkv (a real checkpoint's
    # q-bias would need the same scaling; it is zero here).
    wqkv_list = []
    for _ in range(NLAYERS):
        wl = wf32(next(keys), (D, 3 * D))
        wl = wl.at[:, :D].multiply(inv_sqrt_hd)
        wqkv_list.append(wl.astype(jnp.bfloat16))
    wqkv = jnp.stack(wqkv_list)
    wo = jnp.stack([wf32(next(keys), (D, D)).astype(jnp.bfloat16)
                    for _ in range(NLAYERS)])
    w1 = jnp.stack([wf32(next(keys), (D, FF)).astype(jnp.bfloat16)
                    for _ in range(NLAYERS)])
    w2 = jnp.stack([wf32(next(keys), (FF, D)).astype(jnp.bfloat16)
                    for _ in range(NLAYERS)])

    def zeros_l(c):
        return jnp.zeros((NLAYERS, 1, c), jnp.float32)

    def ones_l(c):
        return jnp.ones((NLAYERS, 1, c), jnp.float32)

    # head fc3/fc4 zero-padded to lane width 128 (lane-dense output)
    fw3 = jnp.zeros((D, LANE), jnp.bfloat16).at[:, :D4].set(
        wf32(next(keys), (D, D4)).astype(jnp.bfloat16))
    fw4 = jnp.zeros((LANE, LANE), jnp.bfloat16).at[:D4, :2].set(
        wf32(next(keys), (D4, 2)).astype(jnp.bfloat16))

    params = {
        "emb": wf32(next(keys), (V, D)).astype(jnp.bfloat16),  # embedding table
        "pe": sinusoidal_pe(S, D),                              # (S, D) f32
        # encoder layers (stacked)
        "wqkv": wqkv, "bqkv": zeros_l(3 * D),
        "wo": wo, "bo": zeros_l(D),
        "g1": ones_l(D), "be1": zeros_l(D),
        "w1": w1, "b1": zeros_l(FF),
        "w2": w2, "b2": zeros_l(D),
        "g2": ones_l(D), "be2": zeros_l(D),
        # final encoder LayerNorm
        "gf": jnp.ones((1, D), jnp.float32),
        "bf": jnp.zeros((1, D), jnp.float32),
        # head MLP (weights stored (in, out); PyTorch stores (out, in) and
        # applies x @ W.T — same math; synthetic init here)
        "fw1": wf32(next(keys), (D, 4 * D)).astype(jnp.bfloat16),
        "fb1": jnp.zeros((1, 4 * D), jnp.float32),
        "fw2": wf32(next(keys), (4 * D, D)).astype(jnp.bfloat16),
        "fb2": jnp.zeros((1, D), jnp.float32),
        "fw3": fw3, "fb3": jnp.zeros((1, LANE), jnp.float32),
        "fw4": fw4, "fb4": jnp.zeros((1, LANE), jnp.float32),
    }
    return params


if __name__ == "__main__":
    key = jax.random.PRNGKey(0)
    pkey, dkey = jax.random.split(key)
    params = init_params(pkey)
    # token ids in [0, V); some land in the velocity range and are masked to 0
    src = jax.random.randint(dkey, (B, S), 0, V, dtype=jnp.int32)
    out = pitch_discriminator_forward(src, params)
    out = jax.block_until_ready(out)
    assert out.shape == (B, 2) and out.dtype == jnp.float32
    assert bool(jnp.all(jnp.isfinite(out)))
    print("KERNEL_OK")
</pallas_src>

<mosaic_0001>
module attributes {stable_mosaic.version = 11 : i64} {
  func.func @fused_kernel(%arg0: memref<16x1xi32, #tpu.memory_space<vmem>>, %arg1: memref<384x128xbf16, #tpu.memory_space<vmem>>, %arg2: memref<8x128xf32, #tpu.memory_space<vmem>>, %arg3: memref<2x128x384xbf16, #tpu.memory_space<vmem>>, %arg4: memref<2x1x384xf32, #tpu.memory_space<vmem>>, %arg5: memref<2x128x128xbf16, #tpu.memory_space<vmem>>, %arg6: memref<2x1x128xf32, #tpu.memory_space<vmem>>, %arg7: memref<2x1x128xf32, #tpu.memory_space<vmem>>, %arg8: memref<2x1x128xf32, #tpu.memory_space<vmem>>, %arg9: memref<2x128x256xbf16, #tpu.memory_space<vmem>>, %arg10: memref<2x1x256xf32, #tpu.memory_space<vmem>>, %arg11: memref<2x256x128xbf16, #tpu.memory_space<vmem>>, %arg12: memref<2x1x128xf32, #tpu.memory_space<vmem>>, %arg13: memref<2x1x128xf32, #tpu.memory_space<vmem>>, %arg14: memref<2x1x128xf32, #tpu.memory_space<vmem>>, %arg15: memref<1x128xf32, #tpu.memory_space<vmem>>, %arg16: memref<1x128xf32, #tpu.memory_space<vmem>>, %arg17: memref<128x512xbf16, #tpu.memory_space<vmem>>, %arg18: memref<1x512xf32, #tpu.memory_space<vmem>>, %arg19: memref<512x128xbf16, #tpu.memory_space<vmem>>, %arg20: memref<1x128xf32, #tpu.memory_space<vmem>>, %arg21: memref<128x128xbf16, #tpu.memory_space<vmem>>, %arg22: memref<1x128xf32, #tpu.memory_space<vmem>>, %arg23: memref<128x128xbf16, #tpu.memory_space<vmem>>, %arg24: memref<1x128xf32, #tpu.memory_space<vmem>>, %arg25: memref<2x128xf32, #tpu.memory_space<vmem>>) attributes {dimension_semantics = [], scalar_prefetch = 0 : i64, scratch_operands = 0 : i64, tpu.core_type = #tpu.core_type<tc>} {
    %c0 = arith.constant 0 : index
    %c0_0 = arith.constant 0 : index
    %0 = vector.load %arg0[%c0, %c0_0] : memref<16x1xi32, #tpu.memory_space<vmem>>, vector<16x1xi32>
    %1 = tpu.iota {dimensions = array<i32: 1>} : vector<16x384xi32>
    %2 = vector.broadcast %0 : vector<16x1xi32> to vector<16x384xi32>
    %3 = arith.cmpi eq, %1, %2 : vector<16x384xi32>
    %4 = arith.extui %3 : vector<16x384xi1> to vector<16x384xi32>
    %5 = arith.sitofp %4 : vector<16x384xi32> to vector<16x384xf32>
    %6 = arith.truncf %5 : vector<16x384xf32> to vector<16x384xbf16>
    %c0_1 = arith.constant 0 : index
    %c0_2 = arith.constant 0 : index
    %7 = vector.load %arg1[%c0_1, %c0_2] : memref<384x128xbf16, #tpu.memory_space<vmem>>, vector<384x128xbf16>
    %cst = arith.constant dense<0.000000e+00> : vector<16x128xf32>
    %8 = tpu.matmul %6, %7, %cst {dimension_numbers = #tpu.dot_dimension_numbers<[1], [0], [0], [1], [0, 0, 1, 1], [], []>} : vector<16x384xbf16>, vector<384x128xbf16>, vector<16x128xf32> -> vector<16x128xf32>
    %c0_3 = arith.constant 0 : index
    %c0_4 = arith.constant 0 : index
    %9 = vector.load %arg2[%c0_3, %c0_4] : memref<8x128xf32, #tpu.memory_space<vmem>>, vector<8x128xf32>
    %10 = tpu.concatenate %9, %9 in 0 : vector<8x128xf32>, vector<8x128xf32> -> vector<16x128xf32>
    %11 = arith.addf %8, %10 : vector<16x128xf32>
    %12 = arith.truncf %11 : vector<16x128xf32> to vector<16x128xbf16>
    %c0_5 = arith.constant 0 : index
    %c0_6 = arith.constant 0 : index
    %c0_7 = arith.constant 0 : index
    %13 = vector.load %arg3[%c0_5, %c0_6, %c0_7] : memref<2x128x384xbf16, #tpu.memory_space<vmem>>, vector<1x128x384xbf16>
    %14 = vector.shape_cast %13 : vector<1x128x384xbf16> to vector<128x384xbf16>
    %cst_8 = arith.constant dense<0.000000e+00> : vector<16x384xf32>
    %15 = tpu.matmul %12, %14, %cst_8 {dimension_numbers = #tpu.dot_dimension_numbers<[1], [0], [0], [1], [0, 0, 1, 1], [], []>} : vector<16x128xbf16>, vector<128x384xbf16>, vector<16x384xf32> -> vector<16x384xf32>
    %c0_9 = arith.constant 0 : index
    %c0_10 = arith.constant 0 : index
    %c0_11 = arith.constant 0 : index
    %16 = vector.load %arg4[%c0_9, %c0_10, %c0_11] : memref<2x1x384xf32, #tpu.memory_space<vmem>>, vector<1x1x384xf32>
    %17 = vector.shape_cast %16 : vector<1x1x384xf32> to vector<1x384xf32>
    %18 = vector.broadcast %17 : vector<1x384xf32> to vector<16x384xf32>
    %19 = arith.addf %15, %18 : vector<16x384xf32>
    %20 = arith.truncf %19 : vector<16x384xf32> to vector<16x384xbf16>
    %21 = vector.extract_strided_slice %20 {offsets = [0, 0], sizes = [8, 32], strides = [1, 1]} : vector<16x384xbf16> to vector<8x32xbf16>
    %22 = vector.extract_strided_slice %20 {offsets = [0, 128], sizes = [8, 32], strides = [1, 1]} : vector<16x384xbf16> to vector<8x32xbf16>
    %23 = vector.extract_strided_slice %20 {offsets = [0, 256], sizes = [8, 32], strides = [1, 1]} : vector<16x384xbf16> to vector<8x32xbf16>
    %cst_12 = arith.constant dense<0.000000e+00> : vector<8x8xf32>
    %24 = tpu.matmul %21, %22, %cst_12 {dimension_numbers = #tpu.dot_dimension_numbers<[1], [1], [0], [0], [0, 0, 1, 0], [], []>} : vector<8x32xbf16>, vector<8x32xbf16>, vector<8x8xf32> -> vector<8x8xf32>
    %25 = vector.extract_strided_slice %20 {offsets = [0, 32], sizes = [8, 32], strides = [1, 1]} : vector<16x384xbf16> to vector<8x32xbf16>
    %26 = vector.extract_strided_slice %20 {offsets = [0, 160], sizes = [8, 32], strides = [1, 1]} : vector<16x384xbf16> to vector<8x32xbf16>
    %27 = vector.extract_strided_slice %20 {offsets = [0, 288], sizes = [8, 32], strides = [1, 1]} : vector<16x384xbf16> to vector<8x32xbf16>
    %cst_13 = arith.constant dense<0.000000e+00> : vector<8x8xf32>
    %28 = tpu.matmul %25, %26, %cst_13 {dimension_numbers = #tpu.dot_dimension_numbers<[1], [1], [0], [0], [0, 0, 1, 0], [], []>} : vector<8x32xbf16>, vector<8x32xbf16>, vector<8x8xf32> -> vector<8x8xf32>
    %29 = vector.extract_strided_slice %20 {offsets = [0, 64], sizes = [8, 32], strides = [1, 1]} : vector<16x384xbf16> to vector<8x32xbf16>
    %30 = vector.extract_strided_slice %20 {offsets = [0, 192], sizes = [8, 32], strides = [1, 1]} : vector<16x384xbf16> to vector<8x32xbf16>
    %31 = vector.extract_strided_slice %20 {offsets = [0, 320], sizes = [8, 32], strides = [1, 1]} : vector<16x384xbf16> to vector<8x32xbf16>
    %cst_14 = arith.constant dense<0.000000e+00> : vector<8x8xf32>
    %32 = tpu.matmul %29, %30, %cst_14 {dimension_numbers = #tpu.dot_dimension_numbers<[1], [1], [0], [0], [0, 0, 1, 0], [], []>} : vector<8x32xbf16>, vector<8x32xbf16>, vector<8x8xf32> -> vector<8x8xf32>
    %33 = vector.extract_strided_slice %20 {offsets = [0, 96], sizes = [8, 32], strides = [1, 1]} : vector<16x384xbf16> to vector<8x32xbf16>
    %34 = vector.extract_strided_slice %20 {offsets = [0, 224], sizes = [8, 32], strides = [1, 1]} : vector<16x384xbf16> to vector<8x32xbf16>
    %35 = vector.extract_strided_slice %20 {offsets = [0, 352], sizes = [8, 32], strides = [1, 1]} : vector<16x384xbf16> to vector<8x32xbf16>
    %cst_15 = arith.constant dense<0.000000e+00> : vector<8x8xf32>
    %36 = tpu.matmul %33, %34, %cst_15 {dimension_numbers = #tpu.dot_dimension_numbers<[1], [1], [0], [0], [0, 0, 1, 0], [], []>} : vector<8x32xbf16>, vector<8x32xbf16>, vector<8x8xf32> -> vector<8x8xf32>
    %37 = vector.extract_strided_slice %20 {offsets = [8, 0], sizes = [8, 32], strides = [1, 1]} : vector<16x384xbf16> to vector<8x32xbf16>
    %38 = vector.extract_strided_slice %20 {offsets = [8, 128], sizes = [8, 32], strides = [1, 1]} : vector<16x384xbf16> to vector<8x32xbf16>
    %39 = vector.extract_strided_slice %20 {offsets = [8, 256], sizes = [8, 32], strides = [1, 1]} : vector<16x384xbf16> to vector<8x32xbf16>
    %cst_16 = arith.constant dense<0.000000e+00> : vector<8x8xf32>
    %40 = tpu.matmul %37, %38, %cst_16 {dimension_numbers = #tpu.dot_dimension_numbers<[1], [1], [0], [0], [0, 0, 1, 0], [], []>} : vector<8x32xbf16>, vector<8x32xbf16>, vector<8x8xf32> -> vector<8x8xf32>
    %41 = vector.extract_strided_slice %20 {offsets = [8, 32], sizes = [8, 32], strides = [1, 1]} : vector<16x384xbf16> to vector<8x32xbf16>
    %42 = vector.extract_strided_slice %20 {offsets = [8, 160], sizes = [8, 32], strides = [1, 1]} : vector<16x384xbf16> to vector<8x32xbf16>
    %43 = vector.extract_strided_slice %20 {offsets = [8, 288], sizes = [8, 32], strides = [1, 1]} : vector<16x384xbf16> to vector<8x32xbf16>
    %cst_17 = arith.constant dense<0.000000e+00> : vector<8x8xf32>
    %44 = tpu.matmul %41, %42, %cst_17 {dimension_numbers = #tpu.dot_dimension_numbers<[1], [1], [0], [0], [0, 0, 1, 0], [], []>} : vector<8x32xbf16>, vector<8x32xbf16>, vector<8x8xf32> -> vector<8x8xf32>
    %45 = vector.extract_strided_slice %20 {offsets = [8, 64], sizes = [8, 32], strides = [1, 1]} : vector<16x384xbf16> to vector<8x32xbf16>
    %46 = vector.extract_strided_slice %20 {offsets = [8, 192], sizes = [8, 32], strides = [1, 1]} : vector<16x384xbf16> to vector<8x32xbf16>
    %47 = vector.extract_strided_slice %20 {offsets = [8, 320], sizes = [8, 32], strides = [1, 1]} : vector<16x384xbf16> to vector<8x32xbf16>
    %cst_18 = arith.constant dense<0.000000e+00> : vector<8x8xf32>
    %48 = tpu.matmul %45, %46, %cst_18 {dimension_numbers = #tpu.dot_dimension_numbers<[1], [1], [0], [0], [0, 0, 1, 0], [], []>} : vector<8x32xbf16>, vector<8x32xbf16>, vector<8x8xf32> -> vector<8x8xf32>
    %49 = vector.extract_strided_slice %20 {offsets = [8, 96], sizes = [8, 32], strides = [1, 1]} : vector<16x384xbf16> to vector<8x32xbf16>
    %50 = vector.extract_strided_slice %20 {offsets = [8, 224], sizes = [8, 32], strides = [1, 1]} : vector<16x384xbf16> to vector<8x32xbf16>
    %51 = vector.extract_strided_slice %20 {offsets = [8, 352], sizes = [8, 32], strides = [1, 1]} : vector<16x384xbf16> to vector<8x32xbf16>
    %cst_19 = arith.constant dense<0.000000e+00> : vector<8x8xf32>
    %52 = tpu.matmul %49, %50, %cst_19 {dimension_numbers = #tpu.dot_dimension_numbers<[1], [1], [0], [0], [0, 0, 1, 0], [], []>} : vector<8x32xbf16>, vector<8x32xbf16>, vector<8x8xf32> -> vector<8x8xf32>
    %53 = tpu.concatenate %24, %28, %32, %36, %40, %44, %48, %52 in 0 : vector<8x8xf32>, vector<8x8xf32>, vector<8x8xf32>, vector<8x8xf32>, vector<8x8xf32>, vector<8x8xf32>, vector<8x8xf32>, vector<8x8xf32> -> vector<64x8xf32>
    %cst_20 = arith.constant dense<0xFF800000> : vector<64xf32>
    %54 = vector.multi_reduction <maximumf>, %53, %cst_20 [1] : vector<64x8xf32> to vector<64xf32>
    %55 = vector.shape_cast %54 : vector<64xf32> to vector<64x1xf32>
    %56 = vector.broadcast %55 : vector<64x1xf32> to vector<64x8xf32>
    %57 = arith.subf %53, %56 : vector<64x8xf32>
    %58 = math.exp %57 : vector<64x8xf32>
    %cst_21 = arith.constant dense<0.000000e+00> : vector<64xf32>
    %59 = vector.multi_reduction <add>, %58, %cst_21 [1] : vector<64x8xf32> to vector<64xf32>
    %60 = vector.shape_cast %59 : vector<64xf32> to vector<64x1xf32>
    %61 = tpu.reciprocal %60 {approx = true} : vector<64x1xf32> -> vector<64x1xf32>
    %62 = vector.broadcast %61 : vector<64x1xf32> to vector<64x8xf32>
    %63 = arith.mulf %58, %62 : vector<64x8xf32>
    %64 = arith.truncf %63 : vector<64x8xf32> to vector<64x8xbf16>
    %65 = vector.extract_strided_slice %64 {offsets = [0, 0], sizes = [8, 8], strides = [1, 1]} : vector<64x8xbf16> to vector<8x8xbf16>
    %cst_22 = arith.constant dense<0.000000e+00> : vector<8x32xf32>
    %66 = tpu.matmul %65, %23, %cst_22 {dimension_numbers = #tpu.dot_dimension_numbers<[1], [0], [0], [1], [0, 0, 1, 1], [], []>} : vector<8x8xbf16>, vector<8x32xbf16>, vector<8x32xf32> -> vector<8x32xf32>
    %67 = vector.extract_strided_slice %64 {offsets = [8, 0], sizes = [8, 8], strides = [1, 1]} : vector<64x8xbf16> to vector<8x8xbf16>
    %cst_23 = arith.constant dense<0.000000e+00> : vector<8x32xf32>
    %68 = tpu.matmul %67, %27, %cst_23 {dimension_numbers = #tpu.dot_dimension_numbers<[1], [0], [0], [1], [0, 0, 1, 1], [], []>} : vector<8x8xbf16>, vector<8x32xbf16>, vector<8x32xf32> -> vector<8x32xf32>
    %69 = vector.extract_strided_slice %64 {offsets = [16, 0], sizes = [8, 8], strides = [1, 1]} : vector<64x8xbf16> to vector<8x8xbf16>
    %cst_24 = arith.constant dense<0.000000e+00> : vector<8x32xf32>
    %70 = tpu.matmul %69, %31, %cst_24 {dimension_numbers = #tpu.dot_dimension_numbers<[1], [0], [0], [1], [0, 0, 1, 1], [], []>} : vector<8x8xbf16>, vector<8x32xbf16>, vector<8x32xf32> -> vector<8x32xf32>
    %71 = vector.extract_strided_slice %64 {offsets = [24, 0], sizes = [8, 8], strides = [1, 1]} : vector<64x8xbf16> to vector<8x8xbf16>
    %cst_25 = arith.constant dense<0.000000e+00> : vector<8x32xf32>
    %72 = tpu.matmul %71, %35, %cst_25 {dimension_numbers = #tpu.dot_dimension_numbers<[1], [0], [0], [1], [0, 0, 1, 1], [], []>} : vector<8x8xbf16>, vector<8x32xbf16>, vector<8x32xf32> -> vector<8x32xf32>
    %73 = tpu.concatenate %66, %68, %70, %72 in 1 : vector<8x32xf32>, vector<8x32xf32>, vector<8x32xf32>, vector<8x32xf32> -> vector<8x128xf32>
    %74 = vector.extract_strided_slice %64 {offsets = [32, 0], sizes = [8, 8], strides = [1, 1]} : vector<64x8xbf16> to vector<8x8xbf16>
    %cst_26 = arith.constant dense<0.000000e+00> : vector<8x32xf32>
    %75 = tpu.matmul %74, %39, %cst_26 {dimension_numbers = #tpu.dot_dimension_numbers<[1], [0], [0], [1], [0, 0, 1, 1], [], []>} : vector<8x8xbf16>, vector<8x32xbf16>, vector<8x32xf32> -> vector<8x32xf32>
    %76 = vector.extract_strided_slice %64 {offsets = [40, 0], sizes = [8, 8], strides = [1, 1]} : vector<64x8xbf16> to vector<8x8xbf16>
    %cst_27 = arith.constant dense<0.000000e+00> : vector<8x32xf32>
    %77 = tpu.matmul %76, %43, %cst_27 {dimension_numbers = #tpu.dot_dimension_numbers<[1], [0], [0], [1], [0, 0, 1, 1], [], []>} : vector<8x8xbf16>, vector<8x32xbf16>, vector<8x32xf32> -> vector<8x32xf32>
    %78 = vector.extract_strided_slice %64 {offsets = [48, 0], sizes = [8, 8], strides = [1, 1]} : vector<64x8xbf16> to vector<8x8xbf16>
    %cst_28 = arith.constant dense<0.000000e+00> : vector<8x32xf32>
    %79 = tpu.matmul %78, %47, %cst_28 {dimension_numbers = #tpu.dot_dimension_numbers<[1], [0], [0], [1], [0, 0, 1, 1], [], []>} : vector<8x8xbf16>, vector<8x32xbf16>, vector<8x32xf32> -> vector<8x32xf32>
    %80 = vector.extract_strided_slice %64 {offsets = [56, 0], sizes = [8, 8], strides = [1, 1]} : vector<64x8xbf16> to vector<8x8xbf16>
    %cst_29 = arith.constant dense<0.000000e+00> : vector<8x32xf32>
    %81 = tpu.matmul %80, %51, %cst_29 {dimension_numbers = #tpu.dot_dimension_numbers<[1], [0], [0], [1], [0, 0, 1, 1], [], []>} : vector<8x8xbf16>, vector<8x32xbf16>, vector<8x32xf32> -> vector<8x32xf32>
    %82 = tpu.concatenate %75, %77, %79, %81 in 1 : vector<8x32xf32>, vector<8x32xf32>, vector<8x32xf32>, vector<8x32xf32> -> vector<8x128xf32>
    %83 = tpu.concatenate %73, %82 in 0 : vector<8x128xf32>, vector<8x128xf32> -> vector<16x128xf32>
    %84 = arith.truncf %83 : vector<16x128xf32> to vector<16x128xbf16>
    %c0_30 = arith.constant 0 : index
    %c0_31 = arith.constant 0 : index
    %c0_32 = arith.constant 0 : index
    %85 = vector.load %arg5[%c0_30, %c0_31, %c0_32] : memref<2x128x128xbf16, #tpu.memory_space<vmem>>, vector<1x128x128xbf16>
    %86 = vector.shape_cast %85 : vector<1x128x128xbf16> to vector<128x128xbf16>
    %cst_33 = arith.constant dense<0.000000e+00> : vector<16x128xf32>
    %87 = tpu.matmul %84, %86, %cst_33 {dimension_numbers = #tpu.dot_dimension_numbers<[1], [0], [0], [1], [0, 0, 1, 1], [], []>} : vector<16x128xbf16>, vector<128x128xbf16>, vector<16x128xf32> -> vector<16x128xf32>
    %c0_34 = arith.constant 0 : index
    %c0_35 = arith.constant 0 : index
    %c0_36 = arith.constant 0 : index
    %88 = vector.load %arg6[%c0_34, %c0_35, %c0_36] : memref<2x1x128xf32, #tpu.memory_space<vmem>>, vector<1x1x128xf32>
    %89 = vector.shape_cast %88 : vector<1x1x128xf32> to vector<1x128xf32>
    %90 = vector.broadcast %89 : vector<1x128xf32> to vector<16x128xf32>
    %91 = arith.addf %87, %90 : vector<16x128xf32>
    %92 = arith.addf %11, %91 : vector<16x128xf32>
    %c0_37 = arith.constant 0 : index
    %c0_38 = arith.constant 0 : index
    %c0_39 = arith.constant 0 : index
    %93 = vector.load %arg7[%c0_37, %c0_38, %c0_39] : memref<2x1x128xf32, #tpu.memory_space<vmem>>, vector<1x1x128xf32>
    %94 = vector.shape_cast %93 : vector<1x1x128xf32> to vector<1x128xf32>
    %c0_40 = arith.constant 0 : index
    %c0_41 = arith.constant 0 : index
    %c0_42 = arith.constant 0 : index
    %95 = vector.load %arg8[%c0_40, %c0_41, %c0_42] : memref<2x1x128xf32, #tpu.memory_space<vmem>>, vector<1x1x128xf32>
    %96 = vector.shape_cast %95 : vector<1x1x128xf32> to vector<1x128xf32>
    %cst_43 = arith.constant dense<0.000000e+00> : vector<16xf32>
    %97 = vector.multi_reduction <add>, %92, %cst_43 [1] : vector<16x128xf32> to vector<16xf32>
    %98 = vector.shape_cast %97 : vector<16xf32> to vector<16x1xf32>
    %cst_44 = arith.constant 1.280000e+02 : f32
    %99 = vector.broadcast %cst_44 : f32 to vector<16x1xf32>
    %100 = arith.divf %98, %99 : vector<16x1xf32>
    %101 = vector.broadcast %100 : vector<16x1xf32> to vector<16x128xf32>
    %102 = arith.subf %92, %101 : vector<16x128xf32>
    %103 = arith.mulf %102, %102 : vector<16x128xf32>
    %cst_45 = arith.constant dense<0.000000e+00> : vector<16xf32>
    %104 = vector.multi_reduction <add>, %103, %cst_45 [1] : vector<16x128xf32> to vector<16xf32>
    %105 = vector.shape_cast %104 : vector<16xf32> to vector<16x1xf32>
    %cst_46 = arith.constant 1.280000e+02 : f32
    %106 = vector.broadcast %cst_46 : f32 to vector<16x1xf32>
    %107 = arith.divf %105, %106 : vector<16x1xf32>
    %108 = vector.broadcast %100 : vector<16x1xf32> to vector<16x128xf32>
    %109 = arith.subf %92, %108 : vector<16x128xf32>
    %cst_47 = arith.constant 9.99999974E-6 : f32
    %110 = vector.broadcast %cst_47 : f32 to vector<16x1xf32>
    %111 = arith.addf %107, %110 : vector<16x1xf32>
    %112 = math.rsqrt %111 : vector<16x1xf32>
    %113 = vector.broadcast %112 : vector<16x1xf32> to vector<16x128xf32>
    %114 = arith.mulf %109, %113 : vector<16x128xf32>
    %115 = vector.broadcast %94 : vector<1x128xf32> to vector<16x128xf32>
    %116 = arith.mulf %114, %115 : vector<16x128xf32>
    %117 = vector.broadcast %96 : vector<1x128xf32> to vector<16x128xf32>
    %118 = arith.addf %116, %117 : vector<16x128xf32>
    %119 = arith.truncf %118 : vector<16x128xf32> to vector<16x128xbf16>
    %c0_48 = arith.constant 0 : index
    %c0_49 = arith.constant 0 : index
    %c0_50 = arith.constant 0 : index
    %120 = vector.load %arg9[%c0_48, %c0_49, %c0_50] : memref<2x128x256xbf16, #tpu.memory_space<vmem>>, vector<1x128x256xbf16>
    %121 = vector.shape_cast %120 : vector<1x128x256xbf16> to vector<128x256xbf16>
    %cst_51 = arith.constant dense<0.000000e+00> : vector<16x256xf32>
    %122 = tpu.matmul %119, %121, %cst_51 {dimension_numbers = #tpu.dot_dimension_numbers<[1], [0], [0], [1], [0, 0, 1, 1], [], []>} : vector<16x128xbf16>, vector<128x256xbf16>, vector<16x256xf32> -> vector<16x256xf32>
    %c0_52 = arith.constant 0 : index
    %c0_53 = arith.constant 0 : index
    %c0_54 = arith.constant 0 : index
    %123 = vector.load %arg10[%c0_52, %c0_53, %c0_54] : memref<2x1x256xf32, #tpu.memory_space<vmem>>, vector<1x1x256xf32>
    %124 = vector.shape_cast %123 : vector<1x1x256xf32> to vector<1x256xf32>
    %125 = vector.broadcast %124 : vector<1x256xf32> to vector<16x256xf32>
    %126 = arith.addf %122, %125 : vector<16x256xf32>
    %cst_55 = arith.constant 0.000000e+00 : f32
    %127 = vector.broadcast %cst_55 : f32 to vector<16x256xf32>
    %128 = arith.maximumf %126, %127 : vector<16x256xf32>
    %129 = arith.truncf %128 : vector<16x256xf32> to vector<16x256xbf16>
    %c0_56 = arith.constant 0 : index
    %c0_57 = arith.constant 0 : index
    %c0_58 = arith.constant 0 : index
    %130 = vector.load %arg11[%c0_56, %c0_57, %c0_58] : memref<2x256x128xbf16, #tpu.memory_space<vmem>>, vector<1x256x128xbf16>
    %131 = vector.shape_cast %130 : vector<1x256x128xbf16> to vector<256x128xbf16>
    %cst_59 = arith.constant dense<0.000000e+00> : vector<16x128xf32>
    %132 = tpu.matmul %129, %131, %cst_59 {dimension_numbers = #tpu.dot_dimension_numbers<[1], [0], [0], [1], [0, 0, 1, 1], [], []>} : vector<16x256xbf16>, vector<256x128xbf16>, vector<16x128xf32> -> vector<16x128xf32>
    %c0_60 = arith.constant 0 : index
    %c0_61 = arith.constant 0 : index
    %c0_62 = arith.constant 0 : index
    %133 = vector.load %arg12[%c0_60, %c0_61, %c0_62] : memref<2x1x128xf32, #tpu.memory_space<vmem>>, vector<1x1x128xf32>
    %134 = vector.shape_cast %133 : vector<1x1x128xf32> to vector<1x128xf32>
    %135 = vector.broadcast %134 : vector<1x128xf32> to vector<16x128xf32>
    %136 = arith.addf %132, %135 : vector<16x128xf32>
    %137 = arith.addf %118, %136 : vector<16x128xf32>
    %c0_63 = arith.constant 0 : index
    %c0_64 = arith.constant 0 : index
    %c0_65 = arith.constant 0 : index
    %138 = vector.load %arg13[%c0_63, %c0_64, %c0_65] : memref<2x1x128xf32, #tpu.memory_space<vmem>>, vector<1x1x128xf32>
    %139 = vector.shape_cast %138 : vector<1x1x128xf32> to vector<1x128xf32>
    %c0_66 = arith.constant 0 : index
    %c0_67 = arith.constant 0 : index
    %c0_68 = arith.constant 0 : index
    %140 = vector.load %arg14[%c0_66, %c0_67, %c0_68] : memref<2x1x128xf32, #tpu.memory_space<vmem>>, vector<1x1x128xf32>
    %141 = vector.shape_cast %140 : vector<1x1x128xf32> to vector<1x128xf32>
    %cst_69 = arith.constant dense<0.000000e+00> : vector<16xf32>
    %142 = vector.multi_reduction <add>, %137, %cst_69 [1] : vector<16x128xf32> to vector<16xf32>
    %143 = vector.shape_cast %142 : vector<16xf32> to vector<16x1xf32>
    %cst_70 = arith.constant 1.280000e+02 : f32
    %144 = vector.broadcast %cst_70 : f32 to vector<16x1xf32>
    %145 = arith.divf %143, %144 : vector<16x1xf32>
    %146 = vector.broadcast %145 : vector<16x1xf32> to vector<16x128xf32>
    %147 = arith.subf %137, %146 : vector<16x128xf32>
    %148 = arith.mulf %147, %147 : vector<16x128xf32>
    %cst_71 = arith.constant dense<0.000000e+00> : vector<16xf32>
    %149 = vector.multi_reduction <add>, %148, %cst_71 [1] : vector<16x128xf32> to vector<16xf32>
    %150 = vector.shape_cast %149 : vector<16xf32> to vector<16x1xf32>
    %cst_72 = arith.constant 1.280000e+02 : f32
    %151 = vector.broadcast %cst_72 : f32 to vector<16x1xf32>
    %152 = arith.divf %150, %151 : vector<16x1xf32>
    %153 = vector.broadcast %145 : vector<16x1xf32> to vector<16x128xf32>
    %154 = arith.subf %137, %153 : vector<16x128xf32>
    %cst_73 = arith.constant 9.99999974E-6 : f32
    %155 = vector.broadcast %cst_73 : f32 to vector<16x1xf32>
    %156 = arith.addf %152, %155 : vector<16x1xf32>
    %157 = math.rsqrt %156 : vector<16x1xf32>
    %158 = vector.broadcast %157 : vector<16x1xf32> to vector<16x128xf32>
    %159 = arith.mulf %154, %158 : vector<16x128xf32>
    %160 = vector.broadcast %139 : vector<1x128xf32> to vector<16x128xf32>
    %161 = arith.mulf %159, %160 : vector<16x128xf32>
    %162 = vector.broadcast %141 : vector<1x128xf32> to vector<16x128xf32>
    %163 = arith.addf %161, %162 : vector<16x128xf32>
    %164 = arith.truncf %163 : vector<16x128xf32> to vector<16x128xbf16>
    %c1 = arith.constant 1 : index
    %c0_74 = arith.constant 0 : index
    %c0_75 = arith.constant 0 : index
    %165 = vector.load %arg3[%c1, %c0_74, %c0_75] : memref<2x128x384xbf16, #tpu.memory_space<vmem>>, vector<1x128x384xbf16>
    %166 = vector.shape_cast %165 : vector<1x128x384xbf16> to vector<128x384xbf16>
    %cst_76 = arith.constant dense<0.000000e+00> : vector<16x384xf32>
    %167 = tpu.matmul %164, %166, %cst_76 {dimension_numbers = #tpu.dot_dimension_numbers<[1], [0], [0], [1], [0, 0, 1, 1], [], []>} : vector<16x128xbf16>, vector<128x384xbf16>, vector<16x384xf32> -> vector<16x384xf32>
    %c1_77 = arith.constant 1 : index
    %c0_78 = arith.constant 0 : index
    %c0_79 = arith.constant 0 : index
    %168 = vector.load %arg4[%c1_77, %c0_78, %c0_79] : memref<2x1x384xf32, #tpu.memory_space<vmem>>, vector<1x1x384xf32>
    %169 = vector.shape_cast %168 : vector<1x1x384xf32> to vector<1x384xf32>
    %170 = vector.broadcast %169 : vector<1x384xf32> to vector<16x384xf32>
    %171 = arith.addf %167, %170 : vector<16x384xf32>
    %172 = arith.truncf %171 : vector<16x384xf32> to vector<16x384xbf16>
    %173 = vector.extract_strided_slice %172 {offsets = [0, 0], sizes = [8, 32], strides = [1, 1]} : vector<16x384xbf16> to vector<8x32xbf16>
    %174 = vector.extract_strided_slice %172 {offsets = [0, 128], sizes = [8, 32], strides = [1, 1]} : vector<16x384xbf16> to vector<8x32xbf16>
    %175 = vector.extract_strided_slice %172 {offsets = [0, 256], sizes = [8, 32], strides = [1, 1]} : vector<16x384xbf16> to vector<8x32xbf16>
    %cst_80 = arith.constant dense<0.000000e+00> : vector<8x8xf32>
    %176 = tpu.matmul %173, %174, %cst_80 {dimension_numbers = #tpu.dot_dimension_numbers<[1], [1], [0], [0], [0, 0, 1, 0], [], []>} : vector<8x32xbf16>, vector<8x32xbf16>, vector<8x8xf32> -> vector<8x8xf32>
    %177 = vector.extract_strided_slice %172 {offsets = [0, 32], sizes = [8, 32], strides = [1, 1]} : vector<16x384xbf16> to vector<8x32xbf16>
    %178 = vector.extract_strided_slice %172 {offsets = [0, 160], sizes = [8, 32], strides = [1, 1]} : vector<16x384xbf16> to vector<8x32xbf16>
    %179 = vector.extract_strided_slice %172 {offsets = [0, 288], sizes = [8, 32], strides = [1, 1]} : vector<16x384xbf16> to vector<8x32xbf16>
    %cst_81 = arith.constant dense<0.000000e+00> : vector<8x8xf32>
    %180 = tpu.matmul %177, %178, %cst_81 {dimension_numbers = #tpu.dot_dimension_numbers<[1], [1], [0], [0], [0, 0, 1, 0], [], []>} : vector<8x32xbf16>, vector<8x32xbf16>, vector<8x8xf32> -> vector<8x8xf32>
    %181 = vector.extract_strided_slice %172 {offsets = [0, 64], sizes = [8, 32], strides = [1, 1]} : vector<16x384xbf16> to vector<8x32xbf16>
    %182 = vector.extract_strided_slice %172 {offsets = [0, 192], sizes = [8, 32], strides = [1, 1]} : vector<16x384xbf16> to vector<8x32xbf16>
    %183 = vector.extract_strided_slice %172 {offsets = [0, 320], sizes = [8, 32], strides = [1, 1]} : vector<16x384xbf16> to vector<8x32xbf16>
    %cst_82 = arith.constant dense<0.000000e+00> : vector<8x8xf32>
    %184 = tpu.matmul %181, %182, %cst_82 {dimension_numbers = #tpu.dot_dimension_numbers<[1], [1], [0], [0], [0, 0, 1, 0], [], []>} : vector<8x32xbf16>, vector<8x32xbf16>, vector<8x8xf32> -> vector<8x8xf32>
    %185 = vector.extract_strided_slice %172 {offsets = [0, 96], sizes = [8, 32], strides = [1, 1]} : vector<16x384xbf16> to vector<8x32xbf16>
    %186 = vector.extract_strided_slice %172 {offsets = [0, 224], sizes = [8, 32], strides = [1, 1]} : vector<16x384xbf16> to vector<8x32xbf16>
    %187 = vector.extract_strided_slice %172 {offsets = [0, 352], sizes = [8, 32], strides = [1, 1]} : vector<16x384xbf16> to vector<8x32xbf16>
    %cst_83 = arith.constant dense<0.000000e+00> : vector<8x8xf32>
    %188 = tpu.matmul %185, %186, %cst_83 {dimension_numbers = #tpu.dot_dimension_numbers<[1], [1], [0], [0], [0, 0, 1, 0], [], []>} : vector<8x32xbf16>, vector<8x32xbf16>, vector<8x8xf32> -> vector<8x8xf32>
    %189 = vector.extract_strided_slice %172 {offsets = [8, 0], sizes = [8, 32], strides = [1, 1]} : vector<16x384xbf16> to vector<8x32xbf16>
    %190 = vector.extract_strided_slice %172 {offsets = [8, 128], sizes = [8, 32], strides = [1, 1]} : vector<16x384xbf16> to vector<8x32xbf16>
    %191 = vector.extract_strided_slice %172 {offsets = [8, 256], sizes = [8, 32], strides = [1, 1]} : vector<16x384xbf16> to vector<8x32xbf16>
    %cst_84 = arith.constant dense<0.000000e+00> : vector<8x8xf32>
    %192 = tpu.matmul %189, %190, %cst_84 {dimension_numbers = #tpu.dot_dimension_numbers<[1], [1], [0], [0], [0, 0, 1, 0], [], []>} : vector<8x32xbf16>, vector<8x32xbf16>, vector<8x8xf32> -> vector<8x8xf32>
    %193 = vector.extract_strided_slice %172 {offsets = [8, 32], sizes = [8, 32], strides = [1, 1]} : vector<16x384xbf16> to vector<8x32xbf16>
    %194 = vector.extract_strided_slice %172 {offsets = [8, 160], sizes = [8, 32], strides = [1, 1]} : vector<16x384xbf16> to vector<8x32xbf16>
    %195 = vector.extract_strided_slice %172 {offsets = [8, 288], sizes = [8, 32], strides = [1, 1]} : vector<16x384xbf16> to vector<8x32xbf16>
    %cst_85 = arith.constant dense<0.000000e+00> : vector<8x8xf32>
    %196 = tpu.matmul %193, %194, %cst_85 {dimension_numbers = #tpu.dot_dimension_numbers<[1], [1], [0], [0], [0, 0, 1, 0], [], []>} : vector<8x32xbf16>, vector<8x32xbf16>, vector<8x8xf32> -> vector<8x8xf32>
    %197 = vector.extract_strided_slice %172 {offsets = [8, 64], sizes = [8, 32], strides = [1, 1]} : vector<16x384xbf16> to vector<8x32xbf16>
    %198 = vector.extract_strided_slice %172 {offsets = [8, 192], sizes = [8, 32], strides = [1, 1]} : vector<16x384xbf16> to vector<8x32xbf16>
    %199 = vector.extract_strided_slice %172 {offsets = [8, 320], sizes = [8, 32], strides = [1, 1]} : vector<16x384xbf16> to vector<8x32xbf16>
    %cst_86 = arith.constant dense<0.000000e+00> : vector<8x8xf32>
    %200 = tpu.matmul %197, %198, %cst_86 {dimension_numbers = #tpu.dot_dimension_numbers<[1], [1], [0], [0], [0, 0, 1, 0], [], []>} : vector<8x32xbf16>, vector<8x32xbf16>, vector<8x8xf32> -> vector<8x8xf32>
    %201 = vector.extract_strided_slice %172 {offsets = [8, 96], sizes = [8, 32], strides = [1, 1]} : vector<16x384xbf16> to vector<8x32xbf16>
    %202 = vector.extract_strided_slice %172 {offsets = [8, 224], sizes = [8, 32], strides = [1, 1]} : vector<16x384xbf16> to vector<8x32xbf16>
    %203 = vector.extract_strided_slice %172 {offsets = [8, 352], sizes = [8, 32], strides = [1, 1]} : vector<16x384xbf16> to vector<8x32xbf16>
    %cst_87 = arith.constant dense<0.000000e+00> : vector<8x8xf32>
    %204 = tpu.matmul %201, %202, %cst_87 {dimension_numbers = #tpu.dot_dimension_numbers<[1], [1], [0], [0], [0, 0, 1, 0], [], []>} : vector<8x32xbf16>, vector<8x32xbf16>, vector<8x8xf32> -> vector<8x8xf32>
    %205 = tpu.concatenate %176, %180, %184, %188, %192, %196, %200, %204 in 0 : vector<8x8xf32>, vector<8x8xf32>, vector<8x8xf32>, vector<8x8xf32>, vector<8x8xf32>, vector<8x8xf32>, vector<8x8xf32>, vector<8x8xf32> -> vector<64x8xf32>
    %cst_88 = arith.constant dense<0xFF800000> : vector<64xf32>
    %206 = vector.multi_reduction <maximumf>, %205, %cst_88 [1] : vector<64x8xf32> to vector<64xf32>
    %207 = vector.shape_cast %206 : vector<64xf32> to vector<64x1xf32>
    %208 = vector.broadcast %207 : vector<64x1xf32> to vector<64x8xf32>
    %209 = arith.subf %205, %208 : vector<64x8xf32>
    %210 = math.exp %209 : vector<64x8xf32>
    %cst_89 = arith.constant dense<0.000000e+00> : vector<64xf32>
    %211 = vector.multi_reduction <add>, %210, %cst_89 [1] : vector<64x8xf32> to vector<64xf32>
    %212 = vector.shape_cast %211 : vector<64xf32> to vector<64x1xf32>
    %213 = tpu.reciprocal %212 {approx = true} : vector<64x1xf32> -> vector<64x1xf32>
    %214 = vector.broadcast %213 : vector<64x1xf32> to vector<64x8xf32>
    %215 = arith.mulf %210, %214 : vector<64x8xf32>
    %216 = arith.truncf %215 : vector<64x8xf32> to vector<64x8xbf16>
    %217 = vector.extract_strided_slice %216 {offsets = [0, 0], sizes = [8, 8], strides = [1, 1]} : vector<64x8xbf16> to vector<8x8xbf16>
    %cst_90 = arith.constant dense<0.000000e+00> : vector<8x32xf32>
    %218 = tpu.matmul %217, %175, %cst_90 {dimension_numbers = #tpu.dot_dimension_numbers<[1], [0], [0], [1], [0, 0, 1, 1], [], []>} : vector<8x8xbf16>, vector<8x32xbf16>, vector<8x32xf32> -> vector<8x32xf32>
    %219 = vector.extract_strided_slice %216 {offsets = [8, 0], sizes = [8, 8], strides = [1, 1]} : vector<64x8xbf16> to vector<8x8xbf16>
    %cst_91 = arith.constant dense<0.000000e+00> : vector<8x32xf32>
    %220 = tpu.matmul %219, %179, %cst_91 {dimension_numbers = #tpu.dot_dimension_numbers<[1], [0], [0], [1], [0, 0, 1, 1], [], []>} : vector<8x8xbf16>, vector<8x32xbf16>, vector<8x32xf32> -> vector<8x32xf32>
    %221 = vector.extract_strided_slice %216 {offsets = [16, 0], sizes = [8, 8], strides = [1, 1]} : vector<64x8xbf16> to vector<8x8xbf16>
    %cst_92 = arith.constant dense<0.000000e+00> : vector<8x32xf32>
    %222 = tpu.matmul %221, %183, %cst_92 {dimension_numbers = #tpu.dot_dimension_numbers<[1], [0], [0], [1], [0, 0, 1, 1], [], []>} : vector<8x8xbf16>, vector<8x32xbf16>, vector<8x32xf32> -> vector<8x32xf32>
    %223 = vector.extract_strided_slice %216 {offsets = [24, 0], sizes = [8, 8], strides = [1, 1]} : vector<64x8xbf16> to vector<8x8xbf16>
    %cst_93 = arith.constant dense<0.000000e+00> : vector<8x32xf32>
    %224 = tpu.matmul %223, %187, %cst_93 {dimension_numbers = #tpu.dot_dimension_numbers<[1], [0], [0], [1], [0, 0, 1, 1], [], []>} : vector<8x8xbf16>, vector<8x32xbf16>, vector<8x32xf32> -> vector<8x32xf32>
    %225 = tpu.concatenate %218, %220, %222, %224 in 1 : vector<8x32xf32>, vector<8x32xf32>, vector<8x32xf32>, vector<8x32xf32> -> vector<8x128xf32>
    %226 = vector.extract_strided_slice %216 {offsets = [32, 0], sizes = [8, 8], strides = [1, 1]} : vector<64x8xbf16> to vector<8x8xbf16>
    %cst_94 = arith.constant dense<0.000000e+00> : vector<8x32xf32>
    %227 = tpu.matmul %226, %191, %cst_94 {dimension_numbers = #tpu.dot_dimension_numbers<[1], [0], [0], [1], [0, 0, 1, 1], [], []>} : vector<8x8xbf16>, vector<8x32xbf16>, vector<8x32xf32> -> vector<8x32xf32>
    %228 = vector.extract_strided_slice %216 {offsets = [40, 0], sizes = [8, 8], strides = [1, 1]} : vector<64x8xbf16> to vector<8x8xbf16>
    %cst_95 = arith.constant dense<0.000000e+00> : vector<8x32xf32>
    %229 = tpu.matmul %228, %195, %cst_95 {dimension_numbers = #tpu.dot_dimension_numbers<[1], [0], [0], [1], [0, 0, 1, 1], [], []>} : vector<8x8xbf16>, vector<8x32xbf16>, vector<8x32xf32> -> vector<8x32xf32>
    %230 = vector.extract_strided_slice %216 {offsets = [48, 0], sizes = [8, 8], strides = [1, 1]} : vector<64x8xbf16> to vector<8x8xbf16>
    %cst_96 = arith.constant dense<0.000000e+00> : vector<8x32xf32>
    %231 = tpu.matmul %230, %199, %cst_96 {dimension_numbers = #tpu.dot_dimension_numbers<[1], [0], [0], [1], [0, 0, 1, 1], [], []>} : vector<8x8xbf16>, vector<8x32xbf16>, vector<8x32xf32> -> vector<8x32xf32>
    %232 = vector.extract_strided_slice %216 {offsets = [56, 0], sizes = [8, 8], strides = [1, 1]} : vector<64x8xbf16> to vector<8x8xbf16>
    %cst_97 = arith.constant dense<0.000000e+00> : vector<8x32xf32>
    %233 = tpu.matmul %232, %203, %cst_97 {dimension_numbers = #tpu.dot_dimension_numbers<[1], [0], [0], [1], [0, 0, 1, 1], [], []>} : vector<8x8xbf16>, vector<8x32xbf16>, vector<8x32xf32> -> vector<8x32xf32>
    %234 = tpu.concatenate %227, %229, %231, %233 in 1 : vector<8x32xf32>, vector<8x32xf32>, vector<8x32xf32>, vector<8x32xf32> -> vector<8x128xf32>
    %235 = tpu.concatenate %225, %234 in 0 : vector<8x128xf32>, vector<8x128xf32> -> vector<16x128xf32>
    %236 = arith.truncf %235 : vector<16x128xf32> to vector<16x128xbf16>
    %c1_98 = arith.constant 1 : index
    %c0_99 = arith.constant 0 : index
    %c0_100 = arith.constant 0 : index
    %237 = vector.load %arg5[%c1_98, %c0_99, %c0_100] : memref<2x128x128xbf16, #tpu.memory_space<vmem>>, vector<1x128x128xbf16>
    %238 = vector.shape_cast %237 : vector<1x128x128xbf16> to vector<128x128xbf16>
    %cst_101 = arith.constant dense<0.000000e+00> : vector<16x128xf32>
    %239 = tpu.matmul %236, %238, %cst_101 {dimension_numbers = #tpu.dot_dimension_numbers<[1], [0], [0], [1], [0, 0, 1, 1], [], []>} : vector<16x128xbf16>, vector<128x128xbf16>, vector<16x128xf32> -> vector<16x128xf32>
    %c1_102 = arith.constant 1 : index
    %c0_103 = arith.constant 0 : index
    %c0_104 = arith.constant 0 : index
    %240 = vector.load %arg6[%c1_102, %c0_103, %c0_104] : memref<2x1x128xf32, #tpu.memory_space<vmem>>, vector<1x1x128xf32>
    %241 = vector.shape_cast %240 : vector<1x1x128xf32> to vector<1x128xf32>
    %242 = vector.broadcast %241 : vector<1x128xf32> to vector<16x128xf32>
    %243 = arith.addf %239, %242 : vector<16x128xf32>
    %244 = arith.addf %163, %243 : vector<16x128xf32>
    %c1_105 = arith.constant 1 : index
    %c0_106 = arith.constant 0 : index
    %c0_107 = arith.constant 0 : index
    %245 = vector.load %arg7[%c1_105, %c0_106, %c0_107] : memref<2x1x128xf32, #tpu.memory_space<vmem>>, vector<1x1x128xf32>
    %246 = vector.shape_cast %245 : vector<1x1x128xf32> to vector<1x128xf32>
    %c1_108 = arith.constant 1 : index
    %c0_109 = arith.constant 0 : index
    %c0_110 = arith.constant 0 : index
    %247 = vector.load %arg8[%c1_108, %c0_109, %c0_110] : memref<2x1x128xf32, #tpu.memory_space<vmem>>, vector<1x1x128xf32>
    %248 = vector.shape_cast %247 : vector<1x1x128xf32> to vector<1x128xf32>
    %cst_111 = arith.constant dense<0.000000e+00> : vector<16xf32>
    %249 = vector.multi_reduction <add>, %244, %cst_111 [1] : vector<16x128xf32> to vector<16xf32>
    %250 = vector.shape_cast %249 : vector<16xf32> to vector<16x1xf32>
    %cst_112 = arith.constant 1.280000e+02 : f32
    %251 = vector.broadcast %cst_112 : f32 to vector<16x1xf32>
    %252 = arith.divf %250, %251 : vector<16x1xf32>
    %253 = vector.broadcast %252 : vector<16x1xf32> to vector<16x128xf32>
    %254 = arith.subf %244, %253 : vector<16x128xf32>
    %255 = arith.mulf %254, %254 : vector<16x128xf32>
    %cst_113 = arith.constant dense<0.000000e+00> : vector<16xf32>
    %256 = vector.multi_reduction <add>, %255, %cst_113 [1] : vector<16x128xf32> to vector<16xf32>
    %257 = vector.shape_cast %256 : vector<16xf32> to vector<16x1xf32>
    %cst_114 = arith.constant 1.280000e+02 : f32
    %258 = vector.broadcast %cst_114 : f32 to vector<16x1xf32>
    %259 = arith.divf %257, %258 : vector<16x1xf32>
    %260 = vector.broadcast %252 : vector<16x1xf32> to vector<16x128xf32>
    %261 = arith.subf %244, %260 : vector<16x128xf32>
    %cst_115 = arith.constant 9.99999974E-6 : f32
    %262 = vector.broadcast %cst_115 : f32 to vector<16x1xf32>
    %263 = arith.addf %259, %262 : vector<16x1xf32>
    %264 = math.rsqrt %263 : vector<16x1xf32>
    %265 = vector.broadcast %264 : vector<16x1xf32> to vector<16x128xf32>
    %266 = arith.mulf %261, %265 : vector<16x128xf32>
    %267 = vector.broadcast %246 : vector<1x128xf32> to vector<16x128xf32>
    %268 = arith.mulf %266, %267 : vector<16x128xf32>
    %269 = vector.broadcast %248 : vector<1x128xf32> to vector<16x128xf32>
    %270 = arith.addf %268, %269 : vector<16x128xf32>
    %271 = arith.truncf %270 : vector<16x128xf32> to vector<16x128xbf16>
    %c1_116 = arith.constant 1 : index
    %c0_117 = arith.constant 0 : index
    %c0_118 = arith.constant 0 : index
    %272 = vector.load %arg9[%c1_116, %c0_117, %c0_118] : memref<2x128x256xbf16, #tpu.memory_space<vmem>>, vector<1x128x256xbf16>
    %273 = vector.shape_cast %272 : vector<1x128x256xbf16> to vector<128x256xbf16>
    %cst_119 = arith.constant dense<0.000000e+00> : vector<16x256xf32>
    %274 = tpu.matmul %271, %273, %cst_119 {dimension_numbers = #tpu.dot_dimension_numbers<[1], [0], [0], [1], [0, 0, 1, 1], [], []>} : vector<16x128xbf16>, vector<128x256xbf16>, vector<16x256xf32> -> vector<16x256xf32>
    %c1_120 = arith.constant 1 : index
    %c0_121 = arith.constant 0 : index
    %c0_122 = arith.constant 0 : index
    %275 = vector.load %arg10[%c1_120, %c0_121, %c0_122] : memref<2x1x256xf32, #tpu.memory_space<vmem>>, vector<1x1x256xf32>
    %276 = vector.shape_cast %275 : vector<1x1x256xf32> to vector<1x256xf32>
    %277 = vector.broadcast %276 : vector<1x256xf32> to vector<16x256xf32>
    %278 = arith.addf %274, %277 : vector<16x256xf32>
    %cst_123 = arith.constant 0.000000e+00 : f32
    %279 = vector.broadcast %cst_123 : f32 to vector<16x256xf32>
    %280 = arith.maximumf %278, %279 : vector<16x256xf32>
    %281 = arith.truncf %280 : vector<16x256xf32> to vector<16x256xbf16>
    %c1_124 = arith.constant 1 : index
    %c0_125 = arith.constant 0 : index
    %c0_126 = arith.constant 0 : index
    %282 = vector.load %arg11[%c1_124, %c0_125, %c0_126] : memref<2x256x128xbf16, #tpu.memory_space<vmem>>, vector<1x256x128xbf16>
    %283 = vector.shape_cast %282 : vector<1x256x128xbf16> to vector<256x128xbf16>
    %cst_127 = arith.constant dense<0.000000e+00> : vector<16x128xf32>
    %284 = tpu.matmul %281, %283, %cst_127 {dimension_numbers = #tpu.dot_dimension_numbers<[1], [0], [0], [1], [0, 0, 1, 1], [], []>} : vector<16x256xbf16>, vector<256x128xbf16>, vector<16x128xf32> -> vector<16x128xf32>
    %c1_128 = arith.constant 1 : index
    %c0_129 = arith.constant 0 : index
    %c0_130 = arith.constant 0 : index
    %285 = vector.load %arg12[%c1_128, %c0_129, %c0_130] : memref<2x1x128xf32, #tpu.memory_space<vmem>>, vector<1x1x128xf32>
    %286 = vector.shape_cast %285 : vector<1x1x128xf32> to vector<1x128xf32>
    %287 = vector.broadcast %286 : vector<1x128xf32> to vector<16x128xf32>
    %288 = arith.addf %284, %287 : vector<16x128xf32>
    %289 = arith.addf %270, %288 : vector<16x128xf32>
    %c1_131 = arith.constant 1 : index
    %c0_132 = arith.constant 0 : index
    %c0_133 = arith.constant 0 : index
    %290 = vector.load %arg13[%c1_131, %c0_132, %c0_133] : memref<2x1x128xf32, #tpu.memory_space<vmem>>, vector<1x1x128xf32>
    %291 = vector.shape_cast %290 : vector<1x1x128xf32> to vector<1x128xf32>
    %c1_134 = arith.constant 1 : index
    %c0_135 = arith.constant 0 : index
    %c0_136 = arith.constant 0 : index
    %292 = vector.load %arg14[%c1_134, %c0_135, %c0_136] : memref<2x1x128xf32, #tpu.memory_space<vmem>>, vector<1x1x128xf32>
    %293 = vector.shape_cast %292 : vector<1x1x128xf32> to vector<1x128xf32>
    %cst_137 = arith.constant dense<0.000000e+00> : vector<16xf32>
    %294 = vector.multi_reduction <add>, %289, %cst_137 [1] : vector<16x128xf32> to vector<16xf32>
    %295 = vector.shape_cast %294 : vector<16xf32> to vector<16x1xf32>
    %cst_138 = arith.constant 1.280000e+02 : f32
    %296 = vector.broadcast %cst_138 : f32 to vector<16x1xf32>
    %297 = arith.divf %295, %296 : vector<16x1xf32>
    %298 = vector.broadcast %297 : vector<16x1xf32> to vector<16x128xf32>
    %299 = arith.subf %289, %298 : vector<16x128xf32>
    %300 = arith.mulf %299, %299 : vector<16x128xf32>
    %cst_139 = arith.constant dense<0.000000e+00> : vector<16xf32>
    %301 = vector.multi_reduction <add>, %300, %cst_139 [1] : vector<16x128xf32> to vector<16xf32>
    %302 = vector.shape_cast %301 : vector<16xf32> to vector<16x1xf32>
    %cst_140 = arith.constant 1.280000e+02 : f32
    %303 = vector.broadcast %cst_140 : f32 to vector<16x1xf32>
    %304 = arith.divf %302, %303 : vector<16x1xf32>
    %305 = vector.broadcast %297 : vector<16x1xf32> to vector<16x128xf32>
    %306 = arith.subf %289, %305 : vector<16x128xf32>
    %cst_141 = arith.constant 9.99999974E-6 : f32
    %307 = vector.broadcast %cst_141 : f32 to vector<16x1xf32>
    %308 = arith.addf %304, %307 : vector<16x1xf32>
    %309 = math.rsqrt %308 : vector<16x1xf32>
    %310 = vector.broadcast %309 : vector<16x1xf32> to vector<16x128xf32>
    %311 = arith.mulf %306, %310 : vector<16x128xf32>
    %312 = vector.broadcast %291 : vector<1x128xf32> to vector<16x128xf32>
    %313 = arith.mulf %311, %312 : vector<16x128xf32>
    %314 = vector.broadcast %293 : vector<1x128xf32> to vector<16x128xf32>
    %315 = arith.addf %313, %314 : vector<16x128xf32>
    %316 = vector.extract_strided_slice %315 {offsets = [0, 0], sizes = [1, 128], strides = [1, 1]} : vector<16x128xf32> to vector<1x128xf32>
    %317 = vector.extract_strided_slice %315 {offsets = [8, 0], sizes = [1, 128], strides = [1, 1]} : vector<16x128xf32> to vector<1x128xf32>
    %318 = tpu.concatenate %316, %317 in 0 : vector<1x128xf32>, vector<1x128xf32> -> vector<2x128xf32>
    %c0_142 = arith.constant 0 : index
    %c0_143 = arith.constant 0 : index
    %319 = vector.load %arg15[%c0_142, %c0_143] : memref<1x128xf32, #tpu.memory_space<vmem>>, vector<1x128xf32>
    %c0_144 = arith.constant 0 : index
    %c0_145 = arith.constant 0 : index
    %320 = vector.load %arg16[%c0_144, %c0_145] : memref<1x128xf32, #tpu.memory_space<vmem>>, vector<1x128xf32>
    %cst_146 = arith.constant dense<0.000000e+00> : vector<2xf32>
    %321 = vector.multi_reduction <add>, %318, %cst_146 [1] : vector<2x128xf32> to vector<2xf32>
    %322 = vector.shape_cast %321 : vector<2xf32> to vector<2x1xf32>
    %cst_147 = arith.constant 1.280000e+02 : f32
    %323 = vector.broadcast %cst_147 : f32 to vector<2x1xf32>
    %324 = arith.divf %322, %323 : vector<2x1xf32>
    %325 = vector.broadcast %324 : vector<2x1xf32> to vector<2x128xf32>
    %326 = arith.subf %318, %325 : vector<2x128xf32>
    %327 = arith.mulf %326, %326 : vector<2x128xf32>
    %cst_148 = arith.constant dense<0.000000e+00> : vector<2xf32>
    %328 = vector.multi_reduction <add>, %327, %cst_148 [1] : vector<2x128xf32> to vector<2xf32>
    %329 = vector.shape_cast %328 : vector<2xf32> to vector<2x1xf32>
    %cst_149 = arith.constant 1.280000e+02 : f32
    %330 = vector.broadcast %cst_149 : f32 to vector<2x1xf32>
    %331 = arith.divf %329, %330 : vector<2x1xf32>
    %332 = vector.broadcast %324 : vector<2x1xf32> to vector<2x128xf32>
    %333 = arith.subf %318, %332 : vector<2x128xf32>
    %cst_150 = arith.constant 9.99999974E-6 : f32
    %334 = vector.broadcast %cst_150 : f32 to vector<2x1xf32>
    %335 = arith.addf %331, %334 : vector<2x1xf32>
    %336 = math.rsqrt %335 : vector<2x1xf32>
    %337 = vector.broadcast %336 : vector<2x1xf32> to vector<2x128xf32>
    %338 = arith.mulf %333, %337 : vector<2x128xf32>
    %339 = vector.broadcast %319 : vector<1x128xf32> to vector<2x128xf32>
    %340 = arith.mulf %338, %339 : vector<2x128xf32>
    %341 = vector.broadcast %320 : vector<1x128xf32> to vector<2x128xf32>
    %342 = arith.addf %340, %341 : vector<2x128xf32>
    %343 = arith.truncf %342 : vector<2x128xf32> to vector<2x128xbf16>
    %c0_151 = arith.constant 0 : index
    %c0_152 = arith.constant 0 : index
    %344 = vector.load %arg17[%c0_151, %c0_152] : memref<128x512xbf16, #tpu.memory_space<vmem>>, vector<128x512xbf16>
    %cst_153 = arith.constant dense<0.000000e+00> : vector<2x512xf32>
    %345 = tpu.matmul %343, %344, %cst_153 {dimension_numbers = #tpu.dot_dimension_numbers<[1], [0], [0], [1], [0, 0, 1, 1], [], []>} : vector<2x128xbf16>, vector<128x512xbf16>, vector<2x512xf32> -> vector<2x512xf32>
    %c0_154 = arith.constant 0 : index
    %c0_155 = arith.constant 0 : index
    %346 = vector.load %arg18[%c0_154, %c0_155] : memref<1x512xf32, #tpu.memory_space<vmem>>, vector<1x512xf32>
    %347 = vector.broadcast %346 : vector<1x512xf32> to vector<2x512xf32>
    %348 = arith.addf %345, %347 : vector<2x512xf32>
    %cst_156 = arith.constant 0.000000e+00 : f32
    %349 = vector.broadcast %cst_156 : f32 to vector<2x512xf32>
    %350 = arith.maximumf %348, %349 : vector<2x512xf32>
    %351 = arith.truncf %350 : vector<2x512xf32> to vector<2x512xbf16>
    %c0_157 = arith.constant 0 : index
    %c0_158 = arith.constant 0 : index
    %352 = vector.load %arg19[%c0_157, %c0_158] : memref<512x128xbf16, #tpu.memory_space<vmem>>, vector<512x128xbf16>
    %cst_159 = arith.constant dense<0.000000e+00> : vector<2x128xf32>
    %353 = tpu.matmul %351, %352, %cst_159 {dimension_numbers = #tpu.dot_dimension_numbers<[1], [0], [0], [1], [0, 0, 1, 1], [], []>} : vector<2x512xbf16>, vector<512x128xbf16>, vector<2x128xf32> -> vector<2x128xf32>
    %c0_160 = arith.constant 0 : index
    %c0_161 = arith.constant 0 : index
    %354 = vector.load %arg20[%c0_160, %c0_161] : memref<1x128xf32, #tpu.memory_space<vmem>>, vector<1x128xf32>
    %355 = vector.broadcast %354 : vector<1x128xf32> to vector<2x128xf32>
    %356 = arith.addf %353, %355 : vector<2x128xf32>
    %cst_162 = arith.constant 0.000000e+00 : f32
    %357 = vector.broadcast %cst_162 : f32 to vector<2x128xf32>
    %358 = arith.maximumf %356, %357 : vector<2x128xf32>
    %359 = arith.truncf %358 : vector<2x128xf32> to vector<2x128xbf16>
    %c0_163 = arith.constant 0 : index
    %c0_164 = arith.constant 0 : index
    %360 = vector.load %arg21[%c0_163, %c0_164] : memref<128x128xbf16, #tpu.memory_space<vmem>>, vector<128x128xbf16>
    %cst_165 = arith.constant dense<0.000000e+00> : vector<2x128xf32>
    %361 = tpu.matmul %359, %360, %cst_165 {dimension_numbers = #tpu.dot_dimension_numbers<[1], [0], [0], [1], [0, 0, 1, 1], [], []>} : vector<2x128xbf16>, vector<128x128xbf16>, vector<2x128xf32> -> vector<2x128xf32>
    %c0_166 = arith.constant 0 : index
    %c0_167 = arith.constant 0 : index
    %362 = vector.load %arg22[%c0_166, %c0_167] : memref<1x128xf32, #tpu.memory_space<vmem>>, vector<1x128xf32>
    %363 = vector.broadcast %362 : vector<1x128xf32> to vector<2x128xf32>
    %364 = arith.addf %361, %363 : vector<2x128xf32>
    %cst_168 = arith.constant 0.000000e+00 : f32
    %365 = vector.broadcast %cst_168 : f32 to vector<2x128xf32>
    %366 = arith.maximumf %364, %365 : vector<2x128xf32>
    %367 = arith.truncf %366 : vector<2x128xf32> to vector<2x128xbf16>
    %c0_169 = arith.constant 0 : index
    %c0_170 = arith.constant 0 : index
    %368 = vector.load %arg23[%c0_169, %c0_170] : memref<128x128xbf16, #tpu.memory_space<vmem>>, vector<128x128xbf16>
    %cst_171 = arith.constant dense<0.000000e+00> : vector<2x128xf32>
    %369 = tpu.matmul %367, %368, %cst_171 {dimension_numbers = #tpu.dot_dimension_numbers<[1], [0], [0], [1], [0, 0, 1, 1], [], []>} : vector<2x128xbf16>, vector<128x128xbf16>, vector<2x128xf32> -> vector<2x128xf32>
    %c0_172 = arith.constant 0 : index
    %c0_173 = arith.constant 0 : index
    %370 = vector.load %arg24[%c0_172, %c0_173] : memref<1x128xf32, #tpu.memory_space<vmem>>, vector<1x128xf32>
    %371 = vector.broadcast %370 : vector<1x128xf32> to vector<2x128xf32>
    %372 = arith.addf %369, %371 : vector<2x128xf32>
    %c0_174 = arith.constant 0 : index
    %c0_175 = arith.constant 0 : index
    %373 = vector.load %arg25[%c0_174, %c0_175] : memref<2x128xf32, #tpu.memory_space<vmem>>, vector<2x128xf32>
    tpu.vector_store %arg25[%c0_174, %c0_175], %372 {strides = array<i32>} : memref<2x128xf32, #tpu.memory_space<vmem>>, vector<2x128xf32>,
    return
  }
}

</mosaic_0001>

<llo_original>
// kernel: _forward.1
$region0: #{_forward.1}
  #allocation0 [shape = 'u32[]', space=smem, size = 0x4, offset = 0x4, fixed_abs, tag = 'smem constant byte address 0x4 - core index']
  #allocation1 [shape = 'u32[144,128]{1,0:T(1,128)}', space=vmem, size = 0x12000, scoped, tag = 'internal scratch']
  %s0 = inlined_call_operand.vmem [shape: s32[16,1], index: 0, kind: input, shape index: {}]
  %s1 = inlined_call_operand.hbm [shape: bf16[384,128], index: 1, kind: input, shape index: {}]
  %s2 = inlined_call_operand.vmem [shape: f32[8,128], index: 2, kind: input, shape index: {}]
  %s3 = inlined_call_operand.hbm [shape: bf16[2,128,384], index: 3, kind: input, shape index: {}]
  %s4 = inlined_call_operand.vmem [shape: f32[2,1,384], index: 4, kind: input, shape index: {}]
  %s5 = inlined_call_operand.hbm [shape: bf16[2,128,128], index: 5, kind: input, shape index: {}]
  %s6 = inlined_call_operand.vmem [shape: f32[2,1,128], index: 6, kind: input, shape index: {}]
  %s7 = inlined_call_operand.vmem [shape: f32[2,1,128], index: 7, kind: input, shape index: {}]
  %s8 = inlined_call_operand.hbm [shape: f32[2,1,128], index: 8, kind: input, shape index: {}]
  %s9 = inlined_call_operand.hbm [shape: bf16[2,128,256], index: 9, kind: input, shape index: {}]
  %s10 = inlined_call_operand.vmem [shape: f32[2,1,256], index: 10, kind: input, shape index: {}]
  %s11 = inlined_call_operand.hbm [shape: bf16[2,256,128], index: 11, kind: input, shape index: {}]
  %s12 = inlined_call_operand.hbm [shape: f32[2,1,128], index: 12, kind: input, shape index: {}]
  %s13 = inlined_call_operand.vmem [shape: f32[2,1,128], index: 13, kind: input, shape index: {}]
  %s14 = inlined_call_operand.hbm [shape: f32[2,1,128], index: 14, kind: input, shape index: {}]
  %s15 = inlined_call_operand.vmem [shape: f32[1,128], index: 15, kind: input, shape index: {}]
  %s16 = inlined_call_operand.vmem [shape: f32[1,128], index: 16, kind: input, shape index: {}]
  %s17 = inlined_call_operand.hbm [shape: bf16[128,512], index: 17, kind: input, shape index: {}]
  %s18 = inlined_call_operand.vmem [shape: f32[1,512], index: 18, kind: input, shape index: {}]
  %s19 = inlined_call_operand.hbm [shape: bf16[512,128], index: 19, kind: input, shape index: {}]
  %s20 = inlined_call_operand.vmem [shape: f32[1,128], index: 20, kind: input, shape index: {}]
  %s21 = inlined_call_operand.hbm [shape: bf16[128,128], index: 21, kind: input, shape index: {}]
  %s22 = inlined_call_operand.vmem [shape: f32[1,128], index: 22, kind: input, shape index: {}]
  %s23 = inlined_call_operand.hbm [shape: bf16[128,128], index: 23, kind: input, shape index: {}]
  %s24 = inlined_call_operand.vmem [shape: f32[1,128], index: 24, kind: input, shape index: {}]
  %s25 = inlined_call_operand.hbm [shape: f32[2,128], index: 25, kind: output, shape index: {}]
  %s26 = sld [smem:[#allocation0]]
  $region158: #{_forward.1} parent=0
    _
  %s28 = ssub.s32 1, %s26
  %s29 = scalar_select 0, %s28, %s26
  $region1: #{_forward.1} parent=0
    #allocation2 [shape = 'u8[98304]{0}', space=vmem, size = 0x18000, scoped, tag = 'input window, operand 1, single buffered']
    #allocation3 [shape = 's32[1]{0}', space=sflag, size = 0x4, scoped, tag = 'scoped memory for _forward.1']
    #allocation4 [shape = 's32[1]{0}', space=sflag, size = 0x4, scoped, tag = 'scoped memory for _forward.1']
    #allocation5 [shape = 'u8[196608]{0}', space=vmem, size = 0x30000, scoped, tag = 'input window, operand 3, single buffered']
    #allocation6 [shape = 's32[1]{0}', space=sflag, size = 0x4, scoped, tag = 'scoped memory for _forward.1']
    #allocation7 [shape = 'u8[65536]{0}', space=vmem, size = 0x10000, scoped, tag = 'input window, operand 5, single buffered']
    #allocation8 [shape = 'u8[1024]{0}', space=vmem, size = 0x400, scoped, tag = 'input window, operand 8, single buffered']
    #allocation9 [shape = 's32[1]{0}', space=sflag, size = 0x4, scoped, tag = 'scoped memory for _forward.1']
    #allocation10 [shape = 'u8[131072]{0}', space=vmem, size = 0x20000, scoped, tag = 'input window, operand 9, single buffered']
    #allocation11 [shape = 'u8[131072]{0}', space=vmem, size = 0x20000, scoped, tag = 'input window, operand 11, single buffered']
    #allocation12 [shape = 's32[1]{0}', space=sflag, size = 0x4, scoped, tag = 'scoped memory for _forward.1']
    #allocation13 [shape = 'u8[1024]{0}', space=vmem, size = 0x400, scoped, tag = 'input window, operand 12, single buffered']
    #allocation14 [shape = 'u8[1024]{0}', space=vmem, size = 0x400, scoped, tag = 'input window, operand 14, single buffered']
    #allocation15 [shape = 's32[1]{0}', space=sflag, size = 0x4, scoped, tag = 'scoped memory for _forward.1']
    #allocation16 [shape = 'u8[131072]{0}', space=vmem, size = 0x20000, scoped, tag = 'input window, operand 17, single buffered']
    #allocation17 [shape = 'u8[131072]{0}', space=vmem, size = 0x20000, scoped, tag = 'input window, operand 19, single buffered']
    #allocation18 [shape = 's32[1]{0}', space=sflag, size = 0x4, scoped, tag = 'scoped memory for _forward.1']
    #allocation19 [shape = 'u8[32768]{0}', space=vmem, size = 0x8000, scoped, tag = 'input window, operand 21, single buffered']
    #allocation20 [shape = 'u8[32768]{0}', space=vmem, size = 0x8000, scoped, tag = 'input window, operand 23, single buffered']
    #allocation21 [shape = 's32[1]{0}', space=sflag, size = 0x4, scoped, tag = 'scoped memory for _forward.1']
    #allocation22 [shape = 'u8[1024]{0}', space=vmem, size = 0x400, scoped, tag = 'output window, operand 0, single buffered']
    %30 = vsyncpa [#allocation3], 0
    %31 = vsyncpa [#allocation6], 0
    %32 = vsyncpa [#allocation9], 0
    %33 = vsyncpa [#allocation12], 0
    %34 = vsyncpa [#allocation15], 0
    %35 = vsyncpa [#allocation18], 0
    %36 = vsyncpa [#allocation21], 0
    %37 = vsyncpa [#allocation4], 0
    // Predicated region
    $region2: #{_forward.1} parent=1 // pred_check
      _
    $region3: #{_forward.1} parent=1 // pred_check_branch
      %39 = sbr.rel (0) target = $region5
    $region4: #{_forward.1} parent=1 // pred_region
      _
    $region5: #{_forward.1} parent=1 // pred_fallthru
      _
    // Predicated region
    $region6: #{_forward.1} parent=1 // pred_check
      _
    $region7: #{_forward.1} parent=1 // pred_check_branch
      %41 = sbr.rel (0) target = $region9
    $region8: #{_forward.1} parent=1 // pred_region
      %s43 = ssub.s32 3072, 3072
      %44 = vsyncadd [#allocation3], %s43
      %s45 = sshll.u32 [#allocation2], 4
      %s46 = int_to_ptr.vmem [resolvable:$true] %s45
      %51 = dma.hbm_to_vmem [thread:$0]  %s1, 3072, %s46, [#allocation3], 64, 64, 4
    $region9: #{_forward.1} parent=1 // pred_fallthru
      _
    // Predicated region
    $region10: #{_forward.1} parent=1 // pred_check
      _
    $region11: #{_forward.1} parent=1 // pred_check_branch
      %53 = sbr.rel (0) target = $region13
    $region12: #{_forward.1} parent=1 // pred_region
      _
    $region13: #{_forward.1} parent=1 // pred_fallthru
      _
    // Predicated region
    $region14: #{_forward.1} parent=1 // pred_check
      _
    $region15: #{_forward.1} parent=1 // pred_check_branch
      %55 = sbr.rel (0) target = $region17
    $region16: #{_forward.1} parent=1 // pred_region
      %s57 = ssub.s32 6144, 6144
      %58 = vsyncadd [#allocation6], %s57
      %s59 = sshll.u32 [#allocation5], 4
      %s60 = int_to_ptr.vmem [resolvable:$true] %s59
      %65 = dma.hbm_to_vmem [thread:$0]  %s3, 6144, %s60, [#allocation6], 192, 192, 12
    $region17: #{_forward.1} parent=1 // pred_fallthru
      _
    // Predicated region
    $region18: #{_forward.1} parent=1 // pred_check
      _
    $region19: #{_forward.1} parent=1 // pred_check_branch
      %67 = sbr.rel (0) target = $region21
    $region20: #{_forward.1} parent=1 // pred_region
      _
    $region21: #{_forward.1} parent=1 // pred_fallthru
      _
    // Predicated region
    $region22: #{_forward.1} parent=1 // pred_check
      _
    $region23: #{_forward.1} parent=1 // pred_check_branch
      %69 = sbr.rel (0) target = $region25
    $region24: #{_forward.1} parent=1 // pred_region
      %s71 = ssub.s32 2048, 2048
      %72 = vsyncadd [#allocation6], %s71
      %s73 = sshll.u32 [#allocation7], 4
      %s74 = int_to_ptr.vmem [resolvable:$true] %s73
      %79 = dma.hbm_to_vmem [thread:$0]  %s5, 2048, %s74, [#allocation6], 64, 64, 4
    $region25: #{_forward.1} parent=1 // pred_fallthru
      _
    // Predicated region
    $region26: #{_forward.1} parent=1 // pred_check
      _
    $region27: #{_forward.1} parent=1 // pred_check_branch
      %81 = sbr.rel (0) target = $region29
    $region28: #{_forward.1} parent=1 // pred_region
      _
    $region29: #{_forward.1} parent=1 // pred_fallthru
      _
    // Predicated region
    $region30: #{_forward.1} parent=1 // pred_check
      _
    $region31: #{_forward.1} parent=1 // pred_check_branch
      %83 = sbr.rel (0) target = $region33
    $region32: #{_forward.1} parent=1 // pred_region
      _
    $region33: #{_forward.1} parent=1 // pred_fallthru
      _
    // Predicated region
    $region34: #{_forward.1} parent=1 // pred_check
      _
    $region35: #{_forward.1} parent=1 // pred_check_branch
      %85 = sbr.rel (0) target = $region37
    $region36: #{_forward.1} parent=1 // pred_region
      %s87 = ssub.s32 32, 32
      %88 = vsyncadd [#allocation9], %s87
      %s89 = sshll.u32 [#allocation8], 4
      %s90 = int_to_ptr.vmem [resolvable:$true] %s89
      %95 = dma.hbm_to_vmem [thread:$0]  %s8, 32, %s90, [#allocation9], 16, 16, 1
    $region37: #{_forward.1} parent=1 // pred_fallthru
      _
    // Predicated region
    $region38: #{_forward.1} parent=1 // pred_check
      _
    $region39: #{_forward.1} parent=1 // pred_check_branch
      %97 = sbr.rel (0) target = $region41
    $region40: #{_forward.1} parent=1 // pred_region
      %s99 = ssub.s32 4096, 4096
      %100 = vsyncadd [#allocation9], %s99
      %s101 = sshll.u32 [#allocation10], 4
      %s102 = int_to_ptr.vmem [resolvable:$true] %s101
      %107 = dma.hbm_to_vmem [thread:$0]  %s9, 4096, %s102, [#allocation9], 128, 128, 8
    $region41: #{_forward.1} parent=1 // pred_fallthru
      _
    // Predicated region
    $region42: #{_forward.1} parent=1 // pred_check
      _
    $region43: #{_forward.1} parent=1 // pred_check_branch
      %109 = sbr.rel (0) target = $region45
    $region44: #{_forward.1} parent=1 // pred_region
      _
    $region45: #{_forward.1} parent=1 // pred_fallthru
      _
    // Predicated region
    $region46: #{_forward.1} parent=1 // pred_check
      _
    $region47: #{_forward.1} parent=1 // pred_check_branch
      %111 = sbr.rel (0) target = $region49
    $region48: #{_forward.1} parent=1 // pred_region
      %s113 = ssub.s32 4096, 4096
      %114 = vsyncadd [#allocation12], %s113
      %s115 = sshll.u32 [#allocation11], 4
      %s116 = int_to_ptr.vmem [resolvable:$true] %s115
      %121 = dma.hbm_to_vmem [thread:$0]  %s11, 4096, %s116, [#allocation12], 64, 64, 4
    $region49: #{_forward.1} parent=1 // pred_fallthru
      _
    // Predicated region
    $region50: #{_forward.1} parent=1 // pred_check
      _
    $region51: #{_forward.1} parent=1 // pred_check_branch
      %123 = sbr.rel (0) target = $region53
    $region52: #{_forward.1} parent=1 // pred_region
      %s125 = ssub.s32 32, 32
      %126 = vsyncadd [#allocation12], %s125
      %s127 = sshll.u32 [#allocation13], 4
      %s128 = int_to_ptr.vmem [resolvable:$true] %s127
      %133 = dma.hbm_to_vmem [thread:$0]  %s12, 32, %s128, [#allocation12], 16, 16, 1
    $region53: #{_forward.1} parent=1 // pred_fallthru
      _
    // Predicated region
    $region54: #{_forward.1} parent=1 // pred_check
      _
    $region55: #{_forward.1} parent=1 // pred_check_branch
      %135 = sbr.rel (0) target = $region57
    $region56: #{_forward.1} parent=1 // pred_region
      _
    $region57: #{_forward.1} parent=1 // pred_fallthru
      _
    // Predicated region
    $region58: #{_forward.1} parent=1 // pred_check
      _
    $region59: #{_forward.1} parent=1 // pred_check_branch
      %137 = sbr.rel (0) target = $region61
    $region60: #{_forward.1} parent=1 // pred_region
      %s139 = ssub.s32 32, 32
      %140 = vsyncadd [#allocation15], %s139
      %s141 = sshll.u32 [#allocation14], 4
      %s142 = int_to_ptr.vmem [resolvable:$true] %s141
      %147 = dma.hbm_to_vmem [thread:$0]  %s14, 32, %s142, [#allocation15], 16, 16, 1
    $region61: #{_forward.1} parent=1 // pred_fallthru
      _
    // Predicated region
    $region62: #{_forward.1} parent=1 // pred_check
      _
    $region63: #{_forward.1} parent=1 // pred_check_branch
      %149 = sbr.rel (0) target = $region65
    $region64: #{_forward.1} parent=1 // pred_region
      _
    $region65: #{_forward.1} parent=1 // pred_fallthru
      _
    // Predicated region
    $region66: #{_forward.1} parent=1 // pred_check
      _
    $region67: #{_forward.1} parent=1 // pred_check_branch
      %151 = sbr.rel (0) target = $region69
    $region68: #{_forward.1} parent=1 // pred_region
      _
    $region69: #{_forward.1} parent=1 // pred_fallthru
      _
    // Predicated region
    $region70: #{_forward.1} parent=1 // pred_check
      _
    $region71: #{_forward.1} parent=1 // pred_check_branch
      %153 = sbr.rel (0) target = $region73
    $region72: #{_forward.1} parent=1 // pred_region
      %s155 = ssub.s32 4096, 4096
      %156 = vsyncadd [#allocation15], %s155
      %s157 = sshll.u32 [#allocation16], 4
      %s158 = int_to_ptr.vmem [resolvable:$true] %s157
      %163 = dma.hbm_to_vmem [thread:$0]  %s17, 4096, %s158, [#allocation15], 256, 256, 16
    $region73: #{_forward.1} parent=1 // pred_fallthru
      _
    // Predicated region
    $region74: #{_forward.1} parent=1 // pred_check
      _
    $region75: #{_forward.1} parent=1 // pred_check_branch
      %165 = sbr.rel (0) target = $region77
    $region76: #{_forward.1} parent=1 // pred_region
      _
    $region77: #{_forward.1} parent=1 // pred_fallthru
      _
    // Predicated region
    $region78: #{_forward.1} parent=1 // pred_check
      _
    $region79: #{_forward.1} parent=1 // pred_check_branch
      %167 = sbr.rel (0) target = $region81
    $region80: #{_forward.1} parent=1 // pred_region
      %s169 = ssub.s32 4096, 4096
      %170 = vsyncadd [#allocation18], %s169
      %s171 = sshll.u32 [#allocation17], 4
      %s172 = int_to_ptr.vmem [resolvable:$true] %s171
      %177 = dma.hbm_to_vmem [thread:$0]  %s19, 4096, %s172, [#allocation18], 64, 64, 4
    $region81: #{_forward.1} parent=1 // pred_fallthru
      _
    // Predicated region
    $region82: #{_forward.1} parent=1 // pred_check
      _
    $region83: #{_forward.1} parent=1 // pred_check_branch
      %179 = sbr.rel (0) target = $region85
    $region84: #{_forward.1} parent=1 // pred_region
      _
    $region85: #{_forward.1} parent=1 // pred_fallthru
      _
    // Predicated region
    $region86: #{_forward.1} parent=1 // pred_check
      _
    $region87: #{_forward.1} parent=1 // pred_check_branch
      %181 = sbr.rel (0) target = $region89
    $region88: #{_forward.1} parent=1 // pred_region
      %s183 = ssub.s32 1024, 1024
      %184 = vsyncadd [#allocation18], %s183
      %s185 = sshll.u32 [#allocation19], 4
      %s186 = int_to_ptr.vmem [resolvable:$true] %s185
      %191 = dma.hbm_to_vmem [thread:$0]  %s21, 1024, %s186, [#allocation18], 64, 64, 4
    $region89: #{_forward.1} parent=1 // pred_fallthru
      _
    // Predicated region
    $region90: #{_forward.1} parent=1 // pred_check
      _
    $region91: #{_forward.1} parent=1 // pred_check_branch
      %193 = sbr.rel (0) target = $region93
    $region92: #{_forward.1} parent=1 // pred_region
      _
    $region93: #{_forward.1} parent=1 // pred_fallthru
      _
    // Predicated region
    $region94: #{_forward.1} parent=1 // pred_check
      _
    $region95: #{_forward.1} parent=1 // pred_check_branch
      %195 = sbr.rel (0) target = $region97
    $region96: #{_forward.1} parent=1 // pred_region
      %s197 = ssub.s32 1024, 1024
      %198 = vsyncadd [#allocation21], %s197
      %s199 = sshll.u32 [#allocation20], 4
      %s200 = int_to_ptr.vmem [resolvable:$true] %s199
      %205 = dma.hbm_to_vmem [thread:$0]  %s23, 1024, %s200, [#allocation21], 64, 64, 4
    $region97: #{_forward.1} parent=1 // pred_fallthru
      _
    // Predicated region
    $region98: #{_forward.1} parent=1 // pred_check
      _
    $region99: #{_forward.1} parent=1 // pred_check_branch
      %207 = sbr.rel (0) target = $region101
    $region100: #{_forward.1} parent=1 // pred_region
      _
    $region101: #{_forward.1} parent=1 // pred_fallthru
      _
    // Predicated region
    $region102: #{_forward.1} parent=1 // pred_check
      _
    $region103: #{_forward.1} parent=1 // pred_check_branch
      %209 = sbr.rel (0) target = $region105
    $region104: #{_forward.1} parent=1 // pred_region
      %210 = dma.done [#allocation3], 3072
    $region105: #{_forward.1} parent=1 // pred_fallthru
      _
    // Predicated region
    $region106: #{_forward.1} parent=1 // pred_check
      _
    $region107: #{_forward.1} parent=1 // pred_check_branch
      %212 = sbr.rel (0) target = $region109
    $region108: #{_forward.1} parent=1 // pred_region
      %213 = dma.done [#allocation6], 6144
    $region109: #{_forward.1} parent=1 // pred_fallthru
      _
    // Predicated region
    $region110: #{_forward.1} parent=1 // pred_check
      _
    $region111: #{_forward.1} parent=1 // pred_check_branch
      %215 = sbr.rel (0) target = $region113
    $region112: #{_forward.1} parent=1 // pred_region
      %216 = dma.done [#allocation6], 2048
    $region113: #{_forward.1} parent=1 // pred_fallthru
      _
    // Predicated region
    $region114: #{_forward.1} parent=1 // pred_check
      _
    $region115: #{_forward.1} parent=1 // pred_check_branch
      %218 = sbr.rel (0) target = $region117
    $region116: #{_forward.1} parent=1 // pred_region
      %219 = dma.done [#allocation9], 32
    $region117: #{_forward.1} parent=1 // pred_fallthru
      _
    // Predicated region
    $region118: #{_forward.1} parent=1 // pred_check
      _
    $region119: #{_forward.1} parent=1 // pred_check_branch
      %221 = sbr.rel (0) target = $region121
    $region120: #{_forward.1} parent=1 // pred_region
      %222 = dma.done [#allocation9], 4096
    $region121: #{_forward.1} parent=1 // pred_fallthru
      _
    // Predicated region
    $region122: #{_forward.1} parent=1 // pred_check
      _
    $region123: #{_forward.1} parent=1 // pred_check_branch
      %224 = sbr.rel (0) target = $region125
    $region124: #{_forward.1} parent=1 // pred_region
      %225 = dma.done [#allocation12], 4096
    $region125: #{_forward.1} parent=1 // pred_fallthru
      _
    // Predicated region
    $region126: #{_forward.1} parent=1 // pred_check
      _
    $region127: #{_forward.1} parent=1 // pred_check_branch
      %227 = sbr.rel (0) target = $region129
    $region128: #{_forward.1} parent=1 // pred_region
      %228 = dma.done [#allocation12], 32
    $region129: #{_forward.1} parent=1 // pred_fallthru
      _
    // Predicated region
    $region130: #{_forward.1} parent=1 // pred_check
      _
    $region131: #{_forward.1} parent=1 // pred_check_branch
      %230 = sbr.rel (0) target = $region133
    $region132: #{_forward.1} parent=1 // pred_region
      %231 = dma.done [#allocation15], 32
    $region133: #{_forward.1} parent=1 // pred_fallthru
      _
    // Predicated region
    $region134: #{_forward.1} parent=1 // pred_check
      _
    $region135: #{_forward.1} parent=1 // pred_check_branch
      %233 = sbr.rel (0) target = $region137
    $region136: #{_forward.1} parent=1 // pred_region
      %234 = dma.done [#allocation15], 4096
    $region137: #{_forward.1} parent=1 // pred_fallthru
      _
    // Predicated region
    $region138: #{_forward.1} parent=1 // pred_check
      _
    $region139: #{_forward.1} parent=1 // pred_check_branch
      %236 = sbr.rel (0) target = $region141
    $region140: #{_forward.1} parent=1 // pred_region
      %237 = dma.done [#allocation18], 4096
    $region141: #{_forward.1} parent=1 // pred_fallthru
      _
    // Predicated region
    $region142: #{_forward.1} parent=1 // pred_check
      _
    $region143: #{_forward.1} parent=1 // pred_check_branch
      %239 = sbr.rel (0) target = $region145
    $region144: #{_forward.1} parent=1 // pred_region
      %240 = dma.done [#allocation18], 1024
    $region145: #{_forward.1} parent=1 // pred_fallthru
      _
    // Predicated region
    $region146: #{_forward.1} parent=1 // pred_check
      _
    $region147: #{_forward.1} parent=1 // pred_check_branch
      %242 = sbr.rel (0) target = $region149
    $region148: #{_forward.1} parent=1 // pred_region
      %243 = dma.done [#allocation21], 1024
    $region149: #{_forward.1} parent=1 // pred_fallthru
      _
    %v245 = vld [vmem:[%s0] sm:$0xff]
    %v246 = vld [vmem:[%s0 + $0x8] sm:$0xff]
    %v247 = vlaneseq
    %v248 = vand.u32 %v247, 127
    %v249 = vadd.s32 %v248, 128
    %v250 = vadd.s32 %v248, 256
    %251 = vset.pattern.permute.xlu0 0
    %252 = vperm.xlu0 %251, %v245
    %v253 = vpop.permute.xlu0 %252
    %254 = vset.pattern.permute.xlu0 0
    %255 = vperm.xlu0 %254, %v246
    %v256 = vpop.permute.xlu0 %255
    %vm257 = vcmp.eq.s32.totalorder %v248, %v253
    %vm258 = vcmp.eq.s32.totalorder %v249, %v253
    %vm259 = vcmp.eq.s32.totalorder %v250, %v253
    %vm260 = vcmp.eq.s32.totalorder %v248, %v256
    %vm261 = vcmp.eq.s32.totalorder %v249, %v256
    %vm262 = vcmp.eq.s32.totalorder %v250, %v256
    %v263 = vsel %vm257, 1, 0
    %v264 = vsel %vm258, 1, 0
    %v265 = vsel %vm259, 1, 0
    %v266 = vsel %vm260, 1, 0
    %v267 = vsel %vm261, 1, 0
    %v268 = vsel %vm262, 1, 0
    %v269 = vcvt.s32.f32 %v263
    %v270 = vcvt.s32.f32 %v264
    %v271 = vcvt.s32.f32 %v265
    %v272 = vcvt.s32.f32 %v266
    %v273 = vcvt.s32.f32 %v267
    %v274 = vcvt.s32.f32 %v268
    %v275 = vpack.c.bf16 %v272, %v269
    %v276 = vpack.c.bf16 %v273, %v270
    %v277 = vpack.c.bf16 %v274, %v271
    %v278 = vld [vmem:[#allocation2] sm:$0xf]
    %v279 = vld [vmem:[#allocation2 + $0x4] sm:$0xf]
    %v280 = vld [vmem:[#allocation2 + $0x8] sm:$0xf]
    %v281 = vld [vmem:[#allocation2 + $0xc] sm:$0xf]
    %v282 = vld [vmem:[#allocation2 + $0x10] sm:$0xf]
    %v283 = vld [vmem:[#allocation2 + $0x14] sm:$0xf]
    %v284 = vld [vmem:[#allocation2 + $0x18] sm:$0xf]
    %v285 = vld [vmem:[#allocation2 + $0x1c] sm:$0xf]
    %v286 = vld [vmem:[#allocation2 + $0x20] sm:$0xf]
    %v287 = vld [vmem:[#allocation2 + $0x24] sm:$0xf]
    %v288 = vld [vmem:[#allocation2 + $0x28] sm:$0xf]
    %v289 = vld [vmem:[#allocation2 + $0x2c] sm:$0xf]
    %v290 = vld [vmem:[#allocation2 + $0x30] sm:$0xf]
    %v291 = vld [vmem:[#allocation2 + $0x34] sm:$0xf]
    %v292 = vld [vmem:[#allocation2 + $0x38] sm:$0xf]
    %v293 = vld [vmem:[#allocation2 + $0x3c] sm:$0xf]
    %v294 = vld [vmem:[#allocation2 + $0x40] sm:$0xf]
    %v295 = vld [vmem:[#allocation2 + $0x44] sm:$0xf]
    %v296 = vld [vmem:[#allocation2 + $0x48] sm:$0xf]
    %v297 = vld [vmem:[#allocation2 + $0x4c] sm:$0xf]
    %v298 = vld [vmem:[#allocation2 + $0x50] sm:$0xf]
    %v299 = vld [vmem:[#allocation2 + $0x54] sm:$0xf]
    %v300 = vld [vmem:[#allocation2 + $0x58] sm:$0xf]
    %v301 = vld [vmem:[#allocation2 + $0x5c] sm:$0xf]
    %v302 = vld [vmem:[#allocation2 + $0x60] sm:$0xf]
    %v303 = vld [vmem:[#allocation2 + $0x64] sm:$0xf]
    %v304 = vld [vmem:[#allocation2 + $0x68] sm:$0xf]
    %v305 = vld [vmem:[#allocation2 + $0x6c] sm:$0xf]
    %v306 = vld [vmem:[#allocation2 + $0x70] sm:$0xf]
    %v307 = vld [vmem:[#allocation2 + $0x74] sm:$0xf]
    %v308 = vld [vmem:[#allocation2 + $0x78] sm:$0xf]
    %v309 = vld [vmem:[#allocation2 + $0x7c] sm:$0xf]
    %v310 = vld [vmem:[#allocation2 + $0x80] sm:$0xf]
    %v311 = vld [vmem:[#allocation2 + $0x84] sm:$0xf]
    %v312 = vld [vmem:[#allocation2 + $0x88] sm:$0xf]
    %v313 = vld [vmem:[#allocation2 + $0x8c] sm:$0xf]
    %v314 = vld [vmem:[#allocation2 + $0x90] sm:$0xf]
    %v315 = vld [vmem:[#allocation2 + $0x94] sm:$0xf]
    %v316 = vld [vmem:[#allocation2 + $0x98] sm:$0xf]
    %v317 = vld [vmem:[#allocation2 + $0x9c] sm:$0xf]
    %v318 = vld [vmem:[#allocation2 + $0xa0] sm:$0xf]
    %v319 = vld [vmem:[#allocation2 + $0xa4] sm:$0xf]
    %v320 = vld [vmem:[#allocation2 + $0xa8] sm:$0xf]
    %v321 = vld [vmem:[#allocation2 + $0xac] sm:$0xf]
    %v322 = vld [vmem:[#allocation2 + $0xb0] sm:$0xf]
    %v323 = vld [vmem:[#allocation2 + $0xb4] sm:$0xf]
    %v324 = vld [vmem:[#allocation2 + $0xb8] sm:$0xf]
    %v325 = vld [vmem:[#allocation2 + $0xbc] sm:$0xf]
    %v326 = vld [vmem:[%s2] sm:$0xff]
    %v375 = vunpack.c.l.b16 %v278
    %v376 = vunpack.c.l.b16 %v279
    %v377 = vunpack.c.l.b16 %v280
    %v378 = vunpack.c.l.b16 %v281
    %v379 = vunpack.c.l.b16 %v282
    %v380 = vunpack.c.l.b16 %v283
    %v381 = vunpack.c.l.b16 %v284
    %v382 = vunpack.c.l.b16 %v285
    %v383 = vunpack.c.l.b16 %v286
    %v384 = vunpack.c.l.b16 %v287
    %v385 = vunpack.c.l.b16 %v288
    %v386 = vunpack.c.l.b16 %v289
    %v387 = vunpack.c.l.b16 %v290
    %v388 = vunpack.c.l.b16 %v291
    %v389 = vunpack.c.l.b16 %v292
    %v390 = vunpack.c.l.b16 %v293
    %v391 = vunpack.c.l.b16 %v294
    %v392 = vunpack.c.l.b16 %v295
    %v393 = vunpack.c.l.b16 %v296
    %v394 = vunpack.c.l.b16 %v297
    %v395 = vunpack.c.l.b16 %v298
    %v396 = vunpack.c.l.b16 %v299
    %v397 = vunpack.c.l.b16 %v300
    %v398 = vunpack.c.l.b16 %v301
    %v399 = vunpack.c.l.b16 %v302
    %v400 = vunpack.c.l.b16 %v303
    %v401 = vunpack.c.l.b16 %v304
    %v402 = vunpack.c.l.b16 %v305
    %v403 = vunpack.c.l.b16 %v306
    %v404 = vunpack.c.l.b16 %v307
    %v405 = vunpack.c.l.b16 %v308
    %v406 = vunpack.c.l.b16 %v309
    %v407 = vunpack.c.l.b16 %v310
    %v408 = vunpack.c.l.b16 %v311
    %v409 = vunpack.c.l.b16 %v312
    %v410 = vunpack.c.l.b16 %v313
    %v411 = vunpack.c.l.b16 %v314
    %v412 = vunpack.c.l.b16 %v315
    %v413 = vunpack.c.l.b16 %v316
    %v414 = vunpack.c.l.b16 %v317
    %v415 = vunpack.c.l.b16 %v318
    %v416 = vunpack.c.l.b16 %v319
    %v417 = vunpack.c.l.b16 %v320
    %v418 = vunpack.c.l.b16 %v321
    %v419 = vunpack.c.l.b16 %v322
    %v420 = vunpack.c.l.b16 %v323
    %v421 = vunpack.c.l.b16 %v324
    %v422 = vunpack.c.l.b16 %v325
    %v423 = vpack.c.b16 %v376, %v375
    %v424 = vpack.c.b16 %v378, %v377
    %v425 = vpack.c.b16 %v380, %v379
    %v426 = vpack.c.b16 %v382, %v381
    %v427 = vpack.c.b16 %v384, %v383
    %v428 = vpack.c.b16 %v386, %v385
    %v429 = vpack.c.b16 %v388, %v387
    %v430 = vpack.c.b16 %v390, %v389
    %v431 = vpack.c.b16 %v392, %v391
    %v432 = vpack.c.b16 %v394, %v393
    %v433 = vpack.c.b16 %v396, %v395
    %v434 = vpack.c.b16 %v398, %v397
    %v435 = vpack.c.b16 %v400, %v399
    %v436 = vpack.c.b16 %v402, %v401
    %v437 = vpack.c.b16 %v404, %v403
    %v438 = vpack.c.b16 %v406, %v405
    %v439 = vpack.c.b16 %v408, %v407
    %v440 = vpack.c.b16 %v410, %v409
    %v441 = vpack.c.b16 %v412, %v411
    %v442 = vpack.c.b16 %v414, %v413
    %v443 = vpack.c.b16 %v416, %v415
    %v444 = vpack.c.b16 %v418, %v417
    %v445 = vpack.c.b16 %v420, %v419
    %v446 = vpack.c.b16 %v422, %v421
    %471 = vmatprep.subr.bf16.mxu0 0
    %472 = vmatpush1.bf16.msra.mxu0 %v430
    %473 = vmatprep.subr.bf16.mxu0 0
    %474 = vmatpush1.bf16.msra.mxu0 %v429
    %475 = vmatprep.subr.bf16.mxu0 0
    %476 = vmatpush1.bf16.msra.mxu0 %v428
    %477 = vmatprep.subr.bf16.mxu0 0
    %478 = vmatpush1.bf16.msra.mxu0 %v427
    %479 = vmatprep.subr.bf16.mxu0 0
    %480 = vmatpush1.bf16.msra.mxu0 %v426
    %481 = vmatprep.subr.bf16.mxu0 0
    %482 = vmatpush1.bf16.msra.mxu0 %v425
    %483 = vmatprep.subr.bf16.mxu0 0
    %484 = vmatpush1.bf16.msra.mxu0 %v424
    %485 = vmatprep.subr.bf16.mxu0 0
    %486 = vmatpush1.bf16.msra.mxu0 %v423
    %487 = vmatprep.subr.bf16.mxu0 0
    %488 = vmatpush2.bf16.msra.mxu0 %v438
    %489 = vmatprep.subr.bf16.mxu0 0
    %490 = vmatpush2.bf16.msra.mxu0 %v437
    %491 = vmatprep.subr.bf16.mxu0 0
    %492 = vmatpush2.bf16.msra.mxu0 %v436
    %493 = vmatprep.subr.bf16.mxu0 0
    %494 = vmatpush2.bf16.msra.mxu0 %v435
    %495 = vmatprep.subr.bf16.mxu0 0
    %496 = vmatpush2.bf16.msra.mxu0 %v434
    %497 = vmatprep.subr.bf16.mxu0 0
    %498 = vmatpush2.bf16.msra.mxu0 %v433
    %499 = vmatprep.subr.bf16.mxu0 0
    %500 = vmatpush2.bf16.msra.mxu0 %v432
    %501 = vmatprep.subr.bf16.mxu0 0
    %502 = vmatpush2.bf16.msra.mxu0 %v431
    %503 = vmatprep.mubr.bf16.mxu0 %v276
    %504 = vmatmul.mubr.bf16.gmra.mxu0 %v275
    %v505 = vpop.f32.mrf.mxu0
    %v506 = vadd.f32 %v326, %v505
    %v507 = vpop.f32.mrf.mxu0
    %v508 = vpop.f32.mrf.mxu0
    %v509 = vadd.f32 %v326, %v508
    %v510 = vpop.f32.mrf.mxu0
    %511 = vdwg.mxu0
    %512 = vmatprep.subr.bf16.mxu0 0
    %513 = vmatpush1.bf16.msra.mxu0 %v446
    %514 = vmatprep.subr.bf16.mxu0 0
    %515 = vmatpush1.bf16.msra.mxu0 %v445
    %516 = vmatprep.subr.bf16.mxu0 0
    %517 = vmatpush1.bf16.msra.mxu0 %v444
    %518 = vmatprep.subr.bf16.mxu0 0
    %519 = vmatpush1.bf16.msra.mxu0 %v443
    %520 = vmatprep.subr.bf16.mxu0 0
    %521 = vmatpush1.bf16.msra.mxu0 %v442
    %522 = vmatprep.subr.bf16.mxu0 0
    %523 = vmatpush1.bf16.msra.mxu0 %v441
    %524 = vmatprep.subr.bf16.mxu0 0
    %525 = vmatpush1.bf16.msra.mxu0 %v440
    %526 = vmatprep.subr.bf16.mxu0 0
    %527 = vmatpush1.bf16.msra.mxu0 %v439
    %528 = vmatprep.subr.bf16.mxu0 0
    %529 = vmatpush2.bf16.msra.mxu0 0
    %530 = vmatprep.subr.bf16.mxu0 0
    %531 = vmatpush2.bf16.msra.mxu0 0
    %532 = vmatprep.subr.bf16.mxu0 0
    %533 = vmatpush2.bf16.msra.mxu0 0
    %534 = vmatprep.subr.bf16.mxu0 0
    %535 = vmatpush2.bf16.msra.mxu0 0
    %536 = vmatprep.subr.bf16.mxu0 0
    %537 = vmatpush2.bf16.msra.mxu0 0
    %538 = vmatprep.subr.bf16.mxu0 0
    %539 = vmatpush2.bf16.msra.mxu0 0
    %540 = vmatprep.subr.bf16.mxu0 0
    %541 = vmatpush2.bf16.msra.mxu0 0
    %542 = vmatprep.subr.bf16.mxu0 0
    %543 = vmatpush2.bf16.msra.mxu0 0
    %544 = vmatprep.mubr.bf16.mxu0 0
    %545 = vmatmul.mubr.bf16.gmra.mxu0 %v277
    %v546 = vpop.f32.mrf.mxu0
    %v547 = vadd.f32 %v506, %v546
    %v548 = vpop.f32.mrf.mxu0
    %v549 = vpop.f32.mrf.mxu0
    %v550 = vadd.f32 %v509, %v549
    %v551 = vpop.f32.mrf.mxu0
    %552 = vdwg.mxu0
    %v553 = vpack.c.bf16 %v550, %v547
    %v554 = vld [vmem:[#allocation5] sm:$0xff]
    %v555 = vld [vmem:[#allocation5 + $0x8] sm:$0xf]
    %v556 = vld [vmem:[#allocation5 + $0xc] sm:$0xff]
    %v557 = vld [vmem:[#allocation5 + $0x14] sm:$0xf]
    %v558 = vld [vmem:[#allocation5 + $0x18] sm:$0xff]
    %v559 = vld [vmem:[#allocation5 + $0x20] sm:$0xf]
    %v560 = vld [vmem:[#allocation5 + $0x24] sm:$0xff]
    %v561 = vld [vmem:[#allocation5 + $0x2c] sm:$0xf]
    %v562 = vld [vmem:[#allocation5 + $0x30] sm:$0xff]
    %v563 = vld [vmem:[#allocation5 + $0x38] sm:$0xf]
    %v564 = vld [vmem:[#allocation5 + $0x3c] sm:$0xff]
    %v565 = vld [vmem:[#allocation5 + $0x44] sm:$0xf]
    %v566 = vld [vmem:[#allocation5 + $0x48] sm:$0xff]
    %v567 = vld [vmem:[#allocation5 + $0x50] sm:$0xf]
    %v568 = vld [vmem:[#allocation5 + $0x54] sm:$0xff]
    %v569 = vld [vmem:[#allocation5 + $0x5c] sm:$0xf]
    %v570 = vld [vmem:[#allocation5 + $0x60] sm:$0xff]
    %v571 = vld [vmem:[#allocation5 + $0x68] sm:$0xf]
    %v572 = vld [vmem:[#allocation5 + $0x6c] sm:$0xff]
    %v573 = vld [vmem:[#allocation5 + $0x74] sm:$0xf]
    %v574 = vld [vmem:[#allocation5 + $0x78] sm:$0xff]
    %v575 = vld [vmem:[#allocation5 + $0x80] sm:$0xf]
    %v576 = vld [vmem:[#allocation5 + $0x84] sm:$0xff]
    %v577 = vld [vmem:[#allocation5 + $0x8c] sm:$0xf]
    %v578 = vld [vmem:[#allocation5 + $0x90] sm:$0xff]
    %v579 = vld [vmem:[#allocation5 + $0x98] sm:$0xf]
    %v580 = vld [vmem:[#allocation5 + $0x9c] sm:$0xff]
    %v581 = vld [vmem:[#allocation5 + $0xa4] sm:$0xf]
    %v582 = vld [vmem:[#allocation5 + $0xa8] sm:$0xff]
    %v583 = vld [vmem:[#allocation5 + $0xb0] sm:$0xf]
    %v584 = vld [vmem:[#allocation5 + $0xb4] sm:$0xff]
    %v585 = vld [vmem:[#allocation5 + $0xbc] sm:$0xf]
    %v586 = vld [vmem:[%s4] sm:$0x7]
    %v588 = vlaneseq
    %v589 = vshrl.u32 %v588, 7
    %v590 = vsub.s32 0, %v589
    %v591 = vrot.slane %v586, %v590
    %v592 = vlaneseq
    %v593 = vshrl.u32 %v592, 7
    %v594 = vsub.s32 1, %v593
    %v595 = vrot.slane %v586, %v594
    %v596 = vlaneseq
    %v597 = vshrl.u32 %v596, 7
    %v598 = vsub.s32 2, %v597
    %v599 = vrot.slane %v586, %v598
    %v635 = vunpack.c.l.b16 %v554
    %v636 = vunpack.c.h.b16 %v554
    %v637 = vunpack.c.l.b16 %v555
    %v638 = vunpack.c.l.b16 %v556
    %v639 = vunpack.c.h.b16 %v556
    %v640 = vunpack.c.l.b16 %v557
    %v641 = vunpack.c.l.b16 %v558
    %v642 = vunpack.c.h.b16 %v558
    %v643 = vunpack.c.l.b16 %v559
    %v644 = vunpack.c.l.b16 %v560
    %v645 = vunpack.c.h.b16 %v560
    %v646 = vunpack.c.l.b16 %v561
    %v647 = vunpack.c.l.b16 %v562
    %v648 = vunpack.c.h.b16 %v562
    %v649 = vunpack.c.l.b16 %v563
    %v650 = vunpack.c.l.b16 %v564
    %v651 = vunpack.c.h.b16 %v564
    %v652 = vunpack.c.l.b16 %v565
    %v653 = vunpack.c.l.b16 %v566
    %v654 = vunpack.c.h.b16 %v566
    %v655 = vunpack.c.l.b16 %v567
    %v656 = vunpack.c.l.b16 %v568
    %v657 = vunpack.c.h.b16 %v568
    %v658 = vunpack.c.l.b16 %v569
    %v659 = vunpack.c.l.b16 %v570
    %v660 = vunpack.c.h.b16 %v570
    %v661 = vunpack.c.l.b16 %v571
    %v662 = vunpack.c.l.b16 %v572
    %v663 = vunpack.c.h.b16 %v572
    %v664 = vunpack.c.l.b16 %v573
    %v665 = vunpack.c.l.b16 %v574
    %v666 = vunpack.c.h.b16 %v574
    %v667 = vunpack.c.l.b16 %v575
    %v668 = vunpack.c.l.b16 %v576
    %v669 = vunpack.c.h.b16 %v576
    %v670 = vunpack.c.l.b16 %v577
    %v671 = vunpack.c.l.b16 %v578
    %v672 = vunpack.c.h.b16 %v578
    %v673 = vunpack.c.l.b16 %v579
    %v674 = vunpack.c.l.b16 %v580
    %v675 = vunpack.c.h.b16 %v580
    %v676 = vunpack.c.l.b16 %v581
    %v677 = vunpack.c.l.b16 %v582
    %v678 = vunpack.c.h.b16 %v582
    %v679 = vunpack.c.l.b16 %v583
    %v680 = vunpack.c.l.b16 %v584
    %v681 = vunpack.c.h.b16 %v584
    %v682 = vunpack.c.l.b16 %v585
    %v683 = vpack.c.b16 %v638, %v635
    %v684 = vpack.c.b16 %v639, %v636
    %v685 = vpack.c.b16 %v640, %v637
    %v686 = vpack.c.b16 %v644, %v641
    %v687 = vpack.c.b16 %v645, %v642
    %v688 = vpack.c.b16 %v646, %v643
    %v689 = vpack.c.b16 %v650, %v647
    %v690 = vpack.c.b16 %v651, %v648
    %v691 = vpack.c.b16 %v652, %v649
    %v692 = vpack.c.b16 %v656, %v653
    %v693 = vpack.c.b16 %v657, %v654
    %v694 = vpack.c.b16 %v658, %v655
    %v695 = vpack.c.b16 %v662, %v659
    %v696 = vpack.c.b16 %v663, %v660
    %v697 = vpack.c.b16 %v664, %v661
    %v698 = vpack.c.b16 %v668, %v665
    %v699 = vpack.c.b16 %v669, %v666
    %v700 = vpack.c.b16 %v670, %v667
    %v701 = vpack.c.b16 %v674, %v671
    %v702 = vpack.c.b16 %v675, %v672
    %v703 = vpack.c.b16 %v676, %v673
    %v704 = vpack.c.b16 %v680, %v677
    %v705 = vpack.c.b16 %v681, %v678
    %v706 = vpack.c.b16 %v682, %v679
    %731 = vmatprep.subr.bf16.mxu0 %v705
    %732 = vmatpush1.bf16.msra.mxu0 %v704
    %733 = vmatprep.subr.bf16.mxu0 %v702
    %734 = vmatpush1.bf16.msra.mxu0 %v701
    %735 = vmatprep.subr.bf16.mxu0 %v699
    %736 = vmatpush1.bf16.msra.mxu0 %v698
    %737 = vmatprep.subr.bf16.mxu0 %v696
    %738 = vmatpush1.bf16.msra.mxu0 %v695
    %739 = vmatprep.subr.bf16.mxu0 %v693
    %740 = vmatpush1.bf16.msra.mxu0 %v692
    %741 = vmatprep.subr.bf16.mxu0 %v690
    %742 = vmatpush1.bf16.msra.mxu0 %v689
    %743 = vmatprep.subr.bf16.mxu0 %v687
    %744 = vmatpush1.bf16.msra.mxu0 %v686
    %745 = vmatprep.subr.bf16.mxu0 %v684
    %746 = vmatpush1.bf16.msra.mxu0 %v683
    %747 = vmatprep.subr.bf16.mxu0 0
    %748 = vmatpush2.bf16.msra.mxu0 0
    %749 = vmatprep.subr.bf16.mxu0 0
    %750 = vmatpush2.bf16.msra.mxu0 0
    %751 = vmatprep.subr.bf16.mxu0 0
    %752 = vmatpush2.bf16.msra.mxu0 0
    %753 = vmatprep.subr.bf16.mxu0 0
    %754 = vmatpush2.bf16.msra.mxu0 0
    %755 = vmatprep.subr.bf16.mxu0 0
    %756 = vmatpush2.bf16.msra.mxu0 0
    %757 = vmatprep.subr.bf16.mxu0 0
    %758 = vmatpush2.bf16.msra.mxu0 0
    %759 = vmatprep.subr.bf16.mxu0 0
    %760 = vmatpush2.bf16.msra.mxu0 0
    %761 = vmatprep.subr.bf16.mxu0 0
    %762 = vmatpush2.bf16.msra.mxu0 0
    %763 = vmatprep.mubr.bf16.mxu0 0
    %764 = vmatmul.mubr.bf16.gmra.mxu0 %v553
    %v765 = vpop.f32.mrf.mxu0
    %v766 = vadd.f32 %v591, %v765
    %v767 = vpop.f32.mrf.mxu0
    %v768 = vadd.f32 %v595, %v767
    %v769 = vpop.f32.mrf.mxu0
    %v770 = vadd.f32 %v591, %v769
    %v771 = vpop.f32.mrf.mxu0
    %v772 = vadd.f32 %v595, %v771
    %773 = vdwg.mxu0
    %774 = vmatprep.subr.bf16.mxu0 0
    %775 = vmatpush1.bf16.msra.mxu0 %v706
    %776 = vmatprep.subr.bf16.mxu0 0
    %777 = vmatpush1.bf16.msra.mxu0 %v703
    %778 = vmatprep.subr.bf16.mxu0 0
    %779 = vmatpush1.bf16.msra.mxu0 %v700
    %780 = vmatprep.subr.bf16.mxu0 0
    %781 = vmatpush1.bf16.msra.mxu0 %v697
    %782 = vmatprep.subr.bf16.mxu0 0
    %783 = vmatpush1.bf16.msra.mxu0 %v694
    %784 = vmatprep.subr.bf16.mxu0 0
    %785 = vmatpush1.bf16.msra.mxu0 %v691
    %786 = vmatprep.subr.bf16.mxu0 0
    %787 = vmatpush1.bf16.msra.mxu0 %v688
    %788 = vmatprep.subr.bf16.mxu0 0
    %789 = vmatpush1.bf16.msra.mxu0 %v685
    %790 = vmatprep.subr.bf16.mxu0 0
    %791 = vmatpush2.bf16.msra.mxu0 0
    %792 = vmatprep.subr.bf16.mxu0 0
    %793 = vmatpush2.bf16.msra.mxu0 0
    %794 = vmatprep.subr.bf16.mxu0 0
    %795 = vmatpush2.bf16.msra.mxu0 0
    %796 = vmatprep.subr.bf16.mxu0 0
    %797 = vmatpush2.bf16.msra.mxu0 0
    %798 = vmatprep.subr.bf16.mxu0 0
    %799 = vmatpush2.bf16.msra.mxu0 0
    %800 = vmatprep.subr.bf16.mxu0 0
    %801 = vmatpush2.bf16.msra.mxu0 0
    %802 = vmatprep.subr.bf16.mxu0 0
    %803 = vmatpush2.bf16.msra.mxu0 0
    %804 = vmatprep.subr.bf16.mxu0 0
    %805 = vmatpush2.bf16.msra.mxu0 0
    %806 = vmatprep.mubr.bf16.mxu0 0
    %807 = vmatmul.mubr.bf16.gmra.mxu0 %v553
    %v808 = vpop.f32.mrf.mxu0
    %v809 = vadd.f32 %v599, %v808
    %v810 = vpop.f32.mrf.mxu0
    %v811 = vpop.f32.mrf.mxu0
    %v812 = vadd.f32 %v599, %v811
    %v813 = vpop.f32.mrf.mxu0
    %814 = vdwg.mxu0
    %v815 = vpack.c.bf16 %v770, %v766
    %v816 = vpack.c.bf16 %v772, %v768
    %v817 = vpack.c.bf16 %v812, %v809
    %vm818 = vcmask 261120
    %v820 = vsel %vm818, %v815, 0
    %v823 = vsel %vm818, %v816, 0
    %825 = vmatprep.subr.bf16.mxu0 0
    %826 = vmatpush1.bf16.xpose.msra.mxu0 0
    %827 = vmatprep.subr.bf16.mxu0 0
    %828 = vmatpush1.bf16.xpose.msra.mxu0 0
    %829 = vmatprep.subr.bf16.mxu0 0
    %830 = vmatpush1.bf16.xpose.msra.mxu0 0
    %831 = vmatprep.subr.bf16.mxu0 0
    %832 = vmatpush1.bf16.xpose.msra.mxu0 0
    %833 = vmatprep.subr.bf16.mxu0 0
    %834 = vmatpush1.bf16.xpose.msra.mxu0 0
    %835 = vmatprep.subr.bf16.mxu0 0
    %836 = vmatpush1.bf16.xpose.msra.mxu0 0
    %837 = vmatprep.subr.bf16.mxu0 0
    %838 = vmatpush1.bf16.xpose.msra.mxu0 0
    %839 = vmatprep.subr.bf16.mxu0 0
    %840 = vmatpush1.bf16.xpose.msra.mxu0 %v823
    %841 = vmatprep.subr.bf16.mxu0 0
    %842 = vmatpush2.bf16.xpose.msra.mxu0 0
    %843 = vmatprep.subr.bf16.mxu0 0
    %844 = vmatpush2.bf16.xpose.msra.mxu0 0
    %845 = vmatprep.subr.bf16.mxu0 0
    %846 = vmatpush2.bf16.xpose.msra.mxu0 0
    %847 = vmatprep.subr.bf16.mxu0 0
    %848 = vmatpush2.bf16.xpose.msra.mxu0 0
    %849 = vmatprep.subr.bf16.mxu0 0
    %850 = vmatpush2.bf16.xpose.msra.mxu0 0
    %851 = vmatprep.subr.bf16.mxu0 0
    %852 = vmatpush2.bf16.xpose.msra.mxu0 0
    %853 = vmatprep.subr.bf16.mxu0 0
    %854 = vmatpush2.bf16.xpose.msra.mxu0 0
    %855 = vmatprep.subr.bf16.mxu0 0
    %856 = vmatpush2.bf16.xpose.msra.mxu0 0
    %857 = vmatprep.mubr.bf16.mxu0 0
    %858 = vmatmul.mubr.bf16.gmra.mxu0 %v820
    %v859 = vpop.f32.mrf.mxu0
    %v860 = vadd.f32 0.0, %v859
    %v861 = vpop.f32.mrf.mxu0
    %v862 = vpop.f32.mrf.mxu0
    %v863 = vpop.f32.mrf.mxu0
    %864 = vdwg.mxu0
    %866 = vrot.lane.b32.xlu0 %v815, 96
    %v867 = vpop.permute.xlu0 %866
    %869 = vrot.lane.b32.xlu0 %v816, 96
    %v870 = vpop.permute.xlu0 %869
    %v872 = vsel %vm818, %v867, 0
    %v875 = vsel %vm818, %v870, 0
    %877 = vmatprep.subr.bf16.mxu0 0
    %878 = vmatpush1.bf16.xpose.msra.mxu0 0
    %879 = vmatprep.subr.bf16.mxu0 0
    %880 = vmatpush1.bf16.xpose.msra.mxu0 0
    %881 = vmatprep.subr.bf16.mxu0 0
    %882 = vmatpush1.bf16.xpose.msra.mxu0 0
    %883 = vmatprep.subr.bf16.mxu0 0
    %884 = vmatpush1.bf16.xpose.msra.mxu0 0
    %885 = vmatprep.subr.bf16.mxu0 0
    %886 = vmatpush1.bf16.xpose.msra.mxu0 0
    %887 = vmatprep.subr.bf16.mxu0 0
    %888 = vmatpush1.bf16.xpose.msra.mxu0 0
    %889 = vmatprep.subr.bf16.mxu0 0
    %890 = vmatpush1.bf16.xpose.msra.mxu0 0
    %891 = vmatprep.subr.bf16.mxu0 0
    %892 = vmatpush1.bf16.xpose.msra.mxu0 %v875
    %893 = vmatprep.subr.bf16.mxu0 0
    %894 = vmatpush2.bf16.xpose.msra.mxu0 0
    %895 = vmatprep.subr.bf16.mxu0 0
    %896 = vmatpush2.bf16.xpose.msra.mxu0 0
    %897 = vmatprep.subr.bf16.mxu0 0
    %898 = vmatpush2.bf16.xpose.msra.mxu0 0
    %899 = vmatprep.subr.bf16.mxu0 0
    %900 = vmatpush2.bf16.xpose.msra.mxu0 0
    %901 = vmatprep.subr.bf16.mxu0 0
    %902 = vmatpush2.bf16.xpose.msra.mxu0 0
    %903 = vmatprep.subr.bf16.mxu0 0
    %904 = vmatpush2.bf16.xpose.msra.mxu0 0
    %905 = vmatprep.subr.bf16.mxu0 0
    %906 = vmatpush2.bf16.xpose.msra.mxu0 0
    %907 = vmatprep.subr.bf16.mxu0 0
    %908 = vmatpush2.bf16.xpose.msra.mxu0 0
    %909 = vmatprep.mubr.bf16.mxu0 0
    %910 = vmatmul.mubr.bf16.gmra.mxu0 %v872
    %v911 = vpop.f32.mrf.mxu0
    %v912 = vadd.f32 0.0, %v911
    %v913 = vpop.f32.mrf.mxu0
    %v914 = vpop.f32.mrf.mxu0
    %v915 = vpop.f32.mrf.mxu0
    %916 = vdwg.mxu0
    %917 = vrot.lane.b32.xlu0 %v815, 64
    %v918 = vpop.permute.xlu0 %917
    %919 = vrot.lane.b32.xlu0 %v816, 64
    %v920 = vpop.permute.xlu0 %919
    %v922 = vsel %vm818, %v918, 0
    %v925 = vsel %vm818, %v920, 0
    %927 = vmatprep.subr.bf16.mxu0 0
    %928 = vmatpush1.bf16.xpose.msra.mxu0 0
    %929 = vmatprep.subr.bf16.mxu0 0
    %930 = vmatpush1.bf16.xpose.msra.mxu0 0
    %931 = vmatprep.subr.bf16.mxu0 0
    %932 = vmatpush1.bf16.xpose.msra.mxu0 0
    %933 = vmatprep.subr.bf16.mxu0 0
    %934 = vmatpush1.bf16.xpose.msra.mxu0 0
    %935 = vmatprep.subr.bf16.mxu0 0
    %936 = vmatpush1.bf16.xpose.msra.mxu0 0
    %937 = vmatprep.subr.bf16.mxu0 0
    %938 = vmatpush1.bf16.xpose.msra.mxu0 0
    %939 = vmatprep.subr.bf16.mxu0 0
    %940 = vmatpush1.bf16.xpose.msra.mxu0 0
    %941 = vmatprep.subr.bf16.mxu0 0
    %942 = vmatpush1.bf16.xpose.msra.mxu0 %v925
    %943 = vmatprep.subr.bf16.mxu0 0
    %944 = vmatpush2.bf16.xpose.msra.mxu0 0
    %945 = vmatprep.subr.bf16.mxu0 0
    %946 = vmatpush2.bf16.xpose.msra.mxu0 0
    %947 = vmatprep.subr.bf16.mxu0 0
    %948 = vmatpush2.bf16.xpose.msra.mxu0 0
    %949 = vmatprep.subr.bf16.mxu0 0
    %950 = vmatpush2.bf16.xpose.msra.mxu0 0
    %951 = vmatprep.subr.bf16.mxu0 0
    %952 = vmatpush2.bf16.xpose.msra.mxu0 0
    %953 = vmatprep.subr.bf16.mxu0 0
    %954 = vmatpush2.bf16.xpose.msra.mxu0 0
    %955 = vmatprep.subr.bf16.mxu0 0
    %956 = vmatpush2.bf16.xpose.msra.mxu0 0
    %957 = vmatprep.subr.bf16.mxu0 0
    %958 = vmatpush2.bf16.xpose.msra.mxu0 0
    %959 = vmatprep.mubr.bf16.mxu0 0
    %960 = vmatmul.mubr.bf16.gmra.mxu0 %v922
    %v961 = vpop.f32.mrf.mxu0
    %v962 = vadd.f32 0.0, %v961
    %v963 = vpop.f32.mrf.mxu0
    %v964 = vpop.f32.mrf.mxu0
    %v965 = vpop.f32.mrf.mxu0
    %966 = vdwg.mxu0
    %967 = vrot.lane.b32.xlu0 %v815, 32
    %v968 = vpop.permute.xlu0 %967
    %969 = vrot.lane.b32.xlu0 %v816, 32
    %v970 = vpop.permute.xlu0 %969
    %v972 = vsel %vm818, %v968, 0
    %v975 = vsel %vm818, %v970, 0
    %977 = vmatprep.subr.bf16.mxu0 0
    %978 = vmatpush1.bf16.xpose.msra.mxu0 0
    %979 = vmatprep.subr.bf16.mxu0 0
    %980 = vmatpush1.bf16.xpose.msra.mxu0 0
    %981 = vmatprep.subr.bf16.mxu0 0
    %982 = vmatpush1.bf16.xpose.msra.mxu0 0
    %983 = vmatprep.subr.bf16.mxu0 0
    %984 = vmatpush1.bf16.xpose.msra.mxu0 0
    %985 = vmatprep.subr.bf16.mxu0 0
    %986 = vmatpush1.bf16.xpose.msra.mxu0 0
    %987 = vmatprep.subr.bf16.mxu0 0
    %988 = vmatpush1.bf16.xpose.msra.mxu0 0
    %989 = vmatprep.subr.bf16.mxu0 0
    %990 = vmatpush1.bf16.xpose.msra.mxu0 0
    %991 = vmatprep.subr.bf16.mxu0 0
    %992 = vmatpush1.bf16.xpose.msra.mxu0 %v975
    %993 = vmatprep.subr.bf16.mxu0 0
    %994 = vmatpush2.bf16.xpose.msra.mxu0 0
    %995 = vmatprep.subr.bf16.mxu0 0
    %996 = vmatpush2.bf16.xpose.msra.mxu0 0
    %997 = vmatprep.subr.bf16.mxu0 0
    %998 = vmatpush2.bf16.xpose.msra.mxu0 0
    %999 = vmatprep.subr.bf16.mxu0 0
    %1000 = vmatpush2.bf16.xpose.msra.mxu0 0
    %1001 = vmatprep.subr.bf16.mxu0 0
    %1002 = vmatpush2.bf16.xpose.msra.mxu0 0
    %1003 = vmatprep.subr.bf16.mxu0 0
    %1004 = vmatpush2.bf16.xpose.msra.mxu0 0
    %1005 = vmatprep.subr.bf16.mxu0 0
    %1006 = vmatpush2.bf16.xpose.msra.mxu0 0
    %1007 = vmatprep.subr.bf16.mxu0 0
    %1008 = vmatpush2.bf16.xpose.msra.mxu0 0
    %1009 = vmatprep.mubr.bf16.mxu0 0
    %1010 = vmatmul.mubr.bf16.gmra.mxu0 %v972
    %v1011 = vpop.f32.mrf.mxu0
    %v1012 = vadd.f32 0.0, %v1011
    %v1013 = vpop.f32.mrf.mxu0
    %v1014 = vpop.f32.mrf.mxu0
    %v1015 = vpop.f32.mrf.mxu0
    %1016 = vdwg.mxu0
    %v1017 = vrot.slane %v815, 4
    %v1018 = vrot.slane %v816, 4
    %v1020 = vsel %vm818, %v1017, 0
    %v1023 = vsel %vm818, %v1018, 0
    %1025 = vmatprep.subr.bf16.mxu0 0
    %1026 = vmatpush1.bf16.xpose.msra.mxu0 0
    %1027 = vmatprep.subr.bf16.mxu0 0
    %1028 = vmatpush1.bf16.xpose.msra.mxu0 0
    %1029 = vmatprep.subr.bf16.mxu0 0
    %1030 = vmatpush1.bf16.xpose.msra.mxu0 0
    %1031 = vmatprep.subr.bf16.mxu0 0
    %1032 = vmatpush1.bf16.xpose.msra.mxu0 0
    %1033 = vmatprep.subr.bf16.mxu0 0
    %1034 = vmatpush1.bf16.xpose.msra.mxu0 0
    %1035 = vmatprep.subr.bf16.mxu0 0
    %1036 = vmatpush1.bf16.xpose.msra.mxu0 0
    %1037 = vmatprep.subr.bf16.mxu0 0
    %1038 = vmatpush1.bf16.xpose.msra.mxu0 0
    %1039 = vmatprep.subr.bf16.mxu0 0
    %1040 = vmatpush1.bf16.xpose.msra.mxu0 %v1023
    %1041 = vmatprep.subr.bf16.mxu0 0
    %1042 = vmatpush2.bf16.xpose.msra.mxu0 0
    %1043 = vmatprep.subr.bf16.mxu0 0
    %1044 = vmatpush2.bf16.xpose.msra.mxu0 0
    %1045 = vmatprep.subr.bf16.mxu0 0
    %1046 = vmatpush2.bf16.xpose.msra.mxu0 0
    %1047 = vmatprep.subr.bf16.mxu0 0
    %1048 = vmatpush2.bf16.xpose.msra.mxu0 0
    %1049 = vmatprep.subr.bf16.mxu0 0
    %1050 = vmatpush2.bf16.xpose.msra.mxu0 0
    %1051 = vmatprep.subr.bf16.mxu0 0
    %1052 = vmatpush2.bf16.xpose.msra.mxu0 0
    %1053 = vmatprep.subr.bf16.mxu0 0
    %1054 = vmatpush2.bf16.xpose.msra.mxu0 0
    %1055 = vmatprep.subr.bf16.mxu0 0
    %1056 = vmatpush2.bf16.xpose.msra.mxu0 0
    %1057 = vmatprep.mubr.bf16.mxu0 0
    %1058 = vmatmul.mubr.bf16.gmra.mxu0 %v1020
    %v1059 = vpop.f32.mrf.mxu0
    %v1060 = vadd.f32 0.0, %v1059
    %v1061 = vpop.f32.mrf.mxu0
    %v1062 = vpop.f32.mrf.mxu0
    %v1063 = vpop.f32.mrf.mxu0
    %1064 = vdwg.mxu0
    %1065 = vrot.lane.b32.xlu0 %v1017, 96
    %v1066 = vpop.permute.xlu0 %1065
    %1067 = vrot.lane.b32.xlu0 %v1018, 96
    %v1068 = vpop.permute.xlu0 %1067
    %v1070 = vsel %vm818, %v1066, 0
    %v1073 = vsel %vm818, %v1068, 0
    %1075 = vmatprep.subr.bf16.mxu0 0
    %1076 = vmatpush1.bf16.xpose.msra.mxu0 0
    %1077 = vmatprep.subr.bf16.mxu0 0
    %1078 = vmatpush1.bf16.xpose.msra.mxu0 0
    %1079 = vmatprep.subr.bf16.mxu0 0
    %1080 = vmatpush1.bf16.xpose.msra.mxu0 0
    %1081 = vmatprep.subr.bf16.mxu0 0
    %1082 = vmatpush1.bf16.xpose.msra.mxu0 0
    %1083 = vmatprep.subr.bf16.mxu0 0
    %1084 = vmatpush1.bf16.xpose.msra.mxu0 0
    %1085 = vmatprep.subr.bf16.mxu0 0
    %1086 = vmatpush1.bf16.xpose.msra.mxu0 0
    %1087 = vmatprep.subr.bf16.mxu0 0
    %1088 = vmatpush1.bf16.xpose.msra.mxu0 0
    %1089 = vmatprep.subr.bf16.mxu0 0
    %1090 = vmatpush1.bf16.xpose.msra.mxu0 %v1073
    %1091 = vmatprep.subr.bf16.mxu0 0
    %1092 = vmatpush2.bf16.xpose.msra.mxu0 0
    %1093 = vmatprep.subr.bf16.mxu0 0
    %1094 = vmatpush2.bf16.xpose.msra.mxu0 0
    %1095 = vmatprep.subr.bf16.mxu0 0
    %1096 = vmatpush2.bf16.xpose.msra.mxu0 0
    %1097 = vmatprep.subr.bf16.mxu0 0
    %1098 = vmatpush2.bf16.xpose.msra.mxu0 0
    %1099 = vmatprep.subr.bf16.mxu0 0
    %1100 = vmatpush2.bf16.xpose.msra.mxu0 0
    %1101 = vmatprep.subr.bf16.mxu0 0
    %1102 = vmatpush2.bf16.xpose.msra.mxu0 0
    %1103 = vmatprep.subr.bf16.mxu0 0
    %1104 = vmatpush2.bf16.xpose.msra.mxu0 0
    %1105 = vmatprep.subr.bf16.mxu0 0
    %1106 = vmatpush2.bf16.xpose.msra.mxu0 0
    %1107 = vmatprep.mubr.bf16.mxu0 0
    %1108 = vmatmul.mubr.bf16.gmra.mxu0 %v1070
    %v1109 = vpop.f32.mrf.mxu0
    %v1110 = vadd.f32 0.0, %v1109
    %v1111 = vpop.f32.mrf.mxu0
    %v1112 = vpop.f32.mrf.mxu0
    %v1113 = vpop.f32.mrf.mxu0
    %1114 = vdwg.mxu0
    %1115 = vrot.lane.b32.xlu0 %v1017, 64
    %v1116 = vpop.permute.xlu0 %1115
    %1117 = vrot.lane.b32.xlu0 %v1018, 64
    %v1118 = vpop.permute.xlu0 %1117
    %v1120 = vsel %vm818, %v1116, 0
    %v1123 = vsel %vm818, %v1118, 0
    %1125 = vmatprep.subr.bf16.mxu0 0
    %1126 = vmatpush1.bf16.xpose.msra.mxu0 0
    %1127 = vmatprep.subr.bf16.mxu0 0
    %1128 = vmatpush1.bf16.xpose.msra.mxu0 0
    %1129 = vmatprep.subr.bf16.mxu0 0
    %1130 = vmatpush1.bf16.xpose.msra.mxu0 0
    %1131 = vmatprep.subr.bf16.mxu0 0
    %1132 = vmatpush1.bf16.xpose.msra.mxu0 0
    %1133 = vmatprep.subr.bf16.mxu0 0
    %1134 = vmatpush1.bf16.xpose.msra.mxu0 0
    %1135 = vmatprep.subr.bf16.mxu0 0
    %1136 = vmatpush1.bf16.xpose.msra.mxu0 0
    %1137 = vmatprep.subr.bf16.mxu0 0
    %1138 = vmatpush1.bf16.xpose.msra.mxu0 0
    %1139 = vmatprep.subr.bf16.mxu0 0
    %1140 = vmatpush1.bf16.xpose.msra.mxu0 %v1123
    %1141 = vmatprep.subr.bf16.mxu0 0
    %1142 = vmatpush2.bf16.xpose.msra.mxu0 0
    %1143 = vmatprep.subr.bf16.mxu0 0
    %1144 = vmatpush2.bf16.xpose.msra.mxu0 0
    %1145 = vmatprep.subr.bf16.mxu0 0
    %1146 = vmatpush2.bf16.xpose.msra.mxu0 0
    %1147 = vmatprep.subr.bf16.mxu0 0
    %1148 = vmatpush2.bf16.xpose.msra.mxu0 0
    %1149 = vmatprep.subr.bf16.mxu0 0
    %1150 = vmatpush2.bf16.xpose.msra.mxu0 0
    %1151 = vmatprep.subr.bf16.mxu0 0
    %1152 = vmatpush2.bf16.xpose.msra.mxu0 0
    %1153 = vmatprep.subr.bf16.mxu0 0
    %1154 = vmatpush2.bf16.xpose.msra.mxu0 0
    %1155 = vmatprep.subr.bf16.mxu0 0
    %1156 = vmatpush2.bf16.xpose.msra.mxu0 0
    %1157 = vmatprep.mubr.bf16.mxu0 0
    %1158 = vmatmul.mubr.bf16.gmra.mxu0 %v1120
    %v1159 = vpop.f32.mrf.mxu0
    %v1160 = vadd.f32 0.0, %v1159
    %v1161 = vpop.f32.mrf.mxu0
    %v1162 = vpop.f32.mrf.mxu0
    %v1163 = vpop.f32.mrf.mxu0
    %1164 = vdwg.mxu0
    %1165 = vrot.lane.b32.xlu0 %v1017, 32
    %v1166 = vpop.permute.xlu0 %1165
    %1167 = vrot.lane.b32.xlu0 %v1018, 32
    %v1168 = vpop.permute.xlu0 %1167
    %v1170 = vsel %vm818, %v1166, 0
    %v1173 = vsel %vm818, %v1168, 0
    %1175 = vmatprep.subr.bf16.mxu0 0
    %1176 = vmatpush1.bf16.xpose.msra.mxu0 0
    %1177 = vmatprep.subr.bf16.mxu0 0
    %1178 = vmatpush1.bf16.xpose.msra.mxu0 0
    %1179 = vmatprep.subr.bf16.mxu0 0
    %1180 = vmatpush1.bf16.xpose.msra.mxu0 0
    %1181 = vmatprep.subr.bf16.mxu0 0
    %1182 = vmatpush1.bf16.xpose.msra.mxu0 0
    %1183 = vmatprep.subr.bf16.mxu0 0
    %1184 = vmatpush1.bf16.xpose.msra.mxu0 0
    %1185 = vmatprep.subr.bf16.mxu0 0
    %1186 = vmatpush1.bf16.xpose.msra.mxu0 0
    %1187 = vmatprep.subr.bf16.mxu0 0
    %1188 = vmatpush1.bf16.xpose.msra.mxu0 0
    %1189 = vmatprep.subr.bf16.mxu0 0
    %1190 = vmatpush1.bf16.xpose.msra.mxu0 %v1173
    %1191 = vmatprep.subr.bf16.mxu0 0
    %1192 = vmatpush2.bf16.xpose.msra.mxu0 0
    %1193 = vmatprep.subr.bf16.mxu0 0
    %1194 = vmatpush2.bf16.xpose.msra.mxu0 0
    %1195 = vmatprep.subr.bf16.mxu0 0
    %1196 = vmatpush2.bf16.xpose.msra.mxu0 0
    %1197 = vmatprep.subr.bf16.mxu0 0
    %1198 = vmatpush2.bf16.xpose.msra.mxu0 0
    %1199 = vmatprep.subr.bf16.mxu0 0
    %1200 = vmatpush2.bf16.xpose.msra.mxu0 0
    %1201 = vmatprep.subr.bf16.mxu0 0
    %1202 = vmatpush2.bf16.xpose.msra.mxu0 0
    %1203 = vmatprep.subr.bf16.mxu0 0
    %1204 = vmatpush2.bf16.xpose.msra.mxu0 0
    %1205 = vmatprep.subr.bf16.mxu0 0
    %1206 = vmatpush2.bf16.xpose.msra.mxu0 0
    %1207 = vmatprep.mubr.bf16.mxu0 0
    %1208 = vmatmul.mubr.bf16.gmra.mxu0 %v1170
    %v1209 = vpop.f32.mrf.mxu0
    %v1210 = vadd.f32 0.0, %v1209
    %v1211 = vpop.f32.mrf.mxu0
    %v1212 = vpop.f32.mrf.mxu0
    %v1213 = vpop.f32.mrf.mxu0
    %1214 = vdwg.mxu0
    %vm1215 = vcmask 64512
    %v1216 = vsel %vm1215, %v860, -inf
    %1217 = vmax.xlane.f32.xlu0 %v1216
    %v1218 = vpop.xlane.xlu0 %1217
    %v1219 = vsel %vm1215, %v912, -inf
    %1220 = vmax.xlane.f32.xlu0 %v1219
    %v1221 = vpop.xlane.xlu0 %1220
    %v1222 = vsel %vm1215, %v962, -inf
    %1223 = vmax.xlane.f32.xlu0 %v1222
    %v1224 = vpop.xlane.xlu0 %1223
    %v1225 = vsel %vm1215, %v1012, -inf
    %1226 = vmax.xlane.f32.xlu0 %v1225
    %v1227 = vpop.xlane.xlu0 %1226
    %v1228 = vsel %vm1215, %v1060, -inf
    %1229 = vmax.xlane.f32.xlu0 %v1228
    %v1230 = vpop.xlane.xlu0 %1229
    %v1231 = vsel %vm1215, %v1110, -inf
    %1232 = vmax.xlane.f32.xlu0 %v1231
    %v1233 = vpop.xlane.xlu0 %1232
    %v1234 = vsel %vm1215, %v1160, -inf
    %1235 = vmax.xlane.f32.xlu0 %v1234
    %v1236 = vpop.xlane.xlu0 %1235
    %v1237 = vsel %vm1215, %v1210, -inf
    %1238 = vmax.xlane.f32.xlu0 %v1237
    %v1239 = vpop.xlane.xlu0 %1238
    %v1240 = vsub.f32 %v860, %v1218
    %v1241 = vsub.f32 %v912, %v1221
    %v1242 = vsub.f32 %v962, %v1224
    %v1243 = vsub.f32 %v1012, %v1227
    %v1244 = vsub.f32 %v1060, %v1230
    %v1245 = vsub.f32 %v1110, %v1233
    %v1246 = vsub.f32 %v1160, %v1236
    %v1247 = vsub.f32 %v1210, %v1239
    %v1248 = vmul.f32 %v1240, 1.442695
    %v1249 = vpow.pop %v1248
    %v1250 = vmul.f32 %v1241, 1.442695
    %v1251 = vpow.pop %v1250
    %v1252 = vmul.f32 %v1242, 1.442695
    %v1253 = vpow.pop %v1252
    %v1254 = vmul.f32 %v1243, 1.442695
    %v1255 = vpow.pop %v1254
    %v1256 = vmul.f32 %v1244, 1.442695
    %v1257 = vpow.pop %v1256
    %v1258 = vmul.f32 %v1245, 1.442695
    %v1259 = vpow.pop %v1258
    %v1260 = vmul.f32 %v1246, 1.442695
    %v1261 = vpow.pop %v1260
    %v1262 = vmul.f32 %v1247, 1.442695
    %v1263 = vpow.pop %v1262
    %v1264 = vsel %vm1215, %v1249, 0.0
    %1265 = vadd.xlane.f32.xlu0 %v1264
    %v1266 = vpop.xlane.xlu0 %1265
    %v1267 = vsel %vm1215, %v1251, 0.0
    %1268 = vadd.xlane.f32.xlu0 %v1267
    %v1269 = vpop.xlane.xlu0 %1268
    %v1270 = vsel %vm1215, %v1253, 0.0
    %1271 = vadd.xlane.f32.xlu0 %v1270
    %v1272 = vpop.xlane.xlu0 %1271
    %v1273 = vsel %vm1215, %v1255, 0.0
    %1274 = vadd.xlane.f32.xlu0 %v1273
    %v1275 = vpop.xlane.xlu0 %1274
    %v1276 = vsel %vm1215, %v1257, 0.0
    %1277 = vadd.xlane.f32.xlu0 %v1276
    %v1278 = vpop.xlane.xlu0 %1277
    %v1279 = vsel %vm1215, %v1259, 0.0
    %1280 = vadd.xlane.f32.xlu0 %v1279
    %v1281 = vpop.xlane.xlu0 %1280
    %v1282 = vsel %vm1215, %v1261, 0.0
    %1283 = vadd.xlane.f32.xlu0 %v1282
    %v1284 = vpop.xlane.xlu0 %1283
    %v1285 = vsel %vm1215, %v1263, 0.0
    %1286 = vadd.xlane.f32.xlu0 %v1285
    %v1287 = vpop.xlane.xlu0 %1286
    %v1288 = vrcp.pop %v1266
    %v1289 = vrcp.pop %v1269
    %v1290 = vrcp.pop %v1272
    %v1291 = vrcp.pop %v1275
    %v1292 = vrcp.pop %v1278
    %v1293 = vrcp.pop %v1281
    %v1294 = vrcp.pop %v1284
    %v1295 = vrcp.pop %v1287
    %v1296 = vmul.f32 %v1249, %v1288
    %v1297 = vmul.f32 %v1251, %v1289
    %v1298 = vmul.f32 %v1253, %v1290
    %v1299 = vmul.f32 %v1255, %v1291
    %v1300 = vmul.f32 %v1257, %v1292
    %v1301 = vmul.f32 %v1259, %v1293
    %v1302 = vmul.f32 %v1261, %v1294
    %v1303 = vmul.f32 %v1263, %v1295
    %v1304 = vpack.c.bf16 %v1297, %v1296
    %v1305 = vpack.c.bf16 %v1299, %v1298
    %v1306 = vpack.c.bf16 %v1301, %v1300
    %v1307 = vpack.c.bf16 %v1303, %v1302
    %v1309 = vsel %vm1215, %v1304, 0
    %vm1311 = vcmask 1043456
    %v1313 = vsel %vm1311, %v817, 0
    %1315 = vmatprep.subr.bf16.mxu0 0
    %1316 = vmatpush1.bf16.msra.mxu0 0
    %1317 = vmatprep.subr.bf16.mxu0 0
    %1318 = vmatpush1.bf16.msra.mxu0 0
    %1319 = vmatprep.subr.bf16.mxu0 0
    %1320 = vmatpush1.bf16.msra.mxu0 0
    %1321 = vmatprep.subr.bf16.mxu0 0
    %1322 = vmatpush1.bf16.msra.mxu0 0
    %1323 = vmatprep.subr.bf16.mxu0 0
    %1324 = vmatpush1.bf16.msra.mxu0 0
    %1325 = vmatprep.subr.bf16.mxu0 0
    %1326 = vmatpush1.bf16.msra.mxu0 0
    %1327 = vmatprep.subr.bf16.mxu0 0
    %1328 = vmatpush1.bf16.msra.mxu0 0
    %1329 = vmatprep.subr.bf16.mxu0 0
    %1330 = vmatpush1.bf16.msra.mxu0 %v1313
    %1331 = vmatprep.subr.bf16.mxu0 0
    %1332 = vmatpush2.bf16.msra.mxu0 0
    %1333 = vmatprep.subr.bf16.mxu0 0
    %1334 = vmatpush2.bf16.msra.mxu0 0
    %1335 = vmatprep.subr.bf16.mxu0 0
    %1336 = vmatpush2.bf16.msra.mxu0 0
    %1337 = vmatprep.subr.bf16.mxu0 0
    %1338 = vmatpush2.bf16.msra.mxu0 0
    %1339 = vmatprep.subr.bf16.mxu0 0
    %1340 = vmatpush2.bf16.msra.mxu0 0
    %1341 = vmatprep.subr.bf16.mxu0 0
    %1342 = vmatpush2.bf16.msra.mxu0 0
    %1343 = vmatprep.subr.bf16.mxu0 0
    %1344 = vmatpush2.bf16.msra.mxu0 0
    %1345 = vmatprep.subr.bf16.mxu0 0
    %1346 = vmatpush2.bf16.msra.mxu0 0
    %1347 = vmatprep.mubr.bf16.mxu0 0
    %1348 = vmatmul.mubr.bf16.gmra.mxu0 %v1309
    %v1349 = vpop.f32.mrf.mxu0
    %v1350 = vadd.f32 0.0, %v1349
    %v1351 = vpop.f32.mrf.mxu0
    %v1352 = vpop.f32.mrf.mxu0
    %v1353 = vpop.f32.mrf.mxu0
    %1354 = vdwg.mxu0
    %v1356 = vrot.slane %v1304, 4
    %1358 = vrot.lane.b32.xlu0 %v817, 96
    %v1359 = vpop.permute.xlu0 %1358
    %v1361 = vsel %vm1215, %v1356, 0
    %v1364 = vsel %vm1311, %v1359, 0
    %1366 = vmatprep.subr.bf16.mxu0 0
    %1367 = vmatpush1.bf16.msra.mxu0 0
    %1368 = vmatprep.subr.bf16.mxu0 0
    %1369 = vmatpush1.bf16.msra.mxu0 0
    %1370 = vmatprep.subr.bf16.mxu0 0
    %1371 = vmatpush1.bf16.msra.mxu0 0
    %1372 = vmatprep.subr.bf16.mxu0 0
    %1373 = vmatpush1.bf16.msra.mxu0 0
    %1374 = vmatprep.subr.bf16.mxu0 0
    %1375 = vmatpush1.bf16.msra.mxu0 0
    %1376 = vmatprep.subr.bf16.mxu0 0
    %1377 = vmatpush1.bf16.msra.mxu0 0
    %1378 = vmatprep.subr.bf16.mxu0 0
    %1379 = vmatpush1.bf16.msra.mxu0 0
    %1380 = vmatprep.subr.bf16.mxu0 0
    %1381 = vmatpush1.bf16.msra.mxu0 %v1364
    %1382 = vmatprep.subr.bf16.mxu0 0
    %1383 = vmatpush2.bf16.msra.mxu0 0
    %1384 = vmatprep.subr.bf16.mxu0 0
    %1385 = vmatpush2.bf16.msra.mxu0 0
    %1386 = vmatprep.subr.bf16.mxu0 0
    %1387 = vmatpush2.bf16.msra.mxu0 0
    %1388 = vmatprep.subr.bf16.mxu0 0
    %1389 = vmatpush2.bf16.msra.mxu0 0
    %1390 = vmatprep.subr.bf16.mxu0 0
    %1391 = vmatpush2.bf16.msra.mxu0 0
    %1392 = vmatprep.subr.bf16.mxu0 0
    %1393 = vmatpush2.bf16.msra.mxu0 0
    %1394 = vmatprep.subr.bf16.mxu0 0
    %1395 = vmatpush2.bf16.msra.mxu0 0
    %1396 = vmatprep.subr.bf16.mxu0 0
    %1397 = vmatpush2.bf16.msra.mxu0 0
    %1398 = vmatprep.mubr.bf16.mxu0 0
    %1399 = vmatmul.mubr.bf16.gmra.mxu0 %v1361
    %v1400 = vpop.f32.mrf.mxu0
    %v1401 = vadd.f32 0.0, %v1400
    %v1402 = vpop.f32.mrf.mxu0
    %v1403 = vpop.f32.mrf.mxu0
    %v1404 = vpop.f32.mrf.mxu0
    %1405 = vdwg.mxu0
    %1406 = vrot.lane.b32.xlu0 %v817, 64
    %v1407 = vpop.permute.xlu0 %1406
    %v1409 = vsel %vm1215, %v1305, 0
    %v1412 = vsel %vm1311, %v1407, 0
    %1414 = vmatprep.subr.bf16.mxu0 0
    %1415 = vmatpush1.bf16.msra.mxu0 0
    %1416 = vmatprep.subr.bf16.mxu0 0
    %1417 = vmatpush1.bf16.msra.mxu0 0
    %1418 = vmatprep.subr.bf16.mxu0 0
    %1419 = vmatpush1.bf16.msra.mxu0 0
    %1420 = vmatprep.subr.bf16.mxu0 0
    %1421 = vmatpush1.bf16.msra.mxu0 0
    %1422 = vmatprep.subr.bf16.mxu0 0
    %1423 = vmatpush1.bf16.msra.mxu0 0
    %1424 = vmatprep.subr.bf16.mxu0 0
    %1425 = vmatpush1.bf16.msra.mxu0 0
    %1426 = vmatprep.subr.bf16.mxu0 0
    %1427 = vmatpush1.bf16.msra.mxu0 0
    %1428 = vmatprep.subr.bf16.mxu0 0
    %1429 = vmatpush1.bf16.msra.mxu0 %v1412
    %1430 = vmatprep.subr.bf16.mxu0 0
    %1431 = vmatpush2.bf16.msra.mxu0 0
    %1432 = vmatprep.subr.bf16.mxu0 0
    %1433 = vmatpush2.bf16.msra.mxu0 0
    %1434 = vmatprep.subr.bf16.mxu0 0
    %1435 = vmatpush2.bf16.msra.mxu0 0
    %1436 = vmatprep.subr.bf16.mxu0 0
    %1437 = vmatpush2.bf16.msra.mxu0 0
    %1438 = vmatprep.subr.bf16.mxu0 0
    %1439 = vmatpush2.bf16.msra.mxu0 0
    %1440 = vmatprep.subr.bf16.mxu0 0
    %1441 = vmatpush2.bf16.msra.mxu0 0
    %1442 = vmatprep.subr.bf16.mxu0 0
    %1443 = vmatpush2.bf16.msra.mxu0 0
    %1444 = vmatprep.subr.bf16.mxu0 0
    %1445 = vmatpush2.bf16.msra.mxu0 0
    %1446 = vmatprep.mubr.bf16.mxu0 0
    %1447 = vmatmul.mubr.bf16.gmra.mxu0 %v1409
    %v1448 = vpop.f32.mrf.mxu0
    %v1449 = vadd.f32 0.0, %v1448
    %v1450 = vpop.f32.mrf.mxu0
    %v1451 = vpop.f32.mrf.mxu0
    %v1452 = vpop.f32.mrf.mxu0
    %1453 = vdwg.mxu0
    %v1455 = vrot.slane %v1305, 4
    %1456 = vrot.lane.b32.xlu0 %v817, 32
    %v1457 = vpop.permute.xlu0 %1456
    %v1459 = vsel %vm1215, %v1455, 0
    %v1462 = vsel %vm1311, %v1457, 0
    %1464 = vmatprep.subr.bf16.mxu0 0
    %1465 = vmatpush1.bf16.msra.mxu0 0
    %1466 = vmatprep.subr.bf16.mxu0 0
    %1467 = vmatpush1.bf16.msra.mxu0 0
    %1468 = vmatprep.subr.bf16.mxu0 0
    %1469 = vmatpush1.bf16.msra.mxu0 0
    %1470 = vmatprep.subr.bf16.mxu0 0
    %1471 = vmatpush1.bf16.msra.mxu0 0
    %1472 = vmatprep.subr.bf16.mxu0 0
    %1473 = vmatpush1.bf16.msra.mxu0 0
    %1474 = vmatprep.subr.bf16.mxu0 0
    %1475 = vmatpush1.bf16.msra.mxu0 0
    %1476 = vmatprep.subr.bf16.mxu0 0
    %1477 = vmatpush1.bf16.msra.mxu0 0
    %1478 = vmatprep.subr.bf16.mxu0 0
    %1479 = vmatpush1.bf16.msra.mxu0 %v1462
    %1480 = vmatprep.subr.bf16.mxu0 0
    %1481 = vmatpush2.bf16.msra.mxu0 0
    %1482 = vmatprep.subr.bf16.mxu0 0
    %1483 = vmatpush2.bf16.msra.mxu0 0
    %1484 = vmatprep.subr.bf16.mxu0 0
    %1485 = vmatpush2.bf16.msra.mxu0 0
    %1486 = vmatprep.subr.bf16.mxu0 0
    %1487 = vmatpush2.bf16.msra.mxu0 0
    %1488 = vmatprep.subr.bf16.mxu0 0
    %1489 = vmatpush2.bf16.msra.mxu0 0
    %1490 = vmatprep.subr.bf16.mxu0 0
    %1491 = vmatpush2.bf16.msra.mxu0 0
    %1492 = vmatprep.subr.bf16.mxu0 0
    %1493 = vmatpush2.bf16.msra.mxu0 0
    %1494 = vmatprep.subr.bf16.mxu0 0
    %1495 = vmatpush2.bf16.msra.mxu0 0
    %1496 = vmatprep.mubr.bf16.mxu0 0
    %1497 = vmatmul.mubr.bf16.gmra.mxu0 %v1459
    %v1498 = vpop.f32.mrf.mxu0
    %v1499 = vadd.f32 0.0, %v1498
    %v1500 = vpop.f32.mrf.mxu0
    %v1501 = vpop.f32.mrf.mxu0
    %v1502 = vpop.f32.mrf.mxu0
    %1503 = vdwg.mxu0
    %1505 = vrot.lane.b32.xlu0 %v1401, 32
    %v1506 = vpop.permute.xlu0 %1505
    %1509 = vrot.lane.b32.xlu0 %v1449, 64
    %v1510 = vpop.permute.xlu0 %1509
    %1513 = vrot.lane.b32.xlu0 %v1499, 96
    %v1514 = vpop.permute.xlu0 %1513
    %v1516 = vsel %vm818, %v1350, %v1506
    %vm1517 = vcmask 523264
    %v1518 = vsel %vm1517, %v1516, %v1510
    %vm1519 = vcmask 785408
    %v1520 = vsel %vm1519, %v1518, %v1514
    %v1521 = vrot.slane %v817, 4
    %v1523 = vsel %vm1215, %v1306, 0
    %v1526 = vsel %vm1311, %v1521, 0
    %1528 = vmatprep.subr.bf16.mxu0 0
    %1529 = vmatpush1.bf16.msra.mxu0 0
    %1530 = vmatprep.subr.bf16.mxu0 0
    %1531 = vmatpush1.bf16.msra.mxu0 0
    %1532 = vmatprep.subr.bf16.mxu0 0
    %1533 = vmatpush1.bf16.msra.mxu0 0
    %1534 = vmatprep.subr.bf16.mxu0 0
    %1535 = vmatpush1.bf16.msra.mxu0 0
    %1536 = vmatprep.subr.bf16.mxu0 0
    %1537 = vmatpush1.bf16.msra.mxu0 0
    %1538 = vmatprep.subr.bf16.mxu0 0
    %1539 = vmatpush1.bf16.msra.mxu0 0
    %1540 = vmatprep.subr.bf16.mxu0 0
    %1541 = vmatpush1.bf16.msra.mxu0 0
    %1542 = vmatprep.subr.bf16.mxu0 0
    %1543 = vmatpush1.bf16.msra.mxu0 %v1526
    %1544 = vmatprep.subr.bf16.mxu0 0
    %1545 = vmatpush2.bf16.msra.mxu0 0
    %1546 = vmatprep.subr.bf16.mxu0 0
    %1547 = vmatpush2.bf16.msra.mxu0 0
    %1548 = vmatprep.subr.bf16.mxu0 0
    %1549 = vmatpush2.bf16.msra.mxu0 0
    %1550 = vmatprep.subr.bf16.mxu0 0
    %1551 = vmatpush2.bf16.msra.mxu0 0
    %1552 = vmatprep.subr.bf16.mxu0 0
    %1553 = vmatpush2.bf16.msra.mxu0 0
    %1554 = vmatprep.subr.bf16.mxu0 0
    %1555 = vmatpush2.bf16.msra.mxu0 0
    %1556 = vmatprep.subr.bf16.mxu0 0
    %1557 = vmatpush2.bf16.msra.mxu0 0
    %1558 = vmatprep.subr.bf16.mxu0 0
    %1559 = vmatpush2.bf16.msra.mxu0 0
    %1560 = vmatprep.mubr.bf16.mxu0 0
    %1561 = vmatmul.mubr.bf16.gmra.mxu0 %v1523
    %v1562 = vpop.f32.mrf.mxu0
    %v1563 = vadd.f32 0.0, %v1562
    %v1564 = vpop.f32.mrf.mxu0
    %v1565 = vpop.f32.mrf.mxu0
    %v1566 = vpop.f32.mrf.mxu0
    %1567 = vdwg.mxu0
    %v1569 = vrot.slane %v1306, 4
    %1570 = vrot.lane.b32.xlu0 %v1521, 96
    %v1571 = vpop.permute.xlu0 %1570
    %v1573 = vsel %vm1215, %v1569, 0
    %v1576 = vsel %vm1311, %v1571, 0
    %1578 = vmatprep.subr.bf16.mxu0 0
    %1579 = vmatpush1.bf16.msra.mxu0 0
    %1580 = vmatprep.subr.bf16.mxu0 0
    %1581 = vmatpush1.bf16.msra.mxu0 0
    %1582 = vmatprep.subr.bf16.mxu0 0
    %1583 = vmatpush1.bf16.msra.mxu0 0
    %1584 = vmatprep.subr.bf16.mxu0 0
    %1585 = vmatpush1.bf16.msra.mxu0 0
    %1586 = vmatprep.subr.bf16.mxu0 0
    %1587 = vmatpush1.bf16.msra.mxu0 0
    %1588 = vmatprep.subr.bf16.mxu0 0
    %1589 = vmatpush1.bf16.msra.mxu0 0
    %1590 = vmatprep.subr.bf16.mxu0 0
    %1591 = vmatpush1.bf16.msra.mxu0 0
    %1592 = vmatprep.subr.bf16.mxu0 0
    %1593 = vmatpush1.bf16.msra.mxu0 %v1576
    %1594 = vmatprep.subr.bf16.mxu0 0
    %1595 = vmatpush2.bf16.msra.mxu0 0
    %1596 = vmatprep.subr.bf16.mxu0 0
    %1597 = vmatpush2.bf16.msra.mxu0 0
    %1598 = vmatprep.subr.bf16.mxu0 0
    %1599 = vmatpush2.bf16.msra.mxu0 0
    %1600 = vmatprep.subr.bf16.mxu0 0
    %1601 = vmatpush2.bf16.msra.mxu0 0
    %1602 = vmatprep.subr.bf16.mxu0 0
    %1603 = vmatpush2.bf16.msra.mxu0 0
    %1604 = vmatprep.subr.bf16.mxu0 0
    %1605 = vmatpush2.bf16.msra.mxu0 0
    %1606 = vmatprep.subr.bf16.mxu0 0
    %1607 = vmatpush2.bf16.msra.mxu0 0
    %1608 = vmatprep.subr.bf16.mxu0 0
    %1609 = vmatpush2.bf16.msra.mxu0 0
    %1610 = vmatprep.mubr.bf16.mxu0 0
    %1611 = vmatmul.mubr.bf16.gmra.mxu0 %v1573
    %v1612 = vpop.f32.mrf.mxu0
    %v1613 = vadd.f32 0.0, %v1612
    %v1614 = vpop.f32.mrf.mxu0
    %v1615 = vpop.f32.mrf.mxu0
    %v1616 = vpop.f32.mrf.mxu0
    %1617 = vdwg.mxu0
    %1618 = vrot.lane.b32.xlu0 %v1521, 64
    %v1619 = vpop.permute.xlu0 %1618
    %v1621 = vsel %vm1215, %v1307, 0
    %v1624 = vsel %vm1311, %v1619, 0
    %1626 = vmatprep.subr.bf16.mxu0 0
    %1627 = vmatpush1.bf16.msra.mxu0 0
    %1628 = vmatprep.subr.bf16.mxu0 0
    %1629 = vmatpush1.bf16.msra.mxu0 0
    %1630 = vmatprep.subr.bf16.mxu0 0
    %1631 = vmatpush1.bf16.msra.mxu0 0
    %1632 = vmatprep.subr.bf16.mxu0 0
    %1633 = vmatpush1.bf16.msra.mxu0 0
    %1634 = vmatprep.subr.bf16.mxu0 0
    %1635 = vmatpush1.bf16.msra.mxu0 0
    %1636 = vmatprep.subr.bf16.mxu0 0
    %1637 = vmatpush1.bf16.msra.mxu0 0
    %1638 = vmatprep.subr.bf16.mxu0 0
    %1639 = vmatpush1.bf16.msra.mxu0 0
    %1640 = vmatprep.subr.bf16.mxu0 0
    %1641 = vmatpush1.bf16.msra.mxu0 %v1624
    %1642 = vmatprep.subr.bf16.mxu0 0
    %1643 = vmatpush2.bf16.msra.mxu0 0
    %1644 = vmatprep.subr.bf16.mxu0 0
    %1645 = vmatpush2.bf16.msra.mxu0 0
    %1646 = vmatprep.subr.bf16.mxu0 0
    %1647 = vmatpush2.bf16.msra.mxu0 0
    %1648 = vmatprep.subr.bf16.mxu0 0
    %1649 = vmatpush2.bf16.msra.mxu0 0
    %1650 = vmatprep.subr.bf16.mxu0 0
    %1651 = vmatpush2.bf16.msra.mxu0 0
    %1652 = vmatprep.subr.bf16.mxu0 0
    %1653 = vmatpush2.bf16.msra.mxu0 0
    %1654 = vmatprep.subr.bf16.mxu0 0
    %1655 = vmatpush2.bf16.msra.mxu0 0
    %1656 = vmatprep.subr.bf16.mxu0 0
    %1657 = vmatpush2.bf16.msra.mxu0 0
    %1658 = vmatprep.mubr.bf16.mxu0 0
    %1659 = vmatmul.mubr.bf16.gmra.mxu0 %v1621
    %v1660 = vpop.f32.mrf.mxu0
    %v1661 = vadd.f32 0.0, %v1660
    %v1662 = vpop.f32.mrf.mxu0
    %v1663 = vpop.f32.mrf.mxu0
    %v1664 = vpop.f32.mrf.mxu0
    %1665 = vdwg.mxu0
    %v1667 = vrot.slane %v1307, 4
    %1668 = vrot.lane.b32.xlu0 %v1521, 32
    %v1669 = vpop.permute.xlu0 %1668
    %v1671 = vsel %vm1215, %v1667, 0
    %v1674 = vsel %vm1311, %v1669, 0
    %1676 = vmatprep.subr.bf16.mxu0 0
    %1677 = vmatpush1.bf16.msra.mxu0 0
    %1678 = vmatprep.subr.bf16.mxu0 0
    %1679 = vmatpush1.bf16.msra.mxu0 0
    %1680 = vmatprep.subr.bf16.mxu0 0
    %1681 = vmatpush1.bf16.msra.mxu0 0
    %1682 = vmatprep.subr.bf16.mxu0 0
    %1683 = vmatpush1.bf16.msra.mxu0 0
    %1684 = vmatprep.subr.bf16.mxu0 0
    %1685 = vmatpush1.bf16.msra.mxu0 0
    %1686 = vmatprep.subr.bf16.mxu0 0
    %1687 = vmatpush1.bf16.msra.mxu0 0
    %1688 = vmatprep.subr.bf16.mxu0 0
    %1689 = vmatpush1.bf16.msra.mxu0 0
    %1690 = vmatprep.subr.bf16.mxu0 0
    %1691 = vmatpush1.bf16.msra.mxu0 %v1674
    %1692 = vmatprep.subr.bf16.mxu0 0
    %1693 = vmatpush2.bf16.msra.mxu0 0
    %1694 = vmatprep.subr.bf16.mxu0 0
    %1695 = vmatpush2.bf16.msra.mxu0 0
    %1696 = vmatprep.subr.bf16.mxu0 0
    %1697 = vmatpush2.bf16.msra.mxu0 0
    %1698 = vmatprep.subr.bf16.mxu0 0
    %1699 = vmatpush2.bf16.msra.mxu0 0
    %1700 = vmatprep.subr.bf16.mxu0 0
    %1701 = vmatpush2.bf16.msra.mxu0 0
    %1702 = vmatprep.subr.bf16.mxu0 0
    %1703 = vmatpush2.bf16.msra.mxu0 0
    %1704 = vmatprep.subr.bf16.mxu0 0
    %1705 = vmatpush2.bf16.msra.mxu0 0
    %1706 = vmatprep.subr.bf16.mxu0 0
    %1707 = vmatpush2.bf16.msra.mxu0 0
    %1708 = vmatprep.mubr.bf16.mxu0 0
    %1709 = vmatmul.mubr.bf16.gmra.mxu0 %v1671
    %v1710 = vpop.f32.mrf.mxu0
    %v1711 = vadd.f32 0.0, %v1710
    %v1712 = vpop.f32.mrf.mxu0
    %v1713 = vpop.f32.mrf.mxu0
    %v1714 = vpop.f32.mrf.mxu0
    %1715 = vdwg.mxu0
    %1717 = vrot.lane.b32.xlu0 %v1613, 32
    %v1718 = vpop.permute.xlu0 %1717
    %1721 = vrot.lane.b32.xlu0 %v1661, 64
    %v1722 = vpop.permute.xlu0 %1721
    %1725 = vrot.lane.b32.xlu0 %v1711, 96
    %v1726 = vpop.permute.xlu0 %1725
    %v1728 = vsel %vm818, %v1563, %v1718
    %v1729 = vsel %vm1517, %v1728, %v1722
    %v1730 = vsel %vm1519, %v1729, %v1726
    %v1731 = vpack.c.bf16 %v1730, %v1520
    %v1732 = vld [vmem:[#allocation7] sm:$0xf]
    %v1733 = vld [vmem:[#allocation7 + $0x4] sm:$0xf]
    %v1734 = vld [vmem:[#allocation7 + $0x8] sm:$0xf]
    %v1735 = vld [vmem:[#allocation7 + $0xc] sm:$0xf]
    %v1736 = vld [vmem:[#allocation7 + $0x10] sm:$0xf]
    %v1737 = vld [vmem:[#allocation7 + $0x14] sm:$0xf]
    %v1738 = vld [vmem:[#allocation7 + $0x18] sm:$0xf]
    %v1739 = vld [vmem:[#allocation7 + $0x1c] sm:$0xf]
    %v1740 = vld [vmem:[#allocation7 + $0x20] sm:$0xf]
    %v1741 = vld [vmem:[#allocation7 + $0x24] sm:$0xf]
    %v1742 = vld [vmem:[#allocation7 + $0x28] sm:$0xf]
    %v1743 = vld [vmem:[#allocation7 + $0x2c] sm:$0xf]
    %v1744 = vld [vmem:[#allocation7 + $0x30] sm:$0xf]
    %v1745 = vld [vmem:[#allocation7 + $0x34] sm:$0xf]
    %v1746 = vld [vmem:[#allocation7 + $0x38] sm:$0xf]
    %v1747 = vld [vmem:[#allocation7 + $0x3c] sm:$0xf]
    %v1748 = vld [vmem:[%s6] sm:$0x1]
    %v1750 = vlaneseq
    %v1751 = vshrl.u32 %v1750, 7
    %v1752 = vsub.s32 0, %v1751
    %v1753 = vrot.slane %v1748, %v1752
    %v1771 = vunpack.c.l.b16 %v1732
    %v1772 = vunpack.c.l.b16 %v1733
    %v1773 = vunpack.c.l.b16 %v1734
    %v1774 = vunpack.c.l.b16 %v1735
    %v1775 = vunpack.c.l.b16 %v1736
    %v1776 = vunpack.c.l.b16 %v1737
    %v1777 = vunpack.c.l.b16 %v1738
    %v1778 = vunpack.c.l.b16 %v1739
    %v1779 = vunpack.c.l.b16 %v1740
    %v1780 = vunpack.c.l.b16 %v1741
    %v1781 = vunpack.c.l.b16 %v1742
    %v1782 = vunpack.c.l.b16 %v1743
    %v1783 = vunpack.c.l.b16 %v1744
    %v1784 = vunpack.c.l.b16 %v1745
    %v1785 = vunpack.c.l.b16 %v1746
    %v1786 = vunpack.c.l.b16 %v1747
    %v1787 = vpack.c.b16 %v1772, %v1771
    %v1788 = vpack.c.b16 %v1774, %v1773
    %v1789 = vpack.c.b16 %v1776, %v1775
    %v1790 = vpack.c.b16 %v1778, %v1777
    %v1791 = vpack.c.b16 %v1780, %v1779
    %v1792 = vpack.c.b16 %v1782, %v1781
    %v1793 = vpack.c.b16 %v1784, %v1783
    %v1794 = vpack.c.b16 %v1786, %v1785
    %1803 = vmatprep.subr.bf16.mxu0 0
    %1804 = vmatpush1.bf16.msra.mxu0 %v1794
    %1805 = vmatprep.subr.bf16.mxu0 0
    %1806 = vmatpush1.bf16.msra.mxu0 %v1793
    %1807 = vmatprep.subr.bf16.mxu0 0
    %1808 = vmatpush1.bf16.msra.mxu0 %v1792
    %1809 = vmatprep.subr.bf16.mxu0 0
    %1810 = vmatpush1.bf16.msra.mxu0 %v1791
    %1811 = vmatprep.subr.bf16.mxu0 0
    %1812 = vmatpush1.bf16.msra.mxu0 %v1790
    %1813 = vmatprep.subr.bf16.mxu0 0
    %1814 = vmatpush1.bf16.msra.mxu0 %v1789
    %1815 = vmatprep.subr.bf16.mxu0 0
    %1816 = vmatpush1.bf16.msra.mxu0 %v1788
    %1817 = vmatprep.subr.bf16.mxu0 0
    %1818 = vmatpush1.bf16.msra.mxu0 %v1787
    %1819 = vmatprep.subr.bf16.mxu0 0
    %1820 = vmatpush2.bf16.msra.mxu0 0
    %1821 = vmatprep.subr.bf16.mxu0 0
    %1822 = vmatpush2.bf16.msra.mxu0 0
    %1823 = vmatprep.subr.bf16.mxu0 0
    %1824 = vmatpush2.bf16.msra.mxu0 0
    %1825 = vmatprep.subr.bf16.mxu0 0
    %1826 = vmatpush2.bf16.msra.mxu0 0
    %1827 = vmatprep.subr.bf16.mxu0 0
    %1828 = vmatpush2.bf16.msra.mxu0 0
    %1829 = vmatprep.subr.bf16.mxu0 0
    %1830 = vmatpush2.bf16.msra.mxu0 0
    %1831 = vmatprep.subr.bf16.mxu0 0
    %1832 = vmatpush2.bf16.msra.mxu0 0
    %1833 = vmatprep.subr.bf16.mxu0 0
    %1834 = vmatpush2.bf16.msra.mxu0 0
    %1835 = vmatprep.mubr.bf16.mxu0 0
    %1836 = vmatmul.mubr.bf16.gmra.mxu0 %v1731
    %v1837 = vpop.f32.mrf.mxu0
    %v1838 = vadd.f32 %v1753, %v1837
    %v1839 = vpop.f32.mrf.mxu0
    %v1840 = vpop.f32.mrf.mxu0
    %v1841 = vadd.f32 %v1753, %v1840
    %v1842 = vpop.f32.mrf.mxu0
    %1843 = vdwg.mxu0
    %v1844 = vadd.f32 %v547, %v1838
    %v1845 = vadd.f32 %v550, %v1841
    %v1846 = vld [vmem:[%s7] sm:$0x1]
    %v1847 = vld [vmem:[#allocation8] sm:$0x1]
    %1848 = vadd.xlane.f32.xlu0 %v1844
    %v1849 = vpop.xlane.xlu0 %1848
    %1850 = vadd.xlane.f32.xlu0 %v1845
    %v1851 = vpop.xlane.xlu0 %1850
    %v1852 = vrcp.pop 128.0
    %v1853 = vmul.f32 %v1849, %v1852
    %v1854 = vmul.f32 %v1851, %v1852
    %v1855 = vsub.f32 %v1844, %v1853
    %v1856 = vsub.f32 %v1845, %v1854
    %v1857 = vmul.f32 %v1855, %v1855
    %v1858 = vmul.f32 %v1856, %v1856
    %1859 = vadd.xlane.f32.xlu0 %v1857
    %v1860 = vpop.xlane.xlu0 %1859
    %1861 = vadd.xlane.f32.xlu0 %v1858
    %v1862 = vpop.xlane.xlu0 %1861
    %v1863 = vmul.f32 %v1860, %v1852
    %v1864 = vmul.f32 %v1862, %v1852
    %v1865 = vadd.f32 %v1863, 1e-05
    %v1866 = vadd.f32 %v1864, 1e-05
    %v1867 = vrsqrt.pop %v1865
    %v1868 = vrsqrt.pop %v1866
    %v1869 = vmul.f32 %v1855, %v1867
    %v1870 = vmul.f32 %v1856, %v1868
    %v1872 = vlaneseq
    %v1873 = vshrl.u32 %v1872, 7
    %v1874 = vsub.s32 0, %v1873
    %v1875 = vrot.slane %v1846, %v1874
    %v1877 = vmul.f32 %v1869, %v1875
    %v1878 = vmul.f32 %v1870, %v1875
    %v1880 = vlaneseq
    %v1881 = vshrl.u32 %v1880, 7
    %v1882 = vsub.s32 0, %v1881
    %v1883 = vrot.slane %v1847, %v1882
    %v1885 = vadd.f32 %v1877, %v1883
    %v1886 = vadd.f32 %v1878, %v1883
    %v1887 = vpack.c.bf16 %v1886, %v1885
    %v1888 = vld [vmem:[#allocation10] sm:$0xff]
    %v1889 = vld [vmem:[#allocation10 + $0x8] sm:$0xff]
    %v1890 = vld [vmem:[#allocation10 + $0x10] sm:$0xff]
    %v1891 = vld [vmem:[#allocation10 + $0x18] sm:$0xff]
    %v1892 = vld [vmem:[#allocation10 + $0x20] sm:$0xff]
    %v1893 = vld [vmem:[#allocation10 + $0x28] sm:$0xff]
    %v1894 = vld [vmem:[#allocation10 + $0x30] sm:$0xff]
    %v1895 = vld [vmem:[#allocation10 + $0x38] sm:$0xff]
    %v1896 = vld [vmem:[#allocation10 + $0x40] sm:$0xff]
    %v1897 = vld [vmem:[#allocation10 + $0x48] sm:$0xff]
    %v1898 = vld [vmem:[#allocation10 + $0x50] sm:$0xff]
    %v1899 = vld [vmem:[#allocation10 + $0x58] sm:$0xff]
    %v1900 = vld [vmem:[#allocation10 + $0x60] sm:$0xff]
    %v1901 = vld [vmem:[#allocation10 + $0x68] sm:$0xff]
    %v1902 = vld [vmem:[#allocation10 + $0x70] sm:$0xff]
    %v1903 = vld [vmem:[#allocation10 + $0x78] sm:$0xff]
    %v1904 = vld [vmem:[%s10] sm:$0x3]
    %v1906 = vlaneseq
    %v1907 = vshrl.u32 %v1906, 7
    %v1908 = vsub.s32 0, %v1907
    %v1909 = vrot.slane %v1904, %v1908
    %v1910 = vlaneseq
    %v1911 = vshrl.u32 %v1910, 7
    %v1912 = vsub.s32 1, %v1911
    %v1913 = vrot.slane %v1904, %v1912
    %v1932 = vunpack.c.l.b16 %v1888
    %v1933 = vunpack.c.h.b16 %v1888
    %v1934 = vunpack.c.l.b16 %v1889
    %v1935 = vunpack.c.h.b16 %v1889
    %v1936 = vunpack.c.l.b16 %v1890
    %v1937 = vunpack.c.h.b16 %v1890
    %v1938 = vunpack.c.l.b16 %v1891
    %v1939 = vunpack.c.h.b16 %v1891
    %v1940 = vunpack.c.l.b16 %v1892
    %v1941 = vunpack.c.h.b16 %v1892
    %v1942 = vunpack.c.l.b16 %v1893
    %v1943 = vunpack.c.h.b16 %v1893
    %v1944 = vunpack.c.l.b16 %v1894
    %v1945 = vunpack.c.h.b16 %v1894
    %v1946 = vunpack.c.l.b16 %v1895
    %v1947 = vunpack.c.h.b16 %v1895
    %v1948 = vunpack.c.l.b16 %v1896
    %v1949 = vunpack.c.h.b16 %v1896
    %v1950 = vunpack.c.l.b16 %v1897
    %v1951 = vunpack.c.h.b16 %v1897
    %v1952 = vunpack.c.l.b16 %v1898
    %v1953 = vunpack.c.h.b16 %v1898
    %v1954 = vunpack.c.l.b16 %v1899
    %v1955 = vunpack.c.h.b16 %v1899
    %v1956 = vunpack.c.l.b16 %v1900
    %v1957 = vunpack.c.h.b16 %v1900
    %v1958 = vunpack.c.l.b16 %v1901
    %v1959 = vunpack.c.h.b16 %v1901
    %v1960 = vunpack.c.l.b16 %v1902
    %v1961 = vunpack.c.h.b16 %v1902
    %v1962 = vunpack.c.l.b16 %v1903
    %v1963 = vunpack.c.h.b16 %v1903
    %v1964 = vpack.c.b16 %v1934, %v1932
    %v1965 = vpack.c.b16 %v1935, %v1933
    %v1966 = vpack.c.b16 %v1938, %v1936
    %v1967 = vpack.c.b16 %v1939, %v1937
    %v1968 = vpack.c.b16 %v1942, %v1940
    %v1969 = vpack.c.b16 %v1943, %v1941
    %v1970 = vpack.c.b16 %v1946, %v1944
    %v1971 = vpack.c.b16 %v1947, %v1945
    %v1972 = vpack.c.b16 %v1950, %v1948
    %v1973 = vpack.c.b16 %v1951, %v1949
    %v1974 = vpack.c.b16 %v1954, %v1952
    %v1975 = vpack.c.b16 %v1955, %v1953
    %v1976 = vpack.c.b16 %v1958, %v1956
    %v1977 = vpack.c.b16 %v1959, %v1957
    %v1978 = vpack.c.b16 %v1962, %v1960
    %v1979 = vpack.c.b16 %v1963, %v1961
    %1996 = vmatprep.subr.bf16.mxu0 %v1979
    %1997 = vmatpush1.bf16.msra.mxu0 %v1978
    %1998 = vmatprep.subr.bf16.mxu0 %v1977
    %1999 = vmatpush1.bf16.msra.mxu0 %v1976
    %2000 = vmatprep.subr.bf16.mxu0 %v1975
    %2001 = vmatpush1.bf16.msra.mxu0 %v1974
    %2002 = vmatprep.subr.bf16.mxu0 %v1973
    %2003 = vmatpush1.bf16.msra.mxu0 %v1972
    %2004 = vmatprep.subr.bf16.mxu0 %v1971
    %2005 = vmatpush1.bf16.msra.mxu0 %v1970
    %2006 = vmatprep.subr.bf16.mxu0 %v1969
    %2007 = vmatpush1.bf16.msra.mxu0 %v1968
    %2008 = vmatprep.subr.bf16.mxu0 %v1967
    %2009 = vmatpush1.bf16.msra.mxu0 %v1966
    %2010 = vmatprep.subr.bf16.mxu0 %v1965
    %2011 = vmatpush1.bf16.msra.mxu0 %v1964
    %2012 = vmatprep.subr.bf16.mxu0 0
    %2013 = vmatpush2.bf16.msra.mxu0 0
    %2014 = vmatprep.subr.bf16.mxu0 0
    %2015 = vmatpush2.bf16.msra.mxu0 0
    %2016 = vmatprep.subr.bf16.mxu0 0
    %2017 = vmatpush2.bf16.msra.mxu0 0
    %2018 = vmatprep.subr.bf16.mxu0 0
    %2019 = vmatpush2.bf16.msra.mxu0 0
    %2020 = vmatprep.subr.bf16.mxu0 0
    %2021 = vmatpush2.bf16.msra.mxu0 0
    %2022 = vmatprep.subr.bf16.mxu0 0
    %2023 = vmatpush2.bf16.msra.mxu0 0
    %2024 = vmatprep.subr.bf16.mxu0 0
    %2025 = vmatpush2.bf16.msra.mxu0 0
    %2026 = vmatprep.subr.bf16.mxu0 0
    %2027 = vmatpush2.bf16.msra.mxu0 0
    %2028 = vmatprep.mubr.bf16.mxu0 0
    %2029 = vmatmul.mubr.bf16.gmra.mxu0 %v1887
    %v2030 = vpop.f32.mrf.mxu0
    %v2031 = vadd.f32 %v1909, %v2030
    %v2032 = vpop.f32.mrf.mxu0
    %v2033 = vadd.f32 %v1913, %v2032
    %v2034 = vpop.f32.mrf.mxu0
    %v2035 = vadd.f32 %v1909, %v2034
    %v2036 = vpop.f32.mrf.mxu0
    %v2037 = vadd.f32 %v1913, %v2036
    %2038 = vdwg.mxu0
    %v2039 = vmax.f32 %v2031, 0.0
    %v2040 = vmax.f32 %v2033, 0.0
    %v2041 = vmax.f32 %v2035, 0.0
    %v2042 = vmax.f32 %v2037, 0.0
    %v2043 = vpack.c.bf16 %v2041, %v2039
    %v2044 = vpack.c.bf16 %v2042, %v2040
    %v2045 = vld [vmem:[#allocation11] sm:$0xf]
    %v2046 = vld [vmem:[#allocation11 + $0x4] sm:$0xf]
    %v2047 = vld [vmem:[#allocation11 + $0x8] sm:$0xf]
    %v2048 = vld [vmem:[#allocation11 + $0xc] sm:$0xf]
    %v2049 = vld [vmem:[#allocation11 + $0x10] sm:$0xf]
    %v2050 = vld [vmem:[#allocation11 + $0x14] sm:$0xf]
    %v2051 = vld [vmem:[#allocation11 + $0x18] sm:$0xf]
    %v2052 = vld [vmem:[#allocation11 + $0x1c] sm:$0xf]
    %v2053 = vld [vmem:[#allocation11 + $0x20] sm:$0xf]
    %v2054 = vld [vmem:[#allocation11 + $0x24] sm:$0xf]
    %v2055 = vld [vmem:[#allocation11 + $0x28] sm:$0xf]
    %v2056 = vld [vmem:[#allocation11 + $0x2c] sm:$0xf]
    %v2057 = vld [vmem:[#allocation11 + $0x30] sm:$0xf]
    %v2058 = vld [vmem:[#allocation11 + $0x34] sm:$0xf]
    %v2059 = vld [vmem:[#allocation11 + $0x38] sm:$0xf]
    %v2060 = vld [vmem:[#allocation11 + $0x3c] sm:$0xf]
    %v2061 = vld [vmem:[#allocation11 + $0x40] sm:$0xf]
    %v2062 = vld [vmem:[#allocation11 + $0x44] sm:$0xf]
    %v2063 = vld [vmem:[#allocation11 + $0x48] sm:$0xf]
    %v2064 = vld [vmem:[#allocation11 + $0x4c] sm:$0xf]
    %v2065 = vld [vmem:[#allocation11 + $0x50] sm:$0xf]
    %v2066 = vld [vmem:[#allocation11 + $0x54] sm:$0xf]
    %v2067 = vld [vmem:[#allocation11 + $0x58] sm:$0xf]
    %v2068 = vld [vmem:[#allocation11 + $0x5c] sm:$0xf]
    %v2069 = vld [vmem:[#allocation11 + $0x60] sm:$0xf]
    %v2070 = vld [vmem:[#allocation11 + $0x64] sm:$0xf]
    %v2071 = vld [vmem:[#allocation11 + $0x68] sm:$0xf]
    %v2072 = vld [vmem:[#allocation11 + $0x6c] sm:$0xf]
    %v2073 = vld [vmem:[#allocation11 + $0x70] sm:$0xf]
    %v2074 = vld [vmem:[#allocation11 + $0x74] sm:$0xf]
    %v2075 = vld [vmem:[#allocation11 + $0x78] sm:$0xf]
    %v2076 = vld [vmem:[#allocation11 + $0x7c] sm:$0xf]
    %v2077 = vld [vmem:[#allocation13] sm:$0x1]
    %v2079 = vlaneseq
    %v2080 = vshrl.u32 %v2079, 7
    %v2081 = vsub.s32 0, %v2080
    %v2082 = vrot.slane %v2077, %v2081
    %v2116 = vunpack.c.l.b16 %v2045
    %v2117 = vunpack.c.l.b16 %v2046
    %v2118 = vunpack.c.l.b16 %v2047
    %v2119 = vunpack.c.l.b16 %v2048
    %v2120 = vunpack.c.l.b16 %v2049
    %v2121 = vunpack.c.l.b16 %v2050
    %v2122 = vunpack.c.l.b16 %v2051
    %v2123 = vunpack.c.l.b16 %v2052
    %v2124 = vunpack.c.l.b16 %v2053
    %v2125 = vunpack.c.l.b16 %v2054
    %v2126 = vunpack.c.l.b16 %v2055
    %v2127 = vunpack.c.l.b16 %v2056
    %v2128 = vunpack.c.l.b16 %v2057
    %v2129 = vunpack.c.l.b16 %v2058
    %v2130 = vunpack.c.l.b16 %v2059
    %v2131 = vunpack.c.l.b16 %v2060
    %v2132 = vunpack.c.l.b16 %v2061
    %v2133 = vunpack.c.l.b16 %v2062
    %v2134 = vunpack.c.l.b16 %v2063
    %v2135 = vunpack.c.l.b16 %v2064
    %v2136 = vunpack.c.l.b16 %v2065
    %v2137 = vunpack.c.l.b16 %v2066
    %v2138 = vunpack.c.l.b16 %v2067
    %v2139 = vunpack.c.l.b16 %v2068
    %v2140 = vunpack.c.l.b16 %v2069
    %v2141 = vunpack.c.l.b16 %v2070
    %v2142 = vunpack.c.l.b16 %v2071
    %v2143 = vunpack.c.l.b16 %v2072
    %v2144 = vunpack.c.l.b16 %v2073
    %v2145 = vunpack.c.l.b16 %v2074
    %v2146 = vunpack.c.l.b16 %v2075
    %v2147 = vunpack.c.l.b16 %v2076
    %v2148 = vpack.c.b16 %v2117, %v2116
    %v2149 = vpack.c.b16 %v2119, %v2118
    %v2150 = vpack.c.b16 %v2121, %v2120
    %v2151 = vpack.c.b16 %v2123, %v2122
    %v2152 = vpack.c.b16 %v2125, %v2124
    %v2153 = vpack.c.b16 %v2127, %v2126
    %v2154 = vpack.c.b16 %v2129, %v2128
    %v2155 = vpack.c.b16 %v2131, %v2130
    %v2156 = vpack.c.b16 %v2133, %v2132
    %v2157 = vpack.c.b16 %v2135, %v2134
    %v2158 = vpack.c.b16 %v2137, %v2136
    %v2159 = vpack.c.b16 %v2139, %v2138
    %v2160 = vpack.c.b16 %v2141, %v2140
    %v2161 = vpack.c.b16 %v2143, %v2142
    %v2162 = vpack.c.b16 %v2145, %v2144
    %v2163 = vpack.c.b16 %v2147, %v2146
    %2180 = vmatprep.subr.bf16.mxu0 0
    %2181 = vmatpush1.bf16.msra.mxu0 %v2155
    %2182 = vmatprep.subr.bf16.mxu0 0
    %2183 = vmatpush1.bf16.msra.mxu0 %v2154
    %2184 = vmatprep.subr.bf16.mxu0 0
    %2185 = vmatpush1.bf16.msra.mxu0 %v2153
    %2186 = vmatprep.subr.bf16.mxu0 0
    %2187 = vmatpush1.bf16.msra.mxu0 %v2152
    %2188 = vmatprep.subr.bf16.mxu0 0
    %2189 = vmatpush1.bf16.msra.mxu0 %v2151
    %2190 = vmatprep.subr.bf16.mxu0 0
    %2191 = vmatpush1.bf16.msra.mxu0 %v2150
    %2192 = vmatprep.subr.bf16.mxu0 0
    %2193 = vmatpush1.bf16.msra.mxu0 %v2149
    %2194 = vmatprep.subr.bf16.mxu0 0
    %2195 = vmatpush1.bf16.msra.mxu0 %v2148
    %2196 = vmatprep.subr.bf16.mxu0 0
    %2197 = vmatpush2.bf16.msra.mxu0 %v2163
    %2198 = vmatprep.subr.bf16.mxu0 0
    %2199 = vmatpush2.bf16.msra.mxu0 %v2162
    %2200 = vmatprep.subr.bf16.mxu0 0
    %2201 = vmatpush2.bf16.msra.mxu0 %v2161
    %2202 = vmatprep.subr.bf16.mxu0 0
    %2203 = vmatpush2.bf16.msra.mxu0 %v2160
    %2204 = vmatprep.subr.bf16.mxu0 0
    %2205 = vmatpush2.bf16.msra.mxu0 %v2159
    %2206 = vmatprep.subr.bf16.mxu0 0
    %2207 = vmatpush2.bf16.msra.mxu0 %v2158
    %2208 = vmatprep.subr.bf16.mxu0 0
    %2209 = vmatpush2.bf16.msra.mxu0 %v2157
    %2210 = vmatprep.subr.bf16.mxu0 0
    %2211 = vmatpush2.bf16.msra.mxu0 %v2156
    %2212 = vmatprep.mubr.bf16.mxu0 %v2044
    %2213 = vmatmul.mubr.bf16.gmra.mxu0 %v2043
    %v2214 = vpop.f32.mrf.mxu0
    %v2215 = vadd.f32 %v2082, %v2214
    %v2216 = vpop.f32.mrf.mxu0
    %v2217 = vpop.f32.mrf.mxu0
    %v2218 = vadd.f32 %v2082, %v2217
    %v2219 = vpop.f32.mrf.mxu0
    %2220 = vdwg.mxu0
    %v2221 = vadd.f32 %v1885, %v2215
    %v2222 = vadd.f32 %v1886, %v2218
    %v2223 = vld [vmem:[%s13] sm:$0x1]
    %v2224 = vld [vmem:[#allocation14] sm:$0x1]
    %2225 = vadd.xlane.f32.xlu0 %v2221
    %v2226 = vpop.xlane.xlu0 %2225
    %2227 = vadd.xlane.f32.xlu0 %v2222
    %v2228 = vpop.xlane.xlu0 %2227
    %v2229 = vmul.f32 %v2226, %v1852
    %v2230 = vmul.f32 %v2228, %v1852
    %v2231 = vsub.f32 %v2221, %v2229
    %v2232 = vsub.f32 %v2222, %v2230
    %v2233 = vmul.f32 %v2231, %v2231
    %v2234 = vmul.f32 %v2232, %v2232
    %2235 = vadd.xlane.f32.xlu0 %v2233
    %v2236 = vpop.xlane.xlu0 %2235
    %2237 = vadd.xlane.f32.xlu0 %v2234
    %v2238 = vpop.xlane.xlu0 %2237
    %v2239 = vmul.f32 %v2236, %v1852
    %v2240 = vmul.f32 %v2238, %v1852
    %v2241 = vadd.f32 %v2239, 1e-05
    %v2242 = vadd.f32 %v2240, 1e-05
    %v2243 = vrsqrt.pop %v2241
    %v2244 = vrsqrt.pop %v2242
    %v2245 = vmul.f32 %v2231, %v2243
    %v2246 = vmul.f32 %v2232, %v2244
    %v2248 = vlaneseq
    %v2249 = vshrl.u32 %v2248, 7
    %v2250 = vsub.s32 0, %v2249
    %v2251 = vrot.slane %v2223, %v2250
    %v2253 = vmul.f32 %v2245, %v2251
    %v2254 = vmul.f32 %v2246, %v2251
    %v2256 = vlaneseq
    %v2257 = vshrl.u32 %v2256, 7
    %v2258 = vsub.s32 0, %v2257
    %v2259 = vrot.slane %v2224, %v2258
    %v2261 = vadd.f32 %v2253, %v2259
    %v2262 = vadd.f32 %v2254, %v2259
    %v2263 = vpack.c.bf16 %v2262, %v2261
    %s2264 = scalar_lea.vmem [#allocation5], 192
    %v2265 = vld [vmem:[%s2264] sm:$0xff]
    %v2266 = vld [vmem:[%s2264 + $0x8] sm:$0xf]
    %v2267 = vld [vmem:[%s2264 + $0xc] sm:$0xff]
    %v2268 = vld [vmem:[%s2264 + $0x14] sm:$0xf]
    %v2269 = vld [vmem:[%s2264 + $0x18] sm:$0xff]
    %v2270 = vld [vmem:[%s2264 + $0x20] sm:$0xf]
    %v2271 = vld [vmem:[%s2264 + $0x24] sm:$0xff]
    %v2272 = vld [vmem:[%s2264 + $0x2c] sm:$0xf]
    %v2273 = vld [vmem:[%s2264 + $0x30] sm:$0xff]
    %v2274 = vld [vmem:[%s2264 + $0x38] sm:$0xf]
    %v2275 = vld [vmem:[%s2264 + $0x3c] sm:$0xff]
    %v2276 = vld [vmem:[%s2264 + $0x44] sm:$0xf]
    %v2277 = vld [vmem:[%s2264 + $0x48] sm:$0xff]
    %v2278 = vld [vmem:[%s2264 + $0x50] sm:$0xf]
    %v2279 = vld [vmem:[%s2264 + $0x54] sm:$0xff]
    %v2280 = vld [vmem:[%s2264 + $0x5c] sm:$0xf]
    %v2281 = vld [vmem:[%s2264 + $0x60] sm:$0xff]
    %v2282 = vld [vmem:[%s2264 + $0x68] sm:$0xf]
    %v2283 = vld [vmem:[%s2264 + $0x6c] sm:$0xff]
    %v2284 = vld [vmem:[%s2264 + $0x74] sm:$0xf]
    %v2285 = vld [vmem:[%s2264 + $0x78] sm:$0xff]
    %v2286 = vld [vmem:[%s2264 + $0x80] sm:$0xf]
    %v2287 = vld [vmem:[%s2264 + $0x84] sm:$0xff]
    %v2288 = vld [vmem:[%s2264 + $0x8c] sm:$0xf]
    %v2289 = vld [vmem:[%s2264 + $0x90] sm:$0xff]
    %v2290 = vld [vmem:[%s2264 + $0x98] sm:$0xf]
    %v2291 = vld [vmem:[%s2264 + $0x9c] sm:$0xff]
    %v2292 = vld [vmem:[%s2264 + $0xa4] sm:$0xf]
    %v2293 = vld [vmem:[%s2264 + $0xa8] sm:$0xff]
    %v2294 = vld [vmem:[%s2264 + $0xb0] sm:$0xf]
    %v2295 = vld [vmem:[%s2264 + $0xb4] sm:$0xff]
    %v2296 = vld [vmem:[%s2264 + $0xbc] sm:$0xf]
    %s2297 = scalar_lea.vmem %s4, 3
    %v2298 = vld [vmem:[%s2297] sm:$0x7]
    %v2300 = vlaneseq
    %v2301 = vshrl.u32 %v2300, 7
    %v2302 = vsub.s32 0, %v2301
    %v2303 = vrot.slane %v2298, %v2302
    %v2304 = vlaneseq
    %v2305 = vshrl.u32 %v2304, 7
    %v2306 = vsub.s32 1, %v2305
    %v2307 = vrot.slane %v2298, %v2306
    %v2308 = vlaneseq
    %v2309 = vshrl.u32 %v2308, 7
    %v2310 = vsub.s32 2, %v2309
    %v2311 = vrot.slane %v2298, %v2310
    %v2347 = vunpack.c.l.b16 %v2265
    %v2348 = vunpack.c.h.b16 %v2265
    %v2349 = vunpack.c.l.b16 %v2266
    %v2350 = vunpack.c.l.b16 %v2267
    %v2351 = vunpack.c.h.b16 %v2267
    %v2352 = vunpack.c.l.b16 %v2268
    %v2353 = vunpack.c.l.b16 %v2269
    %v2354 = vunpack.c.h.b16 %v2269
    %v2355 = vunpack.c.l.b16 %v2270
    %v2356 = vunpack.c.l.b16 %v2271
    %v2357 = vunpack.c.h.b16 %v2271
    %v2358 = vunpack.c.l.b16 %v2272
    %v2359 = vunpack.c.l.b16 %v2273
    %v2360 = vunpack.c.h.b16 %v2273
    %v2361 = vunpack.c.l.b16 %v2274
    %v2362 = vunpack.c.l.b16 %v2275
    %v2363 = vunpack.c.h.b16 %v2275
    %v2364 = vunpack.c.l.b16 %v2276
    %v2365 = vunpack.c.l.b16 %v2277
    %v2366 = vunpack.c.h.b16 %v2277
    %v2367 = vunpack.c.l.b16 %v2278
    %v2368 = vunpack.c.l.b16 %v2279
    %v2369 = vunpack.c.h.b16 %v2279
    %v2370 = vunpack.c.l.b16 %v2280
    %v2371 = vunpack.c.l.b16 %v2281
    %v2372 = vunpack.c.h.b16 %v2281
    %v2373 = vunpack.c.l.b16 %v2282
    %v2374 = vunpack.c.l.b16 %v2283
    %v2375 = vunpack.c.h.b16 %v2283
    %v2376 = vunpack.c.l.b16 %v2284
    %v2377 = vunpack.c.l.b16 %v2285
    %v2378 = vunpack.c.h.b16 %v2285
    %v2379 = vunpack.c.l.b16 %v2286
    %v2380 = vunpack.c.l.b16 %v2287
    %v2381 = vunpack.c.h.b16 %v2287
    %v2382 = vunpack.c.l.b16 %v2288
    %v2383 = vunpack.c.l.b16 %v2289
    %v2384 = vunpack.c.h.b16 %v2289
    %v2385 = vunpack.c.l.b16 %v2290
    %v2386 = vunpack.c.l.b16 %v2291
    %v2387 = vunpack.c.h.b16 %v2291
    %v2388 = vunpack.c.l.b16 %v2292
    %v2389 = vunpack.c.l.b16 %v2293
    %v2390 = vunpack.c.h.b16 %v2293
    %v2391 = vunpack.c.l.b16 %v2294
    %v2392 = vunpack.c.l.b16 %v2295
    %v2393 = vunpack.c.h.b16 %v2295
    %v2394 = vunpack.c.l.b16 %v2296
    %v2395 = vpack.c.b16 %v2350, %v2347
    %v2396 = vpack.c.b16 %v2351, %v2348
    %v2397 = vpack.c.b16 %v2352, %v2349
    %v2398 = vpack.c.b16 %v2356, %v2353
    %v2399 = vpack.c.b16 %v2357, %v2354
    %v2400 = vpack.c.b16 %v2358, %v2355
    %v2401 = vpack.c.b16 %v2362, %v2359
    %v2402 = vpack.c.b16 %v2363, %v2360
    %v2403 = vpack.c.b16 %v2364, %v2361
    %v2404 = vpack.c.b16 %v2368, %v2365
    %v2405 = vpack.c.b16 %v2369, %v2366
    %v2406 = vpack.c.b16 %v2370, %v2367
    %v2407 = vpack.c.b16 %v2374, %v2371
    %v2408 = vpack.c.b16 %v2375, %v2372
    %v2409 = vpack.c.b16 %v2376, %v2373
    %v2410 = vpack.c.b16 %v2380, %v2377
    %v2411 = vpack.c.b16 %v2381, %v2378
    %v2412 = vpack.c.b16 %v2382, %v2379
    %v2413 = vpack.c.b16 %v2386, %v2383
    %v2414 = vpack.c.b16 %v2387, %v2384
    %v2415 = vpack.c.b16 %v2388, %v2385
    %v2416 = vpack.c.b16 %v2392, %v2389
    %v2417 = vpack.c.b16 %v2393, %v2390
    %v2418 = vpack.c.b16 %v2394, %v2391
    %2443 = vmatprep.subr.bf16.mxu0 %v2417
    %2444 = vmatpush1.bf16.msra.mxu0 %v2416
    %2445 = vmatprep.subr.bf16.mxu0 %v2414
    %2446 = vmatpush1.bf16.msra.mxu0 %v2413
    %2447 = vmatprep.subr.bf16.mxu0 %v2411
    %2448 = vmatpush1.bf16.msra.mxu0 %v2410
    %2449 = vmatprep.subr.bf16.mxu0 %v2408
    %2450 = vmatpush1.bf16.msra.mxu0 %v2407
    %2451 = vmatprep.subr.bf16.mxu0 %v2405
    %2452 = vmatpush1.bf16.msra.mxu0 %v2404
    %2453 = vmatprep.subr.bf16.mxu0 %v2402
    %2454 = vmatpush1.bf16.msra.mxu0 %v2401
    %2455 = vmatprep.subr.bf16.mxu0 %v2399
    %2456 = vmatpush1.bf16.msra.mxu0 %v2398
    %2457 = vmatprep.subr.bf16.mxu0 %v2396
    %2458 = vmatpush1.bf16.msra.mxu0 %v2395
    %2459 = vmatprep.subr.bf16.mxu0 0
    %2460 = vmatpush2.bf16.msra.mxu0 0
    %2461 = vmatprep.subr.bf16.mxu0 0
    %2462 = vmatpush2.bf16.msra.mxu0 0
    %2463 = vmatprep.subr.bf16.mxu0 0
    %2464 = vmatpush2.bf16.msra.mxu0 0
    %2465 = vmatprep.subr.bf16.mxu0 0
    %2466 = vmatpush2.bf16.msra.mxu0 0
    %2467 = vmatprep.subr.bf16.mxu0 0
    %2468 = vmatpush2.bf16.msra.mxu0 0
    %2469 = vmatprep.subr.bf16.mxu0 0
    %2470 = vmatpush2.bf16.msra.mxu0 0
    %2471 = vmatprep.subr.bf16.mxu0 0
    %2472 = vmatpush2.bf16.msra.mxu0 0
    %2473 = vmatprep.subr.bf16.mxu0 0
    %2474 = vmatpush2.bf16.msra.mxu0 0
    %2475 = vmatprep.mubr.bf16.mxu0 0
    %2476 = vmatmul.mubr.bf16.gmra.mxu0 %v2263
    %v2477 = vpop.f32.mrf.mxu0
    %v2478 = vadd.f32 %v2303, %v2477
    %v2479 = vpop.f32.mrf.mxu0
    %v2480 = vadd.f32 %v2307, %v2479
    %v2481 = vpop.f32.mrf.mxu0
    %v2482 = vadd.f32 %v2303, %v2481
    %v2483 = vpop.f32.mrf.mxu0
    %v2484 = vadd.f32 %v2307, %v2483
    %2485 = vdwg.mxu0
    %2486 = vmatprep.subr.bf16.mxu0 0
    %2487 = vmatpush1.bf16.msra.mxu0 %v2418
    %2488 = vmatprep.subr.bf16.mxu0 0
    %2489 = vmatpush1.bf16.msra.mxu0 %v2415
    %2490 = vmatprep.subr.bf16.mxu0 0
    %2491 = vmatpush1.bf16.msra.mxu0 %v2412
    %2492 = vmatprep.subr.bf16.mxu0 0
    %2493 = vmatpush1.bf16.msra.mxu0 %v2409
    %2494 = vmatprep.subr.bf16.mxu0 0
    %2495 = vmatpush1.bf16.msra.mxu0 %v2406
    %2496 = vmatprep.subr.bf16.mxu0 0
    %2497 = vmatpush1.bf16.msra.mxu0 %v2403
    %2498 = vmatprep.subr.bf16.mxu0 0
    %2499 = vmatpush1.bf16.msra.mxu0 %v2400
    %2500 = vmatprep.subr.bf16.mxu0 0
    %2501 = vmatpush1.bf16.msra.mxu0 %v2397
    %2502 = vmatprep.subr.bf16.mxu0 0
    %2503 = vmatpush2.bf16.msra.mxu0 0
    %2504 = vmatprep.subr.bf16.mxu0 0
    %2505 = vmatpush2.bf16.msra.mxu0 0
    %2506 = vmatprep.subr.bf16.mxu0 0
    %2507 = vmatpush2.bf16.msra.mxu0 0
    %2508 = vmatprep.subr.bf16.mxu0 0
    %2509 = vmatpush2.bf16.msra.mxu0 0
    %2510 = vmatprep.subr.bf16.mxu0 0
    %2511 = vmatpush2.bf16.msra.mxu0 0
    %2512 = vmatprep.subr.bf16.mxu0 0
    %2513 = vmatpush2.bf16.msra.mxu0 0
    %2514 = vmatprep.subr.bf16.mxu0 0
    %2515 = vmatpush2.bf16.msra.mxu0 0
    %2516 = vmatprep.subr.bf16.mxu0 0
    %2517 = vmatpush2.bf16.msra.mxu0 0
    %2518 = vmatprep.mubr.bf16.mxu0 0
    %2519 = vmatmul.mubr.bf16.gmra.mxu0 %v2263
    %v2520 = vpop.f32.mrf.mxu0
    %v2521 = vadd.f32 %v2311, %v2520
    %v2522 = vpop.f32.mrf.mxu0
    %v2523 = vpop.f32.mrf.mxu0
    %v2524 = vadd.f32 %v2311, %v2523
    %v2525 = vpop.f32.mrf.mxu0
    %2526 = vdwg.mxu0
    %v2527 = vpack.c.bf16 %v2482, %v2478
    %v2528 = vpack.c.bf16 %v2484, %v2480
    %v2529 = vpack.c.bf16 %v2524, %v2521
    %v2531 = vsel %vm818, %v2527, 0
    %v2534 = vsel %vm818, %v2528, 0
    %2536 = vmatprep.subr.bf16.mxu0 0
    %2537 = vmatpush1.bf16.xpose.msra.mxu0 0
    %2538 = vmatprep.subr.bf16.mxu0 0
    %2539 = vmatpush1.bf16.xpose.msra.mxu0 0
    %2540 = vmatprep.subr.bf16.mxu0 0
    %2541 = vmatpush1.bf16.xpose.msra.mxu0 0
    %2542 = vmatprep.subr.bf16.mxu0 0
    %2543 = vmatpush1.bf16.xpose.msra.mxu0 0
    %2544 = vmatprep.subr.bf16.mxu0 0
    %2545 = vmatpush1.bf16.xpose.msra.mxu0 0
    %2546 = vmatprep.subr.bf16.mxu0 0
    %2547 = vmatpush1.bf16.xpose.msra.mxu0 0
    %2548 = vmatprep.subr.bf16.mxu0 0
    %2549 = vmatpush1.bf16.xpose.msra.mxu0 0
    %2550 = vmatprep.subr.bf16.mxu0 0
    %2551 = vmatpush1.bf16.xpose.msra.mxu0 %v2534
    %2552 = vmatprep.subr.bf16.mxu0 0
    %2553 = vmatpush2.bf16.xpose.msra.mxu0 0
    %2554 = vmatprep.subr.bf16.mxu0 0
    %2555 = vmatpush2.bf16.xpose.msra.mxu0 0
    %2556 = vmatprep.subr.bf16.mxu0 0
    %2557 = vmatpush2.bf16.xpose.msra.mxu0 0
    %2558 = vmatprep.subr.bf16.mxu0 0
    %2559 = vmatpush2.bf16.xpose.msra.mxu0 0
    %2560 = vmatprep.subr.bf16.mxu0 0
    %2561 = vmatpush2.bf16.xpose.msra.mxu0 0
    %2562 = vmatprep.subr.bf16.mxu0 0
    %2563 = vmatpush2.bf16.xpose.msra.mxu0 0
    %2564 = vmatprep.subr.bf16.mxu0 0
    %2565 = vmatpush2.bf16.xpose.msra.mxu0 0
    %2566 = vmatprep.subr.bf16.mxu0 0
    %2567 = vmatpush2.bf16.xpose.msra.mxu0 0
    %2568 = vmatprep.mubr.bf16.mxu0 0
    %2569 = vmatmul.mubr.bf16.gmra.mxu0 %v2531
    %v2570 = vpop.f32.mrf.mxu0
    %v2571 = vadd.f32 0.0, %v2570
    %v2572 = vpop.f32.mrf.mxu0
    %v2573 = vpop.f32.mrf.mxu0
    %v2574 = vpop.f32.mrf.mxu0
    %2575 = vdwg.mxu0
    %2577 = vrot.lane.b32.xlu0 %v2527, 96
    %v2578 = vpop.permute.xlu0 %2577
    %2580 = vrot.lane.b32.xlu0 %v2528, 96
    %v2581 = vpop.permute.xlu0 %2580
    %v2583 = vsel %vm818, %v2578, 0
    %v2586 = vsel %vm818, %v2581, 0
    %2588 = vmatprep.subr.bf16.mxu0 0
    %2589 = vmatpush1.bf16.xpose.msra.mxu0 0
    %2590 = vmatprep.subr.bf16.mxu0 0
    %2591 = vmatpush1.bf16.xpose.msra.mxu0 0
    %2592 = vmatprep.subr.bf16.mxu0 0
    %2593 = vmatpush1.bf16.xpose.msra.mxu0 0
    %2594 = vmatprep.subr.bf16.mxu0 0
    %2595 = vmatpush1.bf16.xpose.msra.mxu0 0
    %2596 = vmatprep.subr.bf16.mxu0 0
    %2597 = vmatpush1.bf16.xpose.msra.mxu0 0
    %2598 = vmatprep.subr.bf16.mxu0 0
    %2599 = vmatpush1.bf16.xpose.msra.mxu0 0
    %2600 = vmatprep.subr.bf16.mxu0 0
    %2601 = vmatpush1.bf16.xpose.msra.mxu0 0
    %2602 = vmatprep.subr.bf16.mxu0 0
    %2603 = vmatpush1.bf16.xpose.msra.mxu0 %v2586
    %2604 = vmatprep.subr.bf16.mxu0 0
    %2605 = vmatpush2.bf16.xpose.msra.mxu0 0
    %2606 = vmatprep.subr.bf16.mxu0 0
    %2607 = vmatpush2.bf16.xpose.msra.mxu0 0
    %2608 = vmatprep.subr.bf16.mxu0 0
    %2609 = vmatpush2.bf16.xpose.msra.mxu0 0
    %2610 = vmatprep.subr.bf16.mxu0 0
    %2611 = vmatpush2.bf16.xpose.msra.mxu0 0
    %2612 = vmatprep.subr.bf16.mxu0 0
    %2613 = vmatpush2.bf16.xpose.msra.mxu0 0
    %2614 = vmatprep.subr.bf16.mxu0 0
    %2615 = vmatpush2.bf16.xpose.msra.mxu0 0
    %2616 = vmatprep.subr.bf16.mxu0 0
    %2617 = vmatpush2.bf16.xpose.msra.mxu0 0
    %2618 = vmatprep.subr.bf16.mxu0 0
    %2619 = vmatpush2.bf16.xpose.msra.mxu0 0
    %2620 = vmatprep.mubr.bf16.mxu0 0
    %2621 = vmatmul.mubr.bf16.gmra.mxu0 %v2583
    %v2622 = vpop.f32.mrf.mxu0
    %v2623 = vadd.f32 0.0, %v2622
    %v2624 = vpop.f32.mrf.mxu0
    %v2625 = vpop.f32.mrf.mxu0
    %v2626 = vpop.f32.mrf.mxu0
    %2627 = vdwg.mxu0
    %2628 = vrot.lane.b32.xlu0 %v2527, 64
    %v2629 = vpop.permute.xlu0 %2628
    %2630 = vrot.lane.b32.xlu0 %v2528, 64
    %v2631 = vpop.permute.xlu0 %2630
    %v2633 = vsel %vm818, %v2629, 0
    %v2636 = vsel %vm818, %v2631, 0
    %2638 = vmatprep.subr.bf16.mxu0 0
    %2639 = vmatpush1.bf16.xpose.msra.mxu0 0
    %2640 = vmatprep.subr.bf16.mxu0 0
    %2641 = vmatpush1.bf16.xpose.msra.mxu0 0
    %2642 = vmatprep.subr.bf16.mxu0 0
    %2643 = vmatpush1.bf16.xpose.msra.mxu0 0
    %2644 = vmatprep.subr.bf16.mxu0 0
    %2645 = vmatpush1.bf16.xpose.msra.mxu0 0
    %2646 = vmatprep.subr.bf16.mxu0 0
    %2647 = vmatpush1.bf16.xpose.msra.mxu0 0
    %2648 = vmatprep.subr.bf16.mxu0 0
    %2649 = vmatpush1.bf16.xpose.msra.mxu0 0
    %2650 = vmatprep.subr.bf16.mxu0 0
    %2651 = vmatpush1.bf16.xpose.msra.mxu0 0
    %2652 = vmatprep.subr.bf16.mxu0 0
    %2653 = vmatpush1.bf16.xpose.msra.mxu0 %v2636
    %2654 = vmatprep.subr.bf16.mxu0 0
    %2655 = vmatpush2.bf16.xpose.msra.mxu0 0
    %2656 = vmatprep.subr.bf16.mxu0 0
    %2657 = vmatpush2.bf16.xpose.msra.mxu0 0
    %2658 = vmatprep.subr.bf16.mxu0 0
    %2659 = vmatpush2.bf16.xpose.msra.mxu0 0
    %2660 = vmatprep.subr.bf16.mxu0 0
    %2661 = vmatpush2.bf16.xpose.msra.mxu0 0
    %2662 = vmatprep.subr.bf16.mxu0 0
    %2663 = vmatpush2.bf16.xpose.msra.mxu0 0
    %2664 = vmatprep.subr.bf16.mxu0 0
    %2665 = vmatpush2.bf16.xpose.msra.mxu0 0
    %2666 = vmatprep.subr.bf16.mxu0 0
    %2667 = vmatpush2.bf16.xpose.msra.mxu0 0
    %2668 = vmatprep.subr.bf16.mxu0 0
    %2669 = vmatpush2.bf16.xpose.msra.mxu0 0
    %2670 = vmatprep.mubr.bf16.mxu0 0
    %2671 = vmatmul.mubr.bf16.gmra.mxu0 %v2633
    %v2672 = vpop.f32.mrf.mxu0
    %v2673 = vadd.f32 0.0, %v2672
    %v2674 = vpop.f32.mrf.mxu0
    %v2675 = vpop.f32.mrf.mxu0
    %v2676 = vpop.f32.mrf.mxu0
    %2677 = vdwg.mxu0
    %2678 = vrot.lane.b32.xlu0 %v2527, 32
    %v2679 = vpop.permute.xlu0 %2678
    %2680 = vrot.lane.b32.xlu0 %v2528, 32
    %v2681 = vpop.permute.xlu0 %2680
    %v2683 = vsel %vm818, %v2679, 0
    %v2686 = vsel %vm818, %v2681, 0
    %2688 = vmatprep.subr.bf16.mxu0 0
    %2689 = vmatpush1.bf16.xpose.msra.mxu0 0
    %2690 = vmatprep.subr.bf16.mxu0 0
    %2691 = vmatpush1.bf16.xpose.msra.mxu0 0
    %2692 = vmatprep.subr.bf16.mxu0 0
    %2693 = vmatpush1.bf16.xpose.msra.mxu0 0
    %2694 = vmatprep.subr.bf16.mxu0 0
    %2695 = vmatpush1.bf16.xpose.msra.mxu0 0
    %2696 = vmatprep.subr.bf16.mxu0 0
    %2697 = vmatpush1.bf16.xpose.msra.mxu0 0
    %2698 = vmatprep.subr.bf16.mxu0 0
    %2699 = vmatpush1.bf16.xpose.msra.mxu0 0
    %2700 = vmatprep.subr.bf16.mxu0 0
    %2701 = vmatpush1.bf16.xpose.msra.mxu0 0
    %2702 = vmatprep.subr.bf16.mxu0 0
    %2703 = vmatpush1.bf16.xpose.msra.mxu0 %v2686
    %2704 = vmatprep.subr.bf16.mxu0 0
    %2705 = vmatpush2.bf16.xpose.msra.mxu0 0
    %2706 = vmatprep.subr.bf16.mxu0 0
    %2707 = vmatpush2.bf16.xpose.msra.mxu0 0
    %2708 = vmatprep.subr.bf16.mxu0 0
    %2709 = vmatpush2.bf16.xpose.msra.mxu0 0
    %2710 = vmatprep.subr.bf16.mxu0 0
    %2711 = vmatpush2.bf16.xpose.msra.mxu0 0
    %2712 = vmatprep.subr.bf16.mxu0 0
    %2713 = vmatpush2.bf16.xpose.msra.mxu0 0
    %2714 = vmatprep.subr.bf16.mxu0 0
    %2715 = vmatpush2.bf16.xpose.msra.mxu0 0
    %2716 = vmatprep.subr.bf16.mxu0 0
    %2717 = vmatpush2.bf16.xpose.msra.mxu0 0
    %2718 = vmatprep.subr.bf16.mxu0 0
    %2719 = vmatpush2.bf16.xpose.msra.mxu0 0
    %2720 = vmatprep.mubr.bf16.mxu0 0
    %2721 = vmatmul.mubr.bf16.gmra.mxu0 %v2683
    %v2722 = vpop.f32.mrf.mxu0
    %v2723 = vadd.f32 0.0, %v2722
    %v2724 = vpop.f32.mrf.mxu0
    %v2725 = vpop.f32.mrf.mxu0
    %v2726 = vpop.f32.mrf.mxu0
    %2727 = vdwg.mxu0
    %v2728 = vrot.slane %v2527, 4
    %v2729 = vrot.slane %v2528, 4
    %v2731 = vsel %vm818, %v2728, 0
    %v2734 = vsel %vm818, %v2729, 0
    %2736 = vmatprep.subr.bf16.mxu0 0
    %2737 = vmatpush1.bf16.xpose.msra.mxu0 0
    %2738 = vmatprep.subr.bf16.mxu0 0
    %2739 = vmatpush1.bf16.xpose.msra.mxu0 0
    %2740 = vmatprep.subr.bf16.mxu0 0
    %2741 = vmatpush1.bf16.xpose.msra.mxu0 0
    %2742 = vmatprep.subr.bf16.mxu0 0
    %2743 = vmatpush1.bf16.xpose.msra.mxu0 0
    %2744 = vmatprep.subr.bf16.mxu0 0
    %2745 = vmatpush1.bf16.xpose.msra.mxu0 0
    %2746 = vmatprep.subr.bf16.mxu0 0
    %2747 = vmatpush1.bf16.xpose.msra.mxu0 0
    %2748 = vmatprep.subr.bf16.mxu0 0
    %2749 = vmatpush1.bf16.xpose.msra.mxu0 0
    %2750 = vmatprep.subr.bf16.mxu0 0
    %2751 = vmatpush1.bf16.xpose.msra.mxu0 %v2734
    %2752 = vmatprep.subr.bf16.mxu0 0
    %2753 = vmatpush2.bf16.xpose.msra.mxu0 0
    %2754 = vmatprep.subr.bf16.mxu0 0
    %2755 = vmatpush2.bf16.xpose.msra.mxu0 0
    %2756 = vmatprep.subr.bf16.mxu0 0
    %2757 = vmatpush2.bf16.xpose.msra.mxu0 0
    %2758 = vmatprep.subr.bf16.mxu0 0
    %2759 = vmatpush2.bf16.xpose.msra.mxu0 0
    %2760 = vmatprep.subr.bf16.mxu0 0
    %2761 = vmatpush2.bf16.xpose.msra.mxu0 0
    %2762 = vmatprep.subr.bf16.mxu0 0
    %2763 = vmatpush2.bf16.xpose.msra.mxu0 0
    %2764 = vmatprep.subr.bf16.mxu0 0
    %2765 = vmatpush2.bf16.xpose.msra.mxu0 0
    %2766 = vmatprep.subr.bf16.mxu0 0
    %2767 = vmatpush2.bf16.xpose.msra.mxu0 0
    %2768 = vmatprep.mubr.bf16.mxu0 0
    %2769 = vmatmul.mubr.bf16.gmra.mxu0 %v2731
    %v2770 = vpop.f32.mrf.mxu0
    %v2771 = vadd.f32 0.0, %v2770
    %v2772 = vpop.f32.mrf.mxu0
    %v2773 = vpop.f32.mrf.mxu0
    %v2774 = vpop.f32.mrf.mxu0
    %2775 = vdwg.mxu0
    %2776 = vrot.lane.b32.xlu0 %v2728, 96
    %v2777 = vpop.permute.xlu0 %2776
    %2778 = vrot.lane.b32.xlu0 %v2729, 96
    %v2779 = vpop.permute.xlu0 %2778
    %v2781 = vsel %vm818, %v2777, 0
    %v2784 = vsel %vm818, %v2779, 0
    %2786 = vmatprep.subr.bf16.mxu0 0
    %2787 = vmatpush1.bf16.xpose.msra.mxu0 0
    %2788 = vmatprep.subr.bf16.mxu0 0
    %2789 = vmatpush1.bf16.xpose.msra.mxu0 0
    %2790 = vmatprep.subr.bf16.mxu0 0
    %2791 = vmatpush1.bf16.xpose.msra.mxu0 0
    %2792 = vmatprep.subr.bf16.mxu0 0
    %2793 = vmatpush1.bf16.xpose.msra.mxu0 0
    %2794 = vmatprep.subr.bf16.mxu0 0
    %2795 = vmatpush1.bf16.xpose.msra.mxu0 0
    %2796 = vmatprep.subr.bf16.mxu0 0
    %2797 = vmatpush1.bf16.xpose.msra.mxu0 0
    %2798 = vmatprep.subr.bf16.mxu0 0
    %2799 = vmatpush1.bf16.xpose.msra.mxu0 0
    %2800 = vmatprep.subr.bf16.mxu0 0
    %2801 = vmatpush1.bf16.xpose.msra.mxu0 %v2784
    %2802 = vmatprep.subr.bf16.mxu0 0
    %2803 = vmatpush2.bf16.xpose.msra.mxu0 0
    %2804 = vmatprep.subr.bf16.mxu0 0
    %2805 = vmatpush2.bf16.xpose.msra.mxu0 0
    %2806 = vmatprep.subr.bf16.mxu0 0
    %2807 = vmatpush2.bf16.xpose.msra.mxu0 0
    %2808 = vmatprep.subr.bf16.mxu0 0
    %2809 = vmatpush2.bf16.xpose.msra.mxu0 0
    %2810 = vmatprep.subr.bf16.mxu0 0
    %2811 = vmatpush2.bf16.xpose.msra.mxu0 0
    %2812 = vmatprep.subr.bf16.mxu0 0
    %2813 = vmatpush2.bf16.xpose.msra.mxu0 0
    %2814 = vmatprep.subr.bf16.mxu0 0
    %2815 = vmatpush2.bf16.xpose.msra.mxu0 0
    %2816 = vmatprep.subr.bf16.mxu0 0
    %2817 = vmatpush2.bf16.xpose.msra.mxu0 0
    %2818 = vmatprep.mubr.bf16.mxu0 0
    %2819 = vmatmul.mubr.bf16.gmra.mxu0 %v2781
    %v2820 = vpop.f32.mrf.mxu0
    %v2821 = vadd.f32 0.0, %v2820
    %v2822 = vpop.f32.mrf.mxu0
    %v2823 = vpop.f32.mrf.mxu0
    %v2824 = vpop.f32.mrf.mxu0
    %2825 = vdwg.mxu0
    %2826 = vrot.lane.b32.xlu0 %v2728, 64
    %v2827 = vpop.permute.xlu0 %2826
    %2828 = vrot.lane.b32.xlu0 %v2729, 64
    %v2829 = vpop.permute.xlu0 %2828
    %v2831 = vsel %vm818, %v2827, 0
    %v2834 = vsel %vm818, %v2829, 0
    %2836 = vmatprep.subr.bf16.mxu0 0
    %2837 = vmatpush1.bf16.xpose.msra.mxu0 0
    %2838 = vmatprep.subr.bf16.mxu0 0
    %2839 = vmatpush1.bf16.xpose.msra.mxu0 0
    %2840 = vmatprep.subr.bf16.mxu0 0
    %2841 = vmatpush1.bf16.xpose.msra.mxu0 0
    %2842 = vmatprep.subr.bf16.mxu0 0
    %2843 = vmatpush1.bf16.xpose.msra.mxu0 0
    %2844 = vmatprep.subr.bf16.mxu0 0
    %2845 = vmatpush1.bf16.xpose.msra.mxu0 0
    %2846 = vmatprep.subr.bf16.mxu0 0
    %2847 = vmatpush1.bf16.xpose.msra.mxu0 0
    %2848 = vmatprep.subr.bf16.mxu0 0
    %2849 = vmatpush1.bf16.xpose.msra.mxu0 0
    %2850 = vmatprep.subr.bf16.mxu0 0
    %2851 = vmatpush1.bf16.xpose.msra.mxu0 %v2834
    %2852 = vmatprep.subr.bf16.mxu0 0
    %2853 = vmatpush2.bf16.xpose.msra.mxu0 0
    %2854 = vmatprep.subr.bf16.mxu0 0
    %2855 = vmatpush2.bf16.xpose.msra.mxu0 0
    %2856 = vmatprep.subr.bf16.mxu0 0
    %2857 = vmatpush2.bf16.xpose.msra.mxu0 0
    %2858 = vmatprep.subr.bf16.mxu0 0
    %2859 = vmatpush2.bf16.xpose.msra.mxu0 0
    %2860 = vmatprep.subr.bf16.mxu0 0
    %2861 = vmatpush2.bf16.xpose.msra.mxu0 0
    %2862 = vmatprep.subr.bf16.mxu0 0
    %2863 = vmatpush2.bf16.xpose.msra.mxu0 0
    %2864 = vmatprep.subr.bf16.mxu0 0
    %2865 = vmatpush2.bf16.xpose.msra.mxu0 0
    %2866 = vmatprep.subr.bf16.mxu0 0
    %2867 = vmatpush2.bf16.xpose.msra.mxu0 0
    %2868 = vmatprep.mubr.bf16.mxu0 0
    %2869 = vmatmul.mubr.bf16.gmra.mxu0 %v2831
    %v2870 = vpop.f32.mrf.mxu0
    %v2871 = vadd.f32 0.0, %v2870
    %v2872 = vpop.f32.mrf.mxu0
    %v2873 = vpop.f32.mrf.mxu0
    %v2874 = vpop.f32.mrf.mxu0
    %2875 = vdwg.mxu0
    %2876 = vrot.lane.b32.xlu0 %v2728, 32
    %v2877 = vpop.permute.xlu0 %2876
    %2878 = vrot.lane.b32.xlu0 %v2729, 32
    %v2879 = vpop.permute.xlu0 %2878
    %v2881 = vsel %vm818, %v2877, 0
    %v2884 = vsel %vm818, %v2879, 0
    %2886 = vmatprep.subr.bf16.mxu0 0
    %2887 = vmatpush1.bf16.xpose.msra.mxu0 0
    %2888 = vmatprep.subr.bf16.mxu0 0
    %2889 = vmatpush1.bf16.xpose.msra.mxu0 0
    %2890 = vmatprep.subr.bf16.mxu0 0
    %2891 = vmatpush1.bf16.xpose.msra.mxu0 0
    %2892 = vmatprep.subr.bf16.mxu0 0
    %2893 = vmatpush1.bf16.xpose.msra.mxu0 0
    %2894 = vmatprep.subr.bf16.mxu0 0
    %2895 = vmatpush1.bf16.xpose.msra.mxu0 0
    %2896 = vmatprep.subr.bf16.mxu0 0
    %2897 = vmatpush1.bf16.xpose.msra.mxu0 0
    %2898 = vmatprep.subr.bf16.mxu0 0
    %2899 = vmatpush1.bf16.xpose.msra.mxu0 0
    %2900 = vmatprep.subr.bf16.mxu0 0
    %2901 = vmatpush1.bf16.xpose.msra.mxu0 %v2884
    %2902 = vmatprep.subr.bf16.mxu0 0
    %2903 = vmatpush2.bf16.xpose.msra.mxu0 0
    %2904 = vmatprep.subr.bf16.mxu0 0
    %2905 = vmatpush2.bf16.xpose.msra.mxu0 0
    %2906 = vmatprep.subr.bf16.mxu0 0
    %2907 = vmatpush2.bf16.xpose.msra.mxu0 0
    %2908 = vmatprep.subr.bf16.mxu0 0
    %2909 = vmatpush2.bf16.xpose.msra.mxu0 0
    %2910 = vmatprep.subr.bf16.mxu0 0
    %2911 = vmatpush2.bf16.xpose.msra.mxu0 0
    %2912 = vmatprep.subr.bf16.mxu0 0
    %2913 = vmatpush2.bf16.xpose.msra.mxu0 0
    %2914 = vmatprep.subr.bf16.mxu0 0
    %2915 = vmatpush2.bf16.xpose.msra.mxu0 0
    %2916 = vmatprep.subr.bf16.mxu0 0
    %2917 = vmatpush2.bf16.xpose.msra.mxu0 0
    %2918 = vmatprep.mubr.bf16.mxu0 0
    %2919 = vmatmul.mubr.bf16.gmra.mxu0 %v2881
    %v2920 = vpop.f32.mrf.mxu0
    %v2921 = vadd.f32 0.0, %v2920
    %v2922 = vpop.f32.mrf.mxu0
    %v2923 = vpop.f32.mrf.mxu0
    %v2924 = vpop.f32.mrf.mxu0
    %2925 = vdwg.mxu0
    %v2926 = vsel %vm1215, %v2571, -inf
    %2927 = vmax.xlane.f32.xlu0 %v2926
    %v2928 = vpop.xlane.xlu0 %2927
    %v2929 = vsel %vm1215, %v2623, -inf
    %2930 = vmax.xlane.f32.xlu0 %v2929
    %v2931 = vpop.xlane.xlu0 %2930
    %v2932 = vsel %vm1215, %v2673, -inf
    %2933 = vmax.xlane.f32.xlu0 %v2932
    %v2934 = vpop.xlane.xlu0 %2933
    %v2935 = vsel %vm1215, %v2723, -inf
    %2936 = vmax.xlane.f32.xlu0 %v2935
    %v2937 = vpop.xlane.xlu0 %2936
    %v2938 = vsel %vm1215, %v2771, -inf
    %2939 = vmax.xlane.f32.xlu0 %v2938
    %v2940 = vpop.xlane.xlu0 %2939
    %v2941 = vsel %vm1215, %v2821, -inf
    %2942 = vmax.xlane.f32.xlu0 %v2941
    %v2943 = vpop.xlane.xlu0 %2942
    %v2944 = vsel %vm1215, %v2871, -inf
    %2945 = vmax.xlane.f32.xlu0 %v2944
    %v2946 = vpop.xlane.xlu0 %2945
    %v2947 = vsel %vm1215, %v2921, -inf
    %2948 = vmax.xlane.f32.xlu0 %v2947
    %v2949 = vpop.xlane.xlu0 %2948
    %v2950 = vsub.f32 %v2571, %v2928
    %v2951 = vsub.f32 %v2623, %v2931
    %v2952 = vsub.f32 %v2673, %v2934
    %v2953 = vsub.f32 %v2723, %v2937
    %v2954 = vsub.f32 %v2771, %v2940
    %v2955 = vsub.f32 %v2821, %v2943
    %v2956 = vsub.f32 %v2871, %v2946
    %v2957 = vsub.f32 %v2921, %v2949
    %v2958 = vmul.f32 %v2950, 1.442695
    %v2959 = vpow.pop %v2958
    %v2960 = vmul.f32 %v2951, 1.442695
    %v2961 = vpow.pop %v2960
    %v2962 = vmul.f32 %v2952, 1.442695
    %v2963 = vpow.pop %v2962
    %v2964 = vmul.f32 %v2953, 1.442695
    %v2965 = vpow.pop %v2964
    %v2966 = vmul.f32 %v2954, 1.442695
    %v2967 = vpow.pop %v2966
    %v2968 = vmul.f32 %v2955, 1.442695
    %v2969 = vpow.pop %v2968
    %v2970 = vmul.f32 %v2956, 1.442695
    %v2971 = vpow.pop %v2970
    %v2972 = vmul.f32 %v2957, 1.442695
    %v2973 = vpow.pop %v2972
    %v2974 = vsel %vm1215, %v2959, 0.0
    %2975 = vadd.xlane.f32.xlu0 %v2974
    %v2976 = vpop.xlane.xlu0 %2975
    %v2977 = vsel %vm1215, %v2961, 0.0
    %2978 = vadd.xlane.f32.xlu0 %v2977
    %v2979 = vpop.xlane.xlu0 %2978
    %v2980 = vsel %vm1215, %v2963, 0.0
    %2981 = vadd.xlane.f32.xlu0 %v2980
    %v2982 = vpop.xlane.xlu0 %2981
    %v2983 = vsel %vm1215, %v2965, 0.0
    %2984 = vadd.xlane.f32.xlu0 %v2983
    %v2985 = vpop.xlane.xlu0 %2984
    %v2986 = vsel %vm1215, %v2967, 0.0
    %2987 = vadd.xlane.f32.xlu0 %v2986
    %v2988 = vpop.xlane.xlu0 %2987
    %v2989 = vsel %vm1215, %v2969, 0.0
    %2990 = vadd.xlane.f32.xlu0 %v2989
    %v2991 = vpop.xlane.xlu0 %2990
    %v2992 = vsel %vm1215, %v2971, 0.0
    %2993 = vadd.xlane.f32.xlu0 %v2992
    %v2994 = vpop.xlane.xlu0 %2993
    %v2995 = vsel %vm1215, %v2973, 0.0
    %2996 = vadd.xlane.f32.xlu0 %v2995
    %v2997 = vpop.xlane.xlu0 %2996
    %v2998 = vrcp.pop %v2976
    %v2999 = vrcp.pop %v2979
    %v3000 = vrcp.pop %v2982
    %v3001 = vrcp.pop %v2985
    %v3002 = vrcp.pop %v2988
    %v3003 = vrcp.pop %v2991
    %v3004 = vrcp.pop %v2994
    %v3005 = vrcp.pop %v2997
    %v3006 = vmul.f32 %v2959, %v2998
    %v3007 = vmul.f32 %v2961, %v2999
    %v3008 = vmul.f32 %v2963, %v3000
    %v3009 = vmul.f32 %v2965, %v3001
    %v3010 = vmul.f32 %v2967, %v3002
    %v3011 = vmul.f32 %v2969, %v3003
    %v3012 = vmul.f32 %v2971, %v3004
    %v3013 = vmul.f32 %v2973, %v3005
    %v3014 = vpack.c.bf16 %v3007, %v3006
    %v3015 = vpack.c.bf16 %v3009, %v3008
    %v3016 = vpack.c.bf16 %v3011, %v3010
    %v3017 = vpack.c.bf16 %v3013, %v3012
    %v3019 = vsel %vm1215, %v3014, 0
    %v3022 = vsel %vm1311, %v2529, 0
    %3024 = vmatprep.subr.bf16.mxu0 0
    %3025 = vmatpush1.bf16.msra.mxu0 0
    %3026 = vmatprep.subr.bf16.mxu0 0
    %3027 = vmatpush1.bf16.msra.mxu0 0
    %3028 = vmatprep.subr.bf16.mxu0 0
    %3029 = vmatpush1.bf16.msra.mxu0 0
    %3030 = vmatprep.subr.bf16.mxu0 0
    %3031 = vmatpush1.bf16.msra.mxu0 0
    %3032 = vmatprep.subr.bf16.mxu0 0
    %3033 = vmatpush1.bf16.msra.mxu0 0
    %3034 = vmatprep.subr.bf16.mxu0 0
    %3035 = vmatpush1.bf16.msra.mxu0 0
    %3036 = vmatprep.subr.bf16.mxu0 0
    %3037 = vmatpush1.bf16.msra.mxu0 0
    %3038 = vmatprep.subr.bf16.mxu0 0
    %3039 = vmatpush1.bf16.msra.mxu0 %v3022
    %3040 = vmatprep.subr.bf16.mxu0 0
    %3041 = vmatpush2.bf16.msra.mxu0 0
    %3042 = vmatprep.subr.bf16.mxu0 0
    %3043 = vmatpush2.bf16.msra.mxu0 0
    %3044 = vmatprep.subr.bf16.mxu0 0
    %3045 = vmatpush2.bf16.msra.mxu0 0
    %3046 = vmatprep.subr.bf16.mxu0 0
    %3047 = vmatpush2.bf16.msra.mxu0 0
    %3048 = vmatprep.subr.bf16.mxu0 0
    %3049 = vmatpush2.bf16.msra.mxu0 0
    %3050 = vmatprep.subr.bf16.mxu0 0
    %3051 = vmatpush2.bf16.msra.mxu0 0
    %3052 = vmatprep.subr.bf16.mxu0 0
    %3053 = vmatpush2.bf16.msra.mxu0 0
    %3054 = vmatprep.subr.bf16.mxu0 0
    %3055 = vmatpush2.bf16.msra.mxu0 0
    %3056 = vmatprep.mubr.bf16.mxu0 0
    %3057 = vmatmul.mubr.bf16.gmra.mxu0 %v3019
    %v3058 = vpop.f32.mrf.mxu0
    %v3059 = vadd.f32 0.0, %v3058
    %v3060 = vpop.f32.mrf.mxu0
    %v3061 = vpop.f32.mrf.mxu0
    %v3062 = vpop.f32.mrf.mxu0
    %3063 = vdwg.mxu0
    %v3065 = vrot.slane %v3014, 4
    %3067 = vrot.lane.b32.xlu0 %v2529, 96
    %v3068 = vpop.permute.xlu0 %3067
    %v3070 = vsel %vm1215, %v3065, 0
    %v3073 = vsel %vm1311, %v3068, 0
    %3075 = vmatprep.subr.bf16.mxu0 0
    %3076 = vmatpush1.bf16.msra.mxu0 0
    %3077 = vmatprep.subr.bf16.mxu0 0
    %3078 = vmatpush1.bf16.msra.mxu0 0
    %3079 = vmatprep.subr.bf16.mxu0 0
    %3080 = vmatpush1.bf16.msra.mxu0 0
    %3081 = vmatprep.subr.bf16.mxu0 0
    %3082 = vmatpush1.bf16.msra.mxu0 0
    %3083 = vmatprep.subr.bf16.mxu0 0
    %3084 = vmatpush1.bf16.msra.mxu0 0
    %3085 = vmatprep.subr.bf16.mxu0 0
    %3086 = vmatpush1.bf16.msra.mxu0 0
    %3087 = vmatprep.subr.bf16.mxu0 0
    %3088 = vmatpush1.bf16.msra.mxu0 0
    %3089 = vmatprep.subr.bf16.mxu0 0
    %3090 = vmatpush1.bf16.msra.mxu0 %v3073
    %3091 = vmatprep.subr.bf16.mxu0 0
    %3092 = vmatpush2.bf16.msra.mxu0 0
    %3093 = vmatprep.subr.bf16.mxu0 0
    %3094 = vmatpush2.bf16.msra.mxu0 0
    %3095 = vmatprep.subr.bf16.mxu0 0
    %3096 = vmatpush2.bf16.msra.mxu0 0
    %3097 = vmatprep.subr.bf16.mxu0 0
    %3098 = vmatpush2.bf16.msra.mxu0 0
    %3099 = vmatprep.subr.bf16.mxu0 0
    %3100 = vmatpush2.bf16.msra.mxu0 0
    %3101 = vmatprep.subr.bf16.mxu0 0
    %3102 = vmatpush2.bf16.msra.mxu0 0
    %3103 = vmatprep.subr.bf16.mxu0 0
    %3104 = vmatpush2.bf16.msra.mxu0 0
    %3105 = vmatprep.subr.bf16.mxu0 0
    %3106 = vmatpush2.bf16.msra.mxu0 0
    %3107 = vmatprep.mubr.bf16.mxu0 0
    %3108 = vmatmul.mubr.bf16.gmra.mxu0 %v3070
    %v3109 = vpop.f32.mrf.mxu0
    %v3110 = vadd.f32 0.0, %v3109
    %v3111 = vpop.f32.mrf.mxu0
    %v3112 = vpop.f32.mrf.mxu0
    %v3113 = vpop.f32.mrf.mxu0
    %3114 = vdwg.mxu0
    %3115 = vrot.lane.b32.xlu0 %v2529, 64
    %v3116 = vpop.permute.xlu0 %3115
    %v3118 = vsel %vm1215, %v3015, 0
    %v3121 = vsel %vm1311, %v3116, 0
    %3123 = vmatprep.subr.bf16.mxu0 0
    %3124 = vmatpush1.bf16.msra.mxu0 0
    %3125 = vmatprep.subr.bf16.mxu0 0
    %3126 = vmatpush1.bf16.msra.mxu0 0
    %3127 = vmatprep.subr.bf16.mxu0 0
    %3128 = vmatpush1.bf16.msra.mxu0 0
    %3129 = vmatprep.subr.bf16.mxu0 0
    %3130 = vmatpush1.bf16.msra.mxu0 0
    %3131 = vmatprep.subr.bf16.mxu0 0
    %3132 = vmatpush1.bf16.msra.mxu0 0
    %3133 = vmatprep.subr.bf16.mxu0 0
    %3134 = vmatpush1.bf16.msra.mxu0 0
    %3135 = vmatprep.subr.bf16.mxu0 0
    %3136 = vmatpush1.bf16.msra.mxu0 0
    %3137 = vmatprep.subr.bf16.mxu0 0
    %3138 = vmatpush1.bf16.msra.mxu0 %v3121
    %3139 = vmatprep.subr.bf16.mxu0 0
    %3140 = vmatpush2.bf16.msra.mxu0 0
    %3141 = vmatprep.subr.bf16.mxu0 0
    %3142 = vmatpush2.bf16.msra.mxu0 0
    %3143 = vmatprep.subr.bf16.mxu0 0
    %3144 = vmatpush2.bf16.msra.mxu0 0
    %3145 = vmatprep.subr.bf16.mxu0 0
    %3146 = vmatpush2.bf16.msra.mxu0 0
    %3147 = vmatprep.subr.bf16.mxu0 0
    %3148 = vmatpush2.bf16.msra.mxu0 0
    %3149 = vmatprep.subr.bf16.mxu0 0
    %3150 = vmatpush2.bf16.msra.mxu0 0
    %3151 = vmatprep.subr.bf16.mxu0 0
    %3152 = vmatpush2.bf16.msra.mxu0 0
    %3153 = vmatprep.subr.bf16.mxu0 0
    %3154 = vmatpush2.bf16.msra.mxu0 0
    %3155 = vmatprep.mubr.bf16.mxu0 0
    %3156 = vmatmul.mubr.bf16.gmra.mxu0 %v3118
    %v3157 = vpop.f32.mrf.mxu0
    %v3158 = vadd.f32 0.0, %v3157
    %v3159 = vpop.f32.mrf.mxu0
    %v3160 = vpop.f32.mrf.mxu0
    %v3161 = vpop.f32.mrf.mxu0
    %3162 = vdwg.mxu0
    %v3164 = vrot.slane %v3015, 4
    %3165 = vrot.lane.b32.xlu0 %v2529, 32
    %v3166 = vpop.permute.xlu0 %3165
    %v3168 = vsel %vm1215, %v3164, 0
    %v3171 = vsel %vm1311, %v3166, 0
    %3173 = vmatprep.subr.bf16.mxu0 0
    %3174 = vmatpush1.bf16.msra.mxu0 0
    %3175 = vmatprep.subr.bf16.mxu0 0
    %3176 = vmatpush1.bf16.msra.mxu0 0
    %3177 = vmatprep.subr.bf16.mxu0 0
    %3178 = vmatpush1.bf16.msra.mxu0 0
    %3179 = vmatprep.subr.bf16.mxu0 0
    %3180 = vmatpush1.bf16.msra.mxu0 0
    %3181 = vmatprep.subr.bf16.mxu0 0
    %3182 = vmatpush1.bf16.msra.mxu0 0
    %3183 = vmatprep.subr.bf16.mxu0 0
    %3184 = vmatpush1.bf16.msra.mxu0 0
    %3185 = vmatprep.subr.bf16.mxu0 0
    %3186 = vmatpush1.bf16.msra.mxu0 0
    %3187 = vmatprep.subr.bf16.mxu0 0
    %3188 = vmatpush1.bf16.msra.mxu0 %v3171
    %3189 = vmatprep.subr.bf16.mxu0 0
    %3190 = vmatpush2.bf16.msra.mxu0 0
    %3191 = vmatprep.subr.bf16.mxu0 0
    %3192 = vmatpush2.bf16.msra.mxu0 0
    %3193 = vmatprep.subr.bf16.mxu0 0
    %3194 = vmatpush2.bf16.msra.mxu0 0
    %3195 = vmatprep.subr.bf16.mxu0 0
    %3196 = vmatpush2.bf16.msra.mxu0 0
    %3197 = vmatprep.subr.bf16.mxu0 0
    %3198 = vmatpush2.bf16.msra.mxu0 0
    %3199 = vmatprep.subr.bf16.mxu0 0
    %3200 = vmatpush2.bf16.msra.mxu0 0
    %3201 = vmatprep.subr.bf16.mxu0 0
    %3202 = vmatpush2.bf16.msra.mxu0 0
    %3203 = vmatprep.subr.bf16.mxu0 0
    %3204 = vmatpush2.bf16.msra.mxu0 0
    %3205 = vmatprep.mubr.bf16.mxu0 0
    %3206 = vmatmul.mubr.bf16.gmra.mxu0 %v3168
    %v3207 = vpop.f32.mrf.mxu0
    %v3208 = vadd.f32 0.0, %v3207
    %v3209 = vpop.f32.mrf.mxu0
    %v3210 = vpop.f32.mrf.mxu0
    %v3211 = vpop.f32.mrf.mxu0
    %3212 = vdwg.mxu0
    %3214 = vrot.lane.b32.xlu0 %v3110, 32
    %v3215 = vpop.permute.xlu0 %3214
    %3218 = vrot.lane.b32.xlu0 %v3158, 64
    %v3219 = vpop.permute.xlu0 %3218
    %3222 = vrot.lane.b32.xlu0 %v3208, 96
    %v3223 = vpop.permute.xlu0 %3222
    %v3225 = vsel %vm818, %v3059, %v3215
    %v3226 = vsel %vm1517, %v3225, %v3219
    %v3227 = vsel %vm1519, %v3226, %v3223
    %v3228 = vrot.slane %v2529, 4
    %v3230 = vsel %vm1215, %v3016, 0
    %v3233 = vsel %vm1311, %v3228, 0
    %3235 = vmatprep.subr.bf16.mxu0 0
    %3236 = vmatpush1.bf16.msra.mxu0 0
    %3237 = vmatprep.subr.bf16.mxu0 0
    %3238 = vmatpush1.bf16.msra.mxu0 0
    %3239 = vmatprep.subr.bf16.mxu0 0
    %3240 = vmatpush1.bf16.msra.mxu0 0
    %3241 = vmatprep.subr.bf16.mxu0 0
    %3242 = vmatpush1.bf16.msra.mxu0 0
    %3243 = vmatprep.subr.bf16.mxu0 0
    %3244 = vmatpush1.bf16.msra.mxu0 0
    %3245 = vmatprep.subr.bf16.mxu0 0
    %3246 = vmatpush1.bf16.msra.mxu0 0
    %3247 = vmatprep.subr.bf16.mxu0 0
    %3248 = vmatpush1.bf16.msra.mxu0 0
    %3249 = vmatprep.subr.bf16.mxu0 0
    %3250 = vmatpush1.bf16.msra.mxu0 %v3233
    %3251 = vmatprep.subr.bf16.mxu0 0
    %3252 = vmatpush2.bf16.msra.mxu0 0
    %3253 = vmatprep.subr.bf16.mxu0 0
    %3254 = vmatpush2.bf16.msra.mxu0 0
    %3255 = vmatprep.subr.bf16.mxu0 0
    %3256 = vmatpush2.bf16.msra.mxu0 0
    %3257 = vmatprep.subr.bf16.mxu0 0
    %3258 = vmatpush2.bf16.msra.mxu0 0
    %3259 = vmatprep.subr.bf16.mxu0 0
    %3260 = vmatpush2.bf16.msra.mxu0 0
    %3261 = vmatprep.subr.bf16.mxu0 0
    %3262 = vmatpush2.bf16.msra.mxu0 0
    %3263 = vmatprep.subr.bf16.mxu0 0
    %3264 = vmatpush2.bf16.msra.mxu0 0
    %3265 = vmatprep.subr.bf16.mxu0 0
    %3266 = vmatpush2.bf16.msra.mxu0 0
    %3267 = vmatprep.mubr.bf16.mxu0 0
    %3268 = vmatmul.mubr.bf16.gmra.mxu0 %v3230
    %v3269 = vpop.f32.mrf.mxu0
    %v3270 = vadd.f32 0.0, %v3269
    %v3271 = vpop.f32.mrf.mxu0
    %v3272 = vpop.f32.mrf.mxu0
    %v3273 = vpop.f32.mrf.mxu0
    %3274 = vdwg.mxu0
    %v3276 = vrot.slane %v3016, 4
    %3277 = vrot.lane.b32.xlu0 %v3228, 96
    %v3278 = vpop.permute.xlu0 %3277
    %v3280 = vsel %vm1215, %v3276, 0
    %v3283 = vsel %vm1311, %v3278, 0
    %3285 = vmatprep.subr.bf16.mxu0 0
    %3286 = vmatpush1.bf16.msra.mxu0 0
    %3287 = vmatprep.subr.bf16.mxu0 0
    %3288 = vmatpush1.bf16.msra.mxu0 0
    %3289 = vmatprep.subr.bf16.mxu0 0
    %3290 = vmatpush1.bf16.msra.mxu0 0
    %3291 = vmatprep.subr.bf16.mxu0 0
    %3292 = vmatpush1.bf16.msra.mxu0 0
    %3293 = vmatprep.subr.bf16.mxu0 0
    %3294 = vmatpush1.bf16.msra.mxu0 0
    %3295 = vmatprep.subr.bf16.mxu0 0
    %3296 = vmatpush1.bf16.msra.mxu0 0
    %3297 = vmatprep.subr.bf16.mxu0 0
    %3298 = vmatpush1.bf16.msra.mxu0 0
    %3299 = vmatprep.subr.bf16.mxu0 0
    %3300 = vmatpush1.bf16.msra.mxu0 %v3283
    %3301 = vmatprep.subr.bf16.mxu0 0
    %3302 = vmatpush2.bf16.msra.mxu0 0
    %3303 = vmatprep.subr.bf16.mxu0 0
    %3304 = vmatpush2.bf16.msra.mxu0 0
    %3305 = vmatprep.subr.bf16.mxu0 0
    %3306 = vmatpush2.bf16.msra.mxu0 0
    %3307 = vmatprep.subr.bf16.mxu0 0
    %3308 = vmatpush2.bf16.msra.mxu0 0
    %3309 = vmatprep.subr.bf16.mxu0 0
    %3310 = vmatpush2.bf16.msra.mxu0 0
    %3311 = vmatprep.subr.bf16.mxu0 0
    %3312 = vmatpush2.bf16.msra.mxu0 0
    %3313 = vmatprep.subr.bf16.mxu0 0
    %3314 = vmatpush2.bf16.msra.mxu0 0
    %3315 = vmatprep.subr.bf16.mxu0 0
    %3316 = vmatpush2.bf16.msra.mxu0 0
    %3317 = vmatprep.mubr.bf16.mxu0 0
    %3318 = vmatmul.mubr.bf16.gmra.mxu0 %v3280
    %v3319 = vpop.f32.mrf.mxu0
    %v3320 = vadd.f32 0.0, %v3319
    %v3321 = vpop.f32.mrf.mxu0
    %v3322 = vpop.f32.mrf.mxu0
    %v3323 = vpop.f32.mrf.mxu0
    %3324 = vdwg.mxu0
    %3325 = vrot.lane.b32.xlu0 %v3228, 64
    %v3326 = vpop.permute.xlu0 %3325
    %v3328 = vsel %vm1215, %v3017, 0
    %v3331 = vsel %vm1311, %v3326, 0
    %3333 = vmatprep.subr.bf16.mxu0 0
    %3334 = vmatpush1.bf16.msra.mxu0 0
    %3335 = vmatprep.subr.bf16.mxu0 0
    %3336 = vmatpush1.bf16.msra.mxu0 0
    %3337 = vmatprep.subr.bf16.mxu0 0
    %3338 = vmatpush1.bf16.msra.mxu0 0
    %3339 = vmatprep.subr.bf16.mxu0 0
    %3340 = vmatpush1.bf16.msra.mxu0 0
    %3341 = vmatprep.subr.bf16.mxu0 0
    %3342 = vmatpush1.bf16.msra.mxu0 0
    %3343 = vmatprep.subr.bf16.mxu0 0
    %3344 = vmatpush1.bf16.msra.mxu0 0
    %3345 = vmatprep.subr.bf16.mxu0 0
    %3346 = vmatpush1.bf16.msra.mxu0 0
    %3347 = vmatprep.subr.bf16.mxu0 0
    %3348 = vmatpush1.bf16.msra.mxu0 %v3331
    %3349 = vmatprep.subr.bf16.mxu0 0
    %3350 = vmatpush2.bf16.msra.mxu0 0
    %3351 = vmatprep.subr.bf16.mxu0 0
    %3352 = vmatpush2.bf16.msra.mxu0 0
    %3353 = vmatprep.subr.bf16.mxu0 0
    %3354 = vmatpush2.bf16.msra.mxu0 0
    %3355 = vmatprep.subr.bf16.mxu0 0
    %3356 = vmatpush2.bf16.msra.mxu0 0
    %3357 = vmatprep.subr.bf16.mxu0 0
    %3358 = vmatpush2.bf16.msra.mxu0 0
    %3359 = vmatprep.subr.bf16.mxu0 0
    %3360 = vmatpush2.bf16.msra.mxu0 0
    %3361 = vmatprep.subr.bf16.mxu0 0
    %3362 = vmatpush2.bf16.msra.mxu0 0
    %3363 = vmatprep.subr.bf16.mxu0 0
    %3364 = vmatpush2.bf16.msra.mxu0 0
    %3365 = vmatprep.mubr.bf16.mxu0 0
    %3366 = vmatmul.mubr.bf16.gmra.mxu0 %v3328
    %v3367 = vpop.f32.mrf.mxu0
    %v3368 = vadd.f32 0.0, %v3367
    %v3369 = vpop.f32.mrf.mxu0
    %v3370 = vpop.f32.mrf.mxu0
    %v3371 = vpop.f32.mrf.mxu0
    %3372 = vdwg.mxu0
    %v3374 = vrot.slane %v3017, 4
    %3375 = vrot.lane.b32.xlu0 %v3228, 32
    %v3376 = vpop.permute.xlu0 %3375
    %v3378 = vsel %vm1215, %v3374, 0
    %v3381 = vsel %vm1311, %v3376, 0
    %3383 = vmatprep.subr.bf16.mxu0 0
    %3384 = vmatpush1.bf16.msra.mxu0 0
    %3385 = vmatprep.subr.bf16.mxu0 0
    %3386 = vmatpush1.bf16.msra.mxu0 0
    %3387 = vmatprep.subr.bf16.mxu0 0
    %3388 = vmatpush1.bf16.msra.mxu0 0
    %3389 = vmatprep.subr.bf16.mxu0 0
    %3390 = vmatpush1.bf16.msra.mxu0 0
    %3391 = vmatprep.subr.bf16.mxu0 0
    %3392 = vmatpush1.bf16.msra.mxu0 0
    %3393 = vmatprep.subr.bf16.mxu0 0
    %3394 = vmatpush1.bf16.msra.mxu0 0
    %3395 = vmatprep.subr.bf16.mxu0 0
    %3396 = vmatpush1.bf16.msra.mxu0 0
    %3397 = vmatprep.subr.bf16.mxu0 0
    %3398 = vmatpush1.bf16.msra.mxu0 %v3381
    %3399 = vmatprep.subr.bf16.mxu0 0
    %3400 = vmatpush2.bf16.msra.mxu0 0
    %3401 = vmatprep.subr.bf16.mxu0 0
    %3402 = vmatpush2.bf16.msra.mxu0 0
    %3403 = vmatprep.subr.bf16.mxu0 0
    %3404 = vmatpush2.bf16.msra.mxu0 0
    %3405 = vmatprep.subr.bf16.mxu0 0
    %3406 = vmatpush2.bf16.msra.mxu0 0
    %3407 = vmatprep.subr.bf16.mxu0 0
    %3408 = vmatpush2.bf16.msra.mxu0 0
    %3409 = vmatprep.subr.bf16.mxu0 0
    %3410 = vmatpush2.bf16.msra.mxu0 0
    %3411 = vmatprep.subr.bf16.mxu0 0
    %3412 = vmatpush2.bf16.msra.mxu0 0
    %3413 = vmatprep.subr.bf16.mxu0 0
    %3414 = vmatpush2.bf16.msra.mxu0 0
    %3415 = vmatprep.mubr.bf16.mxu0 0
    %3416 = vmatmul.mubr.bf16.gmra.mxu0 %v3378
    %v3417 = vpop.f32.mrf.mxu0
    %v3418 = vadd.f32 0.0, %v3417
    %v3419 = vpop.f32.mrf.mxu0
    %v3420 = vpop.f32.mrf.mxu0
    %v3421 = vpop.f32.mrf.mxu0
    %3422 = vdwg.mxu0
    %3424 = vrot.lane.b32.xlu0 %v3320, 32
    %v3425 = vpop.permute.xlu0 %3424
    %3428 = vrot.lane.b32.xlu0 %v3368, 64
    %v3429 = vpop.permute.xlu0 %3428
    %3432 = vrot.lane.b32.xlu0 %v3418, 96
    %v3433 = vpop.permute.xlu0 %3432
    %v3435 = vsel %vm818, %v3270, %v3425
    %v3436 = vsel %vm1517, %v3435, %v3429
    %v3437 = vsel %vm1519, %v3436, %v3433
    %v3438 = vpack.c.bf16 %v3437, %v3227
    %s3439 = scalar_lea.vmem [#allocation7], 64
    %v3440 = vld [vmem:[%s3439] sm:$0xf]
    %v3441 = vld [vmem:[%s3439 + $0x4] sm:$0xf]
    %v3442 = vld [vmem:[%s3439 + $0x8] sm:$0xf]
    %v3443 = vld [vmem:[%s3439 + $0xc] sm:$0xf]
    %v3444 = vld [vmem:[%s3439 + $0x10] sm:$0xf]
    %v3445 = vld [vmem:[%s3439 + $0x14] sm:$0xf]
    %v3446 = vld [vmem:[%s3439 + $0x18] sm:$0xf]
    %v3447 = vld [vmem:[%s3439 + $0x1c] sm:$0xf]
    %v3448 = vld [vmem:[%s3439 + $0x20] sm:$0xf]
    %v3449 = vld [vmem:[%s3439 + $0x24] sm:$0xf]
    %v3450 = vld [vmem:[%s3439 + $0x28] sm:$0xf]
    %v3451 = vld [vmem:[%s3439 + $0x2c] sm:$0xf]
    %v3452 = vld [vmem:[%s3439 + $0x30] sm:$0xf]
    %v3453 = vld [vmem:[%s3439 + $0x34] sm:$0xf]
    %v3454 = vld [vmem:[%s3439 + $0x38] sm:$0xf]
    %v3455 = vld [vmem:[%s3439 + $0x3c] sm:$0xf]
    %s3456 = scalar_lea.vmem %s6, 1
    %v3457 = vld [vmem:[%s3456] sm:$0x1]
    %v3459 = vlaneseq
    %v3460 = vshrl.u32 %v3459, 7
    %v3461 = vsub.s32 0, %v3460
    %v3462 = vrot.slane %v3457, %v3461
    %v3480 = vunpack.c.l.b16 %v3440
    %v3481 = vunpack.c.l.b16 %v3441
    %v3482 = vunpack.c.l.b16 %v3442
    %v3483 = vunpack.c.l.b16 %v3443
    %v3484 = vunpack.c.l.b16 %v3444
    %v3485 = vunpack.c.l.b16 %v3445
    %v3486 = vunpack.c.l.b16 %v3446
    %v3487 = vunpack.c.l.b16 %v3447
    %v3488 = vunpack.c.l.b16 %v3448
    %v3489 = vunpack.c.l.b16 %v3449
    %v3490 = vunpack.c.l.b16 %v3450
    %v3491 = vunpack.c.l.b16 %v3451
    %v3492 = vunpack.c.l.b16 %v3452
    %v3493 = vunpack.c.l.b16 %v3453
    %v3494 = vunpack.c.l.b16 %v3454
    %v3495 = vunpack.c.l.b16 %v3455
    %v3496 = vpack.c.b16 %v3481, %v3480
    %v3497 = vpack.c.b16 %v3483, %v3482
    %v3498 = vpack.c.b16 %v3485, %v3484
    %v3499 = vpack.c.b16 %v3487, %v3486
    %v3500 = vpack.c.b16 %v3489, %v3488
    %v3501 = vpack.c.b16 %v3491, %v3490
    %v3502 = vpack.c.b16 %v3493, %v3492
    %v3503 = vpack.c.b16 %v3495, %v3494
    %3512 = vmatprep.subr.bf16.mxu0 0
    %3513 = vmatpush1.bf16.msra.mxu0 %v3503
    %3514 = vmatprep.subr.bf16.mxu0 0
    %3515 = vmatpush1.bf16.msra.mxu0 %v3502
    %3516 = vmatprep.subr.bf16.mxu0 0
    %3517 = vmatpush1.bf16.msra.mxu0 %v3501
    %3518 = vmatprep.subr.bf16.mxu0 0
    %3519 = vmatpush1.bf16.msra.mxu0 %v3500
    %3520 = vmatprep.subr.bf16.mxu0 0
    %3521 = vmatpush1.bf16.msra.mxu0 %v3499
    %3522 = vmatprep.subr.bf16.mxu0 0
    %3523 = vmatpush1.bf16.msra.mxu0 %v3498
    %3524 = vmatprep.subr.bf16.mxu0 0
    %3525 = vmatpush1.bf16.msra.mxu0 %v3497
    %3526 = vmatprep.subr.bf16.mxu0 0
    %3527 = vmatpush1.bf16.msra.mxu0 %v3496
    %3528 = vmatprep.subr.bf16.mxu0 0
    %3529 = vmatpush2.bf16.msra.mxu0 0
    %3530 = vmatprep.subr.bf16.mxu0 0
    %3531 = vmatpush2.bf16.msra.mxu0 0
    %3532 = vmatprep.subr.bf16.mxu0 0
    %3533 = vmatpush2.bf16.msra.mxu0 0
    %3534 = vmatprep.subr.bf16.mxu0 0
    %3535 = vmatpush2.bf16.msra.mxu0 0
    %3536 = vmatprep.subr.bf16.mxu0 0
    %3537 = vmatpush2.bf16.msra.mxu0 0
    %3538 = vmatprep.subr.bf16.mxu0 0
    %3539 = vmatpush2.bf16.msra.mxu0 0
    %3540 = vmatprep.subr.bf16.mxu0 0
    %3541 = vmatpush2.bf16.msra.mxu0 0
    %3542 = vmatprep.subr.bf16.mxu0 0
    %3543 = vmatpush2.bf16.msra.mxu0 0
    %3544 = vmatprep.mubr.bf16.mxu0 0
    %3545 = vmatmul.mubr.bf16.gmra.mxu0 %v3438
    %v3546 = vpop.f32.mrf.mxu0
    %v3547 = vadd.f32 %v3462, %v3546
    %v3548 = vpop.f32.mrf.mxu0
    %v3549 = vpop.f32.mrf.mxu0
    %v3550 = vadd.f32 %v3462, %v3549
    %v3551 = vpop.f32.mrf.mxu0
    %3552 = vdwg.mxu0
    %v3553 = vadd.f32 %v2261, %v3547
    %v3554 = vadd.f32 %v2262, %v3550
    %s3555 = scalar_lea.vmem %s7, 1
    %v3556 = vld [vmem:[%s3555] sm:$0x1]
    %s3557 = scalar_lea.vmem [#allocation8], 1
    %v3558 = vld [vmem:[%s3557] sm:$0x1]
    %3559 = vadd.xlane.f32.xlu0 %v3553
    %v3560 = vpop.xlane.xlu0 %3559
    %3561 = vadd.xlane.f32.xlu0 %v3554
    %v3562 = vpop.xlane.xlu0 %3561
    %v3563 = vmul.f32 %v3560, %v1852
    %v3564 = vmul.f32 %v3562, %v1852
    %v3565 = vsub.f32 %v3553, %v3563
    %v3566 = vsub.f32 %v3554, %v3564
    %v3567 = vmul.f32 %v3565, %v3565
    %v3568 = vmul.f32 %v3566, %v3566
    %3569 = vadd.xlane.f32.xlu0 %v3567
    %v3570 = vpop.xlane.xlu0 %3569
    %3571 = vadd.xlane.f32.xlu0 %v3568
    %v3572 = vpop.xlane.xlu0 %3571
    %v3573 = vmul.f32 %v3570, %v1852
    %v3574 = vmul.f32 %v3572, %v1852
    %v3575 = vadd.f32 %v3573, 1e-05
    %v3576 = vadd.f32 %v3574, 1e-05
    %v3577 = vrsqrt.pop %v3575
    %v3578 = vrsqrt.pop %v3576
    %v3579 = vmul.f32 %v3565, %v3577
    %v3580 = vmul.f32 %v3566, %v3578
    %v3582 = vlaneseq
    %v3583 = vshrl.u32 %v3582, 7
    %v3584 = vsub.s32 0, %v3583
    %v3585 = vrot.slane %v3556, %v3584
    %v3587 = vmul.f32 %v3579, %v3585
    %v3588 = vmul.f32 %v3580, %v3585
    %v3590 = vlaneseq
    %v3591 = vshrl.u32 %v3590, 7
    %v3592 = vsub.s32 0, %v3591
    %v3593 = vrot.slane %v3558, %v3592
    %v3595 = vadd.f32 %v3587, %v3593
    %v3596 = vadd.f32 %v3588, %v3593
    %v3597 = vpack.c.bf16 %v3596, %v3595
    %s3598 = scalar_lea.vmem [#allocation10], 128
    %v3599 = vld [vmem:[%s3598] sm:$0xff]
    %v3600 = vld [vmem:[%s3598 + $0x8] sm:$0xff]
    %v3601 = vld [vmem:[%s3598 + $0x10] sm:$0xff]
    %v3602 = vld [vmem:[%s3598 + $0x18] sm:$0xff]
    %v3603 = vld [vmem:[%s3598 + $0x20] sm:$0xff]
    %v3604 = vld [vmem:[%s3598 + $0x28] sm:$0xff]
    %v3605 = vld [vmem:[%s3598 + $0x30] sm:$0xff]
    %v3606 = vld [vmem:[%s3598 + $0x38] sm:$0xff]
    %v3607 = vld [vmem:[%s3598 + $0x40] sm:$0xff]
    %v3608 = vld [vmem:[%s3598 + $0x48] sm:$0xff]
    %v3609 = vld [vmem:[%s3598 + $0x50] sm:$0xff]
    %v3610 = vld [vmem:[%s3598 + $0x58] sm:$0xff]
    %v3611 = vld [vmem:[%s3598 + $0x60] sm:$0xff]
    %v3612 = vld [vmem:[%s3598 + $0x68] sm:$0xff]
    %v3613 = vld [vmem:[%s3598 + $0x70] sm:$0xff]
    %v3614 = vld [vmem:[%s3598 + $0x78] sm:$0xff]
    %s3615 = scalar_lea.vmem %s10, 2
    %v3616 = vld [vmem:[%s3615] sm:$0x3]
    %v3618 = vlaneseq
    %v3619 = vshrl.u32 %v3618, 7
    %v3620 = vsub.s32 0, %v3619
    %v3621 = vrot.slane %v3616, %v3620
    %v3622 = vlaneseq
    %v3623 = vshrl.u32 %v3622, 7
    %v3624 = vsub.s32 1, %v3623
    %v3625 = vrot.slane %v3616, %v3624
    %v3644 = vunpack.c.l.b16 %v3599
    %v3645 = vunpack.c.h.b16 %v3599
    %v3646 = vunpack.c.l.b16 %v3600
    %v3647 = vunpack.c.h.b16 %v3600
    %v3648 = vunpack.c.l.b16 %v3601
    %v3649 = vunpack.c.h.b16 %v3601
    %v3650 = vunpack.c.l.b16 %v3602
    %v3651 = vunpack.c.h.b16 %v3602
    %v3652 = vunpack.c.l.b16 %v3603
    %v3653 = vunpack.c.h.b16 %v3603
    %v3654 = vunpack.c.l.b16 %v3604
    %v3655 = vunpack.c.h.b16 %v3604
    %v3656 = vunpack.c.l.b16 %v3605
    %v3657 = vunpack.c.h.b16 %v3605
    %v3658 = vunpack.c.l.b16 %v3606
    %v3659 = vunpack.c.h.b16 %v3606
    %v3660 = vunpack.c.l.b16 %v3607
    %v3661 = vunpack.c.h.b16 %v3607
    %v3662 = vunpack.c.l.b16 %v3608
    %v3663 = vunpack.c.h.b16 %v3608
    %v3664 = vunpack.c.l.b16 %v3609
    %v3665 = vunpack.c.h.b16 %v3609
    %v3666 = vunpack.c.l.b16 %v3610
    %v3667 = vunpack.c.h.b16 %v3610
    %v3668 = vunpack.c.l.b16 %v3611
    %v3669 = vunpack.c.h.b16 %v3611
    %v3670 = vunpack.c.l.b16 %v3612
    %v3671 = vunpack.c.h.b16 %v3612
    %v3672 = vunpack.c.l.b16 %v3613
    %v3673 = vunpack.c.h.b16 %v3613
    %v3674 = vunpack.c.l.b16 %v3614
    %v3675 = vunpack.c.h.b16 %v3614
    %v3676 = vpack.c.b16 %v3646, %v3644
    %v3677 = vpack.c.b16 %v3647, %v3645
    %v3678 = vpack.c.b16 %v3650, %v3648
    %v3679 = vpack.c.b16 %v3651, %v3649
    %v3680 = vpack.c.b16 %v3654, %v3652
    %v3681 = vpack.c.b16 %v3655, %v3653
    %v3682 = vpack.c.b16 %v3658, %v3656
    %v3683 = vpack.c.b16 %v3659, %v3657
    %v3684 = vpack.c.b16 %v3662, %v3660
    %v3685 = vpack.c.b16 %v3663, %v3661
    %v3686 = vpack.c.b16 %v3666, %v3664
    %v3687 = vpack.c.b16 %v3667, %v3665
    %v3688 = vpack.c.b16 %v3670, %v3668
    %v3689 = vpack.c.b16 %v3671, %v3669
    %v3690 = vpack.c.b16 %v3674, %v3672
    %v3691 = vpack.c.b16 %v3675, %v3673
    %3708 = vmatprep.subr.bf16.mxu0 %v3691
    %3709 = vmatpush1.bf16.msra.mxu0 %v3690
    %3710 = vmatprep.subr.bf16.mxu0 %v3689
    %3711 = vmatpush1.bf16.msra.mxu0 %v3688
    %3712 = vmatprep.subr.bf16.mxu0 %v3687
    %3713 = vmatpush1.bf16.msra.mxu0 %v3686
    %3714 = vmatprep.subr.bf16.mxu0 %v3685
    %3715 = vmatpush1.bf16.msra.mxu0 %v3684
    %3716 = vmatprep.subr.bf16.mxu0 %v3683
    %3717 = vmatpush1.bf16.msra.mxu0 %v3682
    %3718 = vmatprep.subr.bf16.mxu0 %v3681
    %3719 = vmatpush1.bf16.msra.mxu0 %v3680
    %3720 = vmatprep.subr.bf16.mxu0 %v3679
    %3721 = vmatpush1.bf16.msra.mxu0 %v3678
    %3722 = vmatprep.subr.bf16.mxu0 %v3677
    %3723 = vmatpush1.bf16.msra.mxu0 %v3676
    %3724 = vmatprep.subr.bf16.mxu0 0
    %3725 = vmatpush2.bf16.msra.mxu0 0
    %3726 = vmatprep.subr.bf16.mxu0 0
    %3727 = vmatpush2.bf16.msra.mxu0 0
    %3728 = vmatprep.subr.bf16.mxu0 0
    %3729 = vmatpush2.bf16.msra.mxu0 0
    %3730 = vmatprep.subr.bf16.mxu0 0
    %3731 = vmatpush2.bf16.msra.mxu0 0
    %3732 = vmatprep.subr.bf16.mxu0 0
    %3733 = vmatpush2.bf16.msra.mxu0 0
    %3734 = vmatprep.subr.bf16.mxu0 0
    %3735 = vmatpush2.bf16.msra.mxu0 0
    %3736 = vmatprep.subr.bf16.mxu0 0
    %3737 = vmatpush2.bf16.msra.mxu0 0
    %3738 = vmatprep.subr.bf16.mxu0 0
    %3739 = vmatpush2.bf16.msra.mxu0 0
    %3740 = vmatprep.mubr.bf16.mxu0 0
    %3741 = vmatmul.mubr.bf16.gmra.mxu0 %v3597
    %v3742 = vpop.f32.mrf.mxu0
    %v3743 = vadd.f32 %v3621, %v3742
    %v3744 = vpop.f32.mrf.mxu0
    %v3745 = vadd.f32 %v3625, %v3744
    %v3746 = vpop.f32.mrf.mxu0
    %v3747 = vadd.f32 %v3621, %v3746
    %v3748 = vpop.f32.mrf.mxu0
    %v3749 = vadd.f32 %v3625, %v3748
    %3750 = vdwg.mxu0
    %v3751 = vmax.f32 %v3743, 0.0
    %v3752 = vmax.f32 %v3745, 0.0
    %v3753 = vmax.f32 %v3747, 0.0
    %v3754 = vmax.f32 %v3749, 0.0
    %v3755 = vpack.c.bf16 %v3753, %v3751
    %v3756 = vpack.c.bf16 %v3754, %v3752
    %s3757 = scalar_lea.vmem [#allocation11], 128
    %v3758 = vld [vmem:[%s3757] sm:$0xf]
    %v3759 = vld [vmem:[%s3757 + $0x4] sm:$0xf]
    %v3760 = vld [vmem:[%s3757 + $0x8] sm:$0xf]
    %v3761 = vld [vmem:[%s3757 + $0xc] sm:$0xf]
    %v3762 = vld [vmem:[%s3757 + $0x10] sm:$0xf]
    %v3763 = vld [vmem:[%s3757 + $0x14] sm:$0xf]
    %v3764 = vld [vmem:[%s3757 + $0x18] sm:$0xf]
    %v3765 = vld [vmem:[%s3757 + $0x1c] sm:$0xf]
    %v3766 = vld [vmem:[%s3757 + $0x20] sm:$0xf]
    %v3767 = vld [vmem:[%s3757 + $0x24] sm:$0xf]
    %v3768 = vld [vmem:[%s3757 + $0x28] sm:$0xf]
    %v3769 = vld [vmem:[%s3757 + $0x2c] sm:$0xf]
    %v3770 = vld [vmem:[%s3757 + $0x30] sm:$0xf]
    %v3771 = vld [vmem:[%s3757 + $0x34] sm:$0xf]
    %v3772 = vld [vmem:[%s3757 + $0x38] sm:$0xf]
    %v3773 = vld [vmem:[%s3757 + $0x3c] sm:$0xf]
    %v3774 = vld [vmem:[%s3757 + $0x40] sm:$0xf]
    %v3775 = vld [vmem:[%s3757 + $0x44] sm:$0xf]
    %v3776 = vld [vmem:[%s3757 + $0x48] sm:$0xf]
    %v3777 = vld [vmem:[%s3757 + $0x4c] sm:$0xf]
    %v3778 = vld [vmem:[%s3757 + $0x50] sm:$0xf]
    %v3779 = vld [vmem:[%s3757 + $0x54] sm:$0xf]
    %v3780 = vld [vmem:[%s3757 + $0x58] sm:$0xf]
    %v3781 = vld [vmem:[%s3757 + $0x5c] sm:$0xf]
    %v3782 = vld [vmem:[%s3757 + $0x60] sm:$0xf]
    %v3783 = vld [vmem:[%s3757 + $0x64] sm:$0xf]
    %v3784 = vld [vmem:[%s3757 + $0x68] sm:$0xf]
    %v3785 = vld [vmem:[%s3757 + $0x6c] sm:$0xf]
    %v3786 = vld [vmem:[%s3757 + $0x70] sm:$0xf]
    %v3787 = vld [vmem:[%s3757 + $0x74] sm:$0xf]
    %v3788 = vld [vmem:[%s3757 + $0x78] sm:$0xf]
    %v3789 = vld [vmem:[%s3757 + $0x7c] sm:$0xf]
    %s3790 = scalar_lea.vmem [#allocation13], 1
    %v3791 = vld [vmem:[%s3790] sm:$0x1]
    %v3793 = vlaneseq
    %v3794 = vshrl.u32 %v3793, 7
    %v3795 = vsub.s32 0, %v3794
    %v3796 = vrot.slane %v3791, %v3795
    %v3830 = vunpack.c.l.b16 %v3758
    %v3831 = vunpack.c.l.b16 %v3759
    %v3832 = vunpack.c.l.b16 %v3760
    %v3833 = vunpack.c.l.b16 %v3761
    %v3834 = vunpack.c.l.b16 %v3762
    %v3835 = vunpack.c.l.b16 %v3763
    %v3836 = vunpack.c.l.b16 %v3764
    %v3837 = vunpack.c.l.b16 %v3765
    %v3838 = vunpack.c.l.b16 %v3766
    %v3839 = vunpack.c.l.b16 %v3767
    %v3840 = vunpack.c.l.b16 %v3768
    %v3841 = vunpack.c.l.b16 %v3769
    %v3842 = vunpack.c.l.b16 %v3770
    %v3843 = vunpack.c.l.b16 %v3771
    %v3844 = vunpack.c.l.b16 %v3772
    %v3845 = vunpack.c.l.b16 %v3773
    %v3846 = vunpack.c.l.b16 %v3774
    %v3847 = vunpack.c.l.b16 %v3775
    %v3848 = vunpack.c.l.b16 %v3776
    %v3849 = vunpack.c.l.b16 %v3777
    %v3850 = vunpack.c.l.b16 %v3778
    %v3851 = vunpack.c.l.b16 %v3779
    %v3852 = vunpack.c.l.b16 %v3780
    %v3853 = vunpack.c.l.b16 %v3781
    %v3854 = vunpack.c.l.b16 %v3782
    %v3855 = vunpack.c.l.b16 %v3783
    %v3856 = vunpack.c.l.b16 %v3784
    %v3857 = vunpack.c.l.b16 %v3785
    %v3858 = vunpack.c.l.b16 %v3786
    %v3859 = vunpack.c.l.b16 %v3787
    %v3860 = vunpack.c.l.b16 %v3788
    %v3861 = vunpack.c.l.b16 %v3789
    %v3862 = vpack.c.b16 %v3831, %v3830
    %v3863 = vpack.c.b16 %v3833, %v3832
    %v3864 = vpack.c.b16 %v3835, %v3834
    %v3865 = vpack.c.b16 %v3837, %v3836
    %v3866 = vpack.c.b16 %v3839, %v3838
    %v3867 = vpack.c.b16 %v3841, %v3840
    %v3868 = vpack.c.b16 %v3843, %v3842
    %v3869 = vpack.c.b16 %v3845, %v3844
    %v3870 = vpack.c.b16 %v3847, %v3846
    %v3871 = vpack.c.b16 %v3849, %v3848
    %v3872 = vpack.c.b16 %v3851, %v3850
    %v3873 = vpack.c.b16 %v3853, %v3852
    %v3874 = vpack.c.b16 %v3855, %v3854
    %v3875 = vpack.c.b16 %v3857, %v3856
    %v3876 = vpack.c.b16 %v3859, %v3858
    %v3877 = vpack.c.b16 %v3861, %v3860
    %3894 = vmatprep.subr.bf16.mxu0 0
    %3895 = vmatpush1.bf16.msra.mxu0 %v3869
    %3896 = vmatprep.subr.bf16.mxu0 0
    %3897 = vmatpush1.bf16.msra.mxu0 %v3868
    %3898 = vmatprep.subr.bf16.mxu0 0
    %3899 = vmatpush1.bf16.msra.mxu0 %v3867
    %3900 = vmatprep.subr.bf16.mxu0 0
    %3901 = vmatpush1.bf16.msra.mxu0 %v3866
    %3902 = vmatprep.subr.bf16.mxu0 0
    %3903 = vmatpush1.bf16.msra.mxu0 %v3865
    %3904 = vmatprep.subr.bf16.mxu0 0
    %3905 = vmatpush1.bf16.msra.mxu0 %v3864
    %3906 = vmatprep.subr.bf16.mxu0 0
    %3907 = vmatpush1.bf16.msra.mxu0 %v3863
    %3908 = vmatprep.subr.bf16.mxu0 0
    %3909 = vmatpush1.bf16.msra.mxu0 %v3862
    %3910 = vmatprep.subr.bf16.mxu0 0
    %3911 = vmatpush2.bf16.msra.mxu0 %v3877
    %3912 = vmatprep.subr.bf16.mxu0 0
    %3913 = vmatpush2.bf16.msra.mxu0 %v3876
    %3914 = vmatprep.subr.bf16.mxu0 0
    %3915 = vmatpush2.bf16.msra.mxu0 %v3875
    %3916 = vmatprep.subr.bf16.mxu0 0
    %3917 = vmatpush2.bf16.msra.mxu0 %v3874
    %3918 = vmatprep.subr.bf16.mxu0 0
    %3919 = vmatpush2.bf16.msra.mxu0 %v3873
    %3920 = vmatprep.subr.bf16.mxu0 0
    %3921 = vmatpush2.bf16.msra.mxu0 %v3872
    %3922 = vmatprep.subr.bf16.mxu0 0
    %3923 = vmatpush2.bf16.msra.mxu0 %v3871
    %3924 = vmatprep.subr.bf16.mxu0 0
    %3925 = vmatpush2.bf16.msra.mxu0 %v3870
    %3926 = vmatprep.mubr.bf16.mxu0 %v3756
    %3927 = vmatmul.mubr.bf16.gmra.mxu0 %v3755
    %v3928 = vpop.f32.mrf.mxu0
    %v3929 = vadd.f32 %v3796, %v3928
    %v3930 = vpop.f32.mrf.mxu0
    %v3931 = vpop.f32.mrf.mxu0
    %v3932 = vadd.f32 %v3796, %v3931
    %v3933 = vpop.f32.mrf.mxu0
    %3934 = vdwg.mxu0
    %v3935 = vadd.f32 %v3595, %v3929
    %v3936 = vadd.f32 %v3596, %v3932
    %s3937 = scalar_lea.vmem %s13, 1
    %v3938 = vld [vmem:[%s3937] sm:$0x1]
    %s3939 = scalar_lea.vmem [#allocation14], 1
    %v3940 = vld [vmem:[%s3939] sm:$0x1]
    %3941 = vadd.xlane.f32.xlu0 %v3935
    %v3942 = vpop.xlane.xlu0 %3941
    %3943 = vadd.xlane.f32.xlu0 %v3936
    %v3944 = vpop.xlane.xlu0 %3943
    %v3945 = vmul.f32 %v3942, %v1852
    %v3946 = vmul.f32 %v3944, %v1852
    %v3947 = vsub.f32 %v3935, %v3945
    %v3948 = vsub.f32 %v3936, %v3946
    %v3949 = vmul.f32 %v3947, %v3947
    %v3950 = vmul.f32 %v3948, %v3948
    %3951 = vadd.xlane.f32.xlu0 %v3949
    %v3952 = vpop.xlane.xlu0 %3951
    %3953 = vadd.xlane.f32.xlu0 %v3950
    %v3954 = vpop.xlane.xlu0 %3953
    %v3955 = vmul.f32 %v3952, %v1852
    %v3956 = vmul.f32 %v3954, %v1852
    %v3957 = vadd.f32 %v3955, 1e-05
    %v3958 = vadd.f32 %v3956, 1e-05
    %v3959 = vrsqrt.pop %v3957
    %v3960 = vrsqrt.pop %v3958
    %v3961 = vmul.f32 %v3947, %v3959
    %v3962 = vmul.f32 %v3948, %v3960
    %v3964 = vlaneseq
    %v3965 = vshrl.u32 %v3964, 7
    %v3966 = vsub.s32 0, %v3965
    %v3967 = vrot.slane %v3938, %v3966
    %v3969 = vmul.f32 %v3961, %v3967
    %v3970 = vmul.f32 %v3962, %v3967
    %v3972 = vlaneseq
    %v3973 = vshrl.u32 %v3972, 7
    %v3974 = vsub.s32 0, %v3973
    %v3975 = vrot.slane %v3940, %v3974
    %v3977 = vadd.f32 %v3969, %v3975
    %v3978 = vadd.f32 %v3970, %v3975
    %v3980 = vrot.slane %v3978, 7
    %vm3982 = vcmask 1040384
    %v3983 = vsel %vm3982, %v3977, %v3980
    %v3984 = vld [vmem:[%s15] sm:$0x1]
    %v3985 = vld [vmem:[%s16] sm:$0x1]
    %vm3986 = vcmask 1041408
    %v3987 = vsel %vm3986, %v3983, 0.0
    %3988 = vadd.xlane.f32.xlu0 %v3987
    %v3989 = vpop.xlane.xlu0 %3988
    %v3990 = vmul.f32 %v3989, %v1852
    %v3991 = vsub.f32 %v3983, %v3990
    %v3992 = vmul.f32 %v3991, %v3991
    %v3993 = vsel %vm3986, %v3992, 0.0
    %3994 = vadd.xlane.f32.xlu0 %v3993
    %v3995 = vpop.xlane.xlu0 %3994
    %v3996 = vmul.f32 %v3995, %v1852
    %v3997 = vadd.f32 %v3996, 1e-05
    %v3998 = vrsqrt.pop %v3997
    %v3999 = vmul.f32 %v3991, %v3998
    %v4001 = vlaneseq
    %v4002 = vshrl.u32 %v4001, 7
    %v4003 = vsub.s32 0, %v4002
    %v4004 = vrot.slane %v3984, %v4003
    %v4006 = vmul.f32 %v3999, %v4004
    %v4008 = vlaneseq
    %v4009 = vshrl.u32 %v4008, 7
    %v4010 = vsub.s32 0, %v4009
    %v4011 = vrot.slane %v3985, %v4010
    %v4013 = vadd.f32 %v4006, %v4011
    %v4014 = vpack.c.bf16 %v4013, %v4013
    %v4015 = vld [vmem:[#allocation16] sm:$0xff]
    %v4016 = vld [vmem:[#allocation16 + $0x8] sm:$0xff]
    %v4017 = vld [vmem:[#allocation16 + $0x10] sm:$0xff]
    %v4018 = vld [vmem:[#allocation16 + $0x18] sm:$0xff]
    %v4019 = vld [vmem:[#allocation16 + $0x20] sm:$0xff]
    %v4020 = vld [vmem:[#allocation16 + $0x28] sm:$0xff]
    %v4021 = vld [vmem:[#allocation16 + $0x30] sm:$0xff]
    %v4022 = vld [vmem:[#allocation16 + $0x38] sm:$0xff]
    %v4023 = vld [vmem:[#allocation16 + $0x40] sm:$0xff]
    %v4024 = vld [vmem:[#allocation16 + $0x48] sm:$0xff]
    %v4025 = vld [vmem:[#allocation16 + $0x50] sm:$0xff]
    %v4026 = vld [vmem:[#allocation16 + $0x58] sm:$0xff]
    %v4027 = vld [vmem:[#allocation16 + $0x60] sm:$0xff]
    %v4028 = vld [vmem:[#allocation16 + $0x68] sm:$0xff]
    %v4029 = vld [vmem:[#allocation16 + $0x70] sm:$0xff]
    %v4030 = vld [vmem:[#allocation16 + $0x78] sm:$0xff]
    %v4031 = vld [vmem:[#allocation16 + $0x80] sm:$0xff]
    %v4032 = vld [vmem:[#allocation16 + $0x88] sm:$0xff]
    %v4033 = vld [vmem:[#allocation16 + $0x90] sm:$0xff]
    %v4034 = vld [vmem:[#allocation16 + $0x98] sm:$0xff]
    %v4035 = vld [vmem:[#allocation16 + $0xa0] sm:$0xff]
    %v4036 = vld [vmem:[#allocation16 + $0xa8] sm:$0xff]
    %v4037 = vld [vmem:[#allocation16 + $0xb0] sm:$0xff]
    %v4038 = vld [vmem:[#allocation16 + $0xb8] sm:$0xff]
    %v4039 = vld [vmem:[#allocation16 + $0xc0] sm:$0xff]
    %v4040 = vld [vmem:[#allocation16 + $0xc8] sm:$0xff]
    %v4041 = vld [vmem:[#allocation16 + $0xd0] sm:$0xff]
    %v4042 = vld [vmem:[#allocation16 + $0xd8] sm:$0xff]
    %v4043 = vld [vmem:[#allocation16 + $0xe0] sm:$0xff]
    %v4044 = vld [vmem:[#allocation16 + $0xe8] sm:$0xff]
    %v4045 = vld [vmem:[#allocation16 + $0xf0] sm:$0xff]
    %v4046 = vld [vmem:[#allocation16 + $0xf8] sm:$0xff]
    %v4047 = vld [vmem:[%s18] sm:$0xf]
    %v4049 = vlaneseq
    %v4050 = vshrl.u32 %v4049, 7
    %v4051 = vsub.s32 0, %v4050
    %v4052 = vrot.slane %v4047, %v4051
    %v4053 = vlaneseq
    %v4054 = vshrl.u32 %v4053, 7
    %v4055 = vsub.s32 1, %v4054
    %v4056 = vrot.slane %v4047, %v4055
    %v4057 = vlaneseq
    %v4058 = vshrl.u32 %v4057, 7
    %v4059 = vsub.s32 2, %v4058
    %v4060 = vrot.slane %v4047, %v4059
    %v4061 = vlaneseq
    %v4062 = vshrl.u32 %v4061, 7
    %v4063 = vsub.s32 3, %v4062
    %v4064 = vrot.slane %v4047, %v4063
    %v4101 = vunpack.c.l.b16 %v4015
    %v4102 = vunpack.c.h.b16 %v4015
    %v4103 = vunpack.c.l.b16 %v4016
    %v4104 = vunpack.c.h.b16 %v4016
    %v4105 = vunpack.c.l.b16 %v4017
    %v4106 = vunpack.c.h.b16 %v4017
    %v4107 = vunpack.c.l.b16 %v4018
    %v4108 = vunpack.c.h.b16 %v4018
    %v4109 = vunpack.c.l.b16 %v4019
    %v4110 = vunpack.c.h.b16 %v4019
    %v4111 = vunpack.c.l.b16 %v4020
    %v4112 = vunpack.c.h.b16 %v4020
    %v4113 = vunpack.c.l.b16 %v4021
    %v4114 = vunpack.c.h.b16 %v4021
    %v4115 = vunpack.c.l.b16 %v4022
    %v4116 = vunpack.c.h.b16 %v4022
    %v4117 = vunpack.c.l.b16 %v4023
    %v4118 = vunpack.c.h.b16 %v4023
    %v4119 = vunpack.c.l.b16 %v4024
    %v4120 = vunpack.c.h.b16 %v4024
    %v4121 = vunpack.c.l.b16 %v4025
    %v4122 = vunpack.c.h.b16 %v4025
    %v4123 = vunpack.c.l.b16 %v4026
    %v4124 = vunpack.c.h.b16 %v4026
    %v4125 = vunpack.c.l.b16 %v4027
    %v4126 = vunpack.c.h.b16 %v4027
    %v4127 = vunpack.c.l.b16 %v4028
    %v4128 = vunpack.c.h.b16 %v4028
    %v4129 = vunpack.c.l.b16 %v4029
    %v4130 = vunpack.c.h.b16 %v4029
    %v4131 = vunpack.c.l.b16 %v4030
    %v4132 = vunpack.c.h.b16 %v4030
    %v4133 = vunpack.c.l.b16 %v4031
    %v4134 = vunpack.c.h.b16 %v4031
    %v4135 = vunpack.c.l.b16 %v4032
    %v4136 = vunpack.c.h.b16 %v4032
    %v4137 = vunpack.c.l.b16 %v4033
    %v4138 = vunpack.c.h.b16 %v4033
    %v4139 = vunpack.c.l.b16 %v4034
    %v4140 = vunpack.c.h.b16 %v4034
    %v4141 = vunpack.c.l.b16 %v4035
    %v4142 = vunpack.c.h.b16 %v4035
    %v4143 = vunpack.c.l.b16 %v4036
    %v4144 = vunpack.c.h.b16 %v4036
    %v4145 = vunpack.c.l.b16 %v4037
    %v4146 = vunpack.c.h.b16 %v4037
    %v4147 = vunpack.c.l.b16 %v4038
    %v4148 = vunpack.c.h.b16 %v4038
    %v4149 = vunpack.c.l.b16 %v4039
    %v4150 = vunpack.c.h.b16 %v4039
    %v4151 = vunpack.c.l.b16 %v4040
    %v4152 = vunpack.c.h.b16 %v4040
    %v4153 = vunpack.c.l.b16 %v4041
    %v4154 = vunpack.c.h.b16 %v4041
    %v4155 = vunpack.c.l.b16 %v4042
    %v4156 = vunpack.c.h.b16 %v4042
    %v4157 = vunpack.c.l.b16 %v4043
    %v4158 = vunpack.c.h.b16 %v4043
    %v4159 = vunpack.c.l.b16 %v4044
    %v4160 = vunpack.c.h.b16 %v4044
    %v4161 = vunpack.c.l.b16 %v4045
    %v4162 = vunpack.c.h.b16 %v4045
    %v4163 = vunpack.c.l.b16 %v4046
    %v4164 = vunpack.c.h.b16 %v4046
    %v4165 = vpack.c.b16 %v4105, %v4101
    %v4166 = vpack.c.b16 %v4106, %v4102
    %v4167 = vpack.c.b16 %v4107, %v4103
    %v4168 = vpack.c.b16 %v4108, %v4104
    %v4169 = vpack.c.b16 %v4113, %v4109
    %v4170 = vpack.c.b16 %v4114, %v4110
    %v4171 = vpack.c.b16 %v4115, %v4111
    %v4172 = vpack.c.b16 %v4116, %v4112
    %v4173 = vpack.c.b16 %v4121, %v4117
    %v4174 = vpack.c.b16 %v4122, %v4118
    %v4175 = vpack.c.b16 %v4123, %v4119
    %v4176 = vpack.c.b16 %v4124, %v4120
    %v4177 = vpack.c.b16 %v4129, %v4125
    %v4178 = vpack.c.b16 %v4130, %v4126
    %v4179 = vpack.c.b16 %v4131, %v4127
    %v4180 = vpack.c.b16 %v4132, %v4128
    %v4181 = vpack.c.b16 %v4137, %v4133
    %v4182 = vpack.c.b16 %v4138, %v4134
    %v4183 = vpack.c.b16 %v4139, %v4135
    %v4184 = vpack.c.b16 %v4140, %v4136
    %v4185 = vpack.c.b16 %v4145, %v4141
    %v4186 = vpack.c.b16 %v4146, %v4142
    %v4187 = vpack.c.b16 %v4147, %v4143
    %v4188 = vpack.c.b16 %v4148, %v4144
    %v4189 = vpack.c.b16 %v4153, %v4149
    %v4190 = vpack.c.b16 %v4154, %v4150
    %v4191 = vpack.c.b16 %v4155, %v4151
    %v4192 = vpack.c.b16 %v4156, %v4152
    %v4193 = vpack.c.b16 %v4161, %v4157
    %v4194 = vpack.c.b16 %v4162, %v4158
    %v4195 = vpack.c.b16 %v4163, %v4159
    %v4196 = vpack.c.b16 %v4164, %v4160
    %4229 = vmatprep.subr.bf16.mxu0 %v4194
    %4230 = vmatpush1.bf16.msra.mxu0 %v4193
    %4231 = vmatprep.subr.bf16.mxu0 %v4190
    %4232 = vmatpush1.bf16.msra.mxu0 %v4189
    %4233 = vmatprep.subr.bf16.mxu0 %v4186
    %4234 = vmatpush1.bf16.msra.mxu0 %v4185
    %4235 = vmatprep.subr.bf16.mxu0 %v4182
    %4236 = vmatpush1.bf16.msra.mxu0 %v4181
    %4237 = vmatprep.subr.bf16.mxu0 %v4178
    %4238 = vmatpush1.bf16.msra.mxu0 %v4177
    %4239 = vmatprep.subr.bf16.mxu0 %v4174
    %4240 = vmatpush1.bf16.msra.mxu0 %v4173
    %4241 = vmatprep.subr.bf16.mxu0 %v4170
    %4242 = vmatpush1.bf16.msra.mxu0 %v4169
    %4243 = vmatprep.subr.bf16.mxu0 %v4166
    %4244 = vmatpush1.bf16.msra.mxu0 %v4165
    %4245 = vmatprep.subr.bf16.mxu0 0
    %4246 = vmatpush2.bf16.msra.mxu0 0
    %4247 = vmatprep.subr.bf16.mxu0 0
    %4248 = vmatpush2.bf16.msra.mxu0 0
    %4249 = vmatprep.subr.bf16.mxu0 0
    %4250 = vmatpush2.bf16.msra.mxu0 0
    %4251 = vmatprep.subr.bf16.mxu0 0
    %4252 = vmatpush2.bf16.msra.mxu0 0
    %4253 = vmatprep.subr.bf16.mxu0 0
    %4254 = vmatpush2.bf16.msra.mxu0 0
    %4255 = vmatprep.subr.bf16.mxu0 0
    %4256 = vmatpush2.bf16.msra.mxu0 0
    %4257 = vmatprep.subr.bf16.mxu0 0
    %4258 = vmatpush2.bf16.msra.mxu0 0
    %4259 = vmatprep.subr.bf16.mxu0 0
    %4260 = vmatpush2.bf16.msra.mxu0 0
    %4261 = vmatprep.mubr.bf16.mxu0 0
    %4262 = vmatmul.mubr.bf16.gmra.mxu0 %v4014
    %v4263 = vpop.f32.mrf.mxu0
    %v4264 = vadd.f32 %v4052, %v4263
    %v4265 = vpop.f32.mrf.mxu0
    %v4266 = vadd.f32 %v4056, %v4265
    %v4267 = vpop.f32.mrf.mxu0
    %v4268 = vpop.f32.mrf.mxu0
    %4269 = vdwg.mxu0
    %4270 = vmatprep.subr.bf16.mxu0 %v4196
    %4271 = vmatpush1.bf16.msra.mxu0 %v4195
    %4272 = vmatprep.subr.bf16.mxu0 %v4192
    %4273 = vmatpush1.bf16.msra.mxu0 %v4191
    %4274 = vmatprep.subr.bf16.mxu0 %v4188
    %4275 = vmatpush1.bf16.msra.mxu0 %v4187
    %4276 = vmatprep.subr.bf16.mxu0 %v4184
    %4277 = vmatpush1.bf16.msra.mxu0 %v4183
    %4278 = vmatprep.subr.bf16.mxu0 %v4180
    %4279 = vmatpush1.bf16.msra.mxu0 %v4179
    %4280 = vmatprep.subr.bf16.mxu0 %v4176
    %4281 = vmatpush1.bf16.msra.mxu0 %v4175
    %4282 = vmatprep.subr.bf16.mxu0 %v4172
    %4283 = vmatpush1.bf16.msra.mxu0 %v4171
    %4284 = vmatprep.subr.bf16.mxu0 %v4168
    %4285 = vmatpush1.bf16.msra.mxu0 %v4167
    %4286 = vmatprep.subr.bf16.mxu0 0
    %4287 = vmatpush2.bf16.msra.mxu0 0
    %4288 = vmatprep.subr.bf16.mxu0 0
    %4289 = vmatpush2.bf16.msra.mxu0 0
    %4290 = vmatprep.subr.bf16.mxu0 0
    %4291 = vmatpush2.bf16.msra.mxu0 0
    %4292 = vmatprep.subr.bf16.mxu0 0
    %4293 = vmatpush2.bf16.msra.mxu0 0
    %4294 = vmatprep.subr.bf16.mxu0 0
    %4295 = vmatpush2.bf16.msra.mxu0 0
    %4296 = vmatprep.subr.bf16.mxu0 0
    %4297 = vmatpush2.bf16.msra.mxu0 0
    %4298 = vmatprep.subr.bf16.mxu0 0
    %4299 = vmatpush2.bf16.msra.mxu0 0
    %4300 = vmatprep.subr.bf16.mxu0 0
    %4301 = vmatpush2.bf16.msra.mxu0 0
    %4302 = vmatprep.mubr.bf16.mxu0 0
    %4303 = vmatmul.mubr.bf16.gmra.mxu0 %v4014
    %v4304 = vpop.f32.mrf.mxu0
    %v4305 = vadd.f32 %v4060, %v4304
    %v4306 = vpop.f32.mrf.mxu0
    %v4307 = vadd.f32 %v4064, %v4306
    %v4308 = vpop.f32.mrf.mxu0
    %v4309 = vpop.f32.mrf.mxu0
    %4310 = vdwg.mxu0
    %v4311 = vmax.f32 %v4264, 0.0
    %v4312 = vmax.f32 %v4266, 0.0
    %v4313 = vmax.f32 %v4305, 0.0
    %v4314 = vmax.f32 %v4307, 0.0
    %v4315 = vpack.c.bf16 %v4311, %v4311
    %v4316 = vpack.c.bf16 %v4312, %v4312
    %v4317 = vpack.c.bf16 %v4313, %v4313
    %v4318 = vpack.c.bf16 %v4314, %v4314
    %v4319 = vld [vmem:[#allocation17] sm:$0xf]
    %v4320 = vld [vmem:[#allocation17 + $0x4] sm:$0xf]
    %v4321 = vld [vmem:[#allocation17 + $0x8] sm:$0xf]
    %v4322 = vld [vmem:[#allocation17 + $0xc] sm:$0xf]
    %v4323 = vld [vmem:[#allocation17 + $0x10] sm:$0xf]
    %v4324 = vld [vmem:[#allocation17 + $0x14] sm:$0xf]
    %v4325 = vld [vmem:[#allocation17 + $0x18] sm:$0xf]
    %v4326 = vld [vmem:[#allocation17 + $0x1c] sm:$0xf]
    %v4327 = vld [vmem:[#allocation17 + $0x20] sm:$0xf]
    %v4328 = vld [vmem:[#allocation17 + $0x24] sm:$0xf]
    %v4329 = vld [vmem:[#allocation17 + $0x28] sm:$0xf]
    %v4330 = vld [vmem:[#allocation17 + $0x2c] sm:$0xf]
    %v4331 = vld [vmem:[#allocation17 + $0x30] sm:$0xf]
    %v4332 = vld [vmem:[#allocation17 + $0x34] sm:$0xf]
    %v4333 = vld [vmem:[#allocation17 + $0x38] sm:$0xf]
    %v4334 = vld [vmem:[#allocation17 + $0x3c] sm:$0xf]
    %v4335 = vld [vmem:[#allocation17 + $0x40] sm:$0xf]
    %v4336 = vld [vmem:[#allocation17 + $0x44] sm:$0xf]
    %v4337 = vld [vmem:[#allocation17 + $0x48] sm:$0xf]
    %v4338 = vld [vmem:[#allocation17 + $0x4c] sm:$0xf]
    %v4339 = vld [vmem:[#allocation17 + $0x50] sm:$0xf]
    %v4340 = vld [vmem:[#allocation17 + $0x54] sm:$0xf]
    %v4341 = vld [vmem:[#allocation17 + $0x58] sm:$0xf]
    %v4342 = vld [vmem:[#allocation17 + $0x5c] sm:$0xf]
    %v4343 = vld [vmem:[#allocation17 + $0x60] sm:$0xf]
    %v4344 = vld [vmem:[#allocation17 + $0x64] sm:$0xf]
    %v4345 = vld [vmem:[#allocation17 + $0x68] sm:$0xf]
    %v4346 = vld [vmem:[#allocation17 + $0x6c] sm:$0xf]
    %v4347 = vld [vmem:[#allocation17 + $0x70] sm:$0xf]
    %v4348 = vld [vmem:[#allocation17 + $0x74] sm:$0xf]
    %v4349 = vld [vmem:[#allocation17 + $0x78] sm:$0xf]
    %v4350 = vld [vmem:[#allocation17 + $0x7c] sm:$0xf]
    %v4351 = vld [vmem:[#allocation17 + $0x80] sm:$0xf]
    %v4352 = vld [vmem:[#allocation17 + $0x84] sm:$0xf]
    %v4353 = vld [vmem:[#allocation17 + $0x88] sm:$0xf]
    %v4354 = vld [vmem:[#allocation17 + $0x8c] sm:$0xf]
    %v4355 = vld [vmem:[#allocation17 + $0x90] sm:$0xf]
    %v4356 = vld [vmem:[#allocation17 + $0x94] sm:$0xf]
    %v4357 = vld [vmem:[#allocation17 + $0x98] sm:$0xf]
    %v4358 = vld [vmem:[#allocation17 + $0x9c] sm:$0xf]
    %v4359 = vld [vmem:[#allocation17 + $0xa0] sm:$0xf]
    %v4360 = vld [vmem:[#allocation17 + $0xa4] sm:$0xf]
    %v4361 = vld [vmem:[#allocation17 + $0xa8] sm:$0xf]
    %v4362 = vld [vmem:[#allocation17 + $0xac] sm:$0xf]
    %v4363 = vld [vmem:[#allocation17 + $0xb0] sm:$0xf]
    %v4364 = vld [vmem:[#allocation17 + $0xb4] sm:$0xf]
    %v4365 = vld [vmem:[#allocation17 + $0xb8] sm:$0xf]
    %v4366 = vld [vmem:[#allocation17 + $0xbc] sm:$0xf]
    %v4367 = vld [vmem:[#allocation17 + $0xc0] sm:$0xf]
    %v4368 = vld [vmem:[#allocation17 + $0xc4] sm:$0xf]
    %v4369 = vld [vmem:[#allocation17 + $0xc8] sm:$0xf]
    %v4370 = vld [vmem:[#allocation17 + $0xcc] sm:$0xf]
    %v4371 = vld [vmem:[#allocation17 + $0xd0] sm:$0xf]
    %v4372 = vld [vmem:[#allocation17 + $0xd4] sm:$0xf]
    %v4373 = vld [vmem:[#allocation17 + $0xd8] sm:$0xf]
    %v4374 = vld [vmem:[#allocation17 + $0xdc] sm:$0xf]
    %v4375 = vld [vmem:[#allocation17 + $0xe0] sm:$0xf]
    %v4376 = vld [vmem:[#allocation17 + $0xe4] sm:$0xf]
    %v4377 = vld [vmem:[#allocation17 + $0xe8] sm:$0xf]
    %v4378 = vld [vmem:[#allocation17 + $0xec] sm:$0xf]
    %v4379 = vld [vmem:[#allocation17 + $0xf0] sm:$0xf]
    %v4380 = vld [vmem:[#allocation17 + $0xf4] sm:$0xf]
    %v4381 = vld [vmem:[#allocation17 + $0xf8] sm:$0xf]
    %v4382 = vld [vmem:[#allocation17 + $0xfc] sm:$0xf]
    %v4383 = vld [vmem:[%s20] sm:$0x1]
    %v4385 = vlaneseq
    %v4386 = vshrl.u32 %v4385, 7
    %v4387 = vsub.s32 0, %v4386
    %v4388 = vrot.slane %v4383, %v4387
    %v4454 = vunpack.c.l.b16 %v4319
    %v4455 = vunpack.c.l.b16 %v4320
    %v4456 = vunpack.c.l.b16 %v4321
    %v4457 = vunpack.c.l.b16 %v4322
    %v4458 = vunpack.c.l.b16 %v4323
    %v4459 = vunpack.c.l.b16 %v4324
    %v4460 = vunpack.c.l.b16 %v4325
    %v4461 = vunpack.c.l.b16 %v4326
    %v4462 = vunpack.c.l.b16 %v4327
    %v4463 = vunpack.c.l.b16 %v4328
    %v4464 = vunpack.c.l.b16 %v4329
    %v4465 = vunpack.c.l.b16 %v4330
    %v4466 = vunpack.c.l.b16 %v4331
    %v4467 = vunpack.c.l.b16 %v4332
    %v4468 = vunpack.c.l.b16 %v4333
    %v4469 = vunpack.c.l.b16 %v4334
    %v4470 = vunpack.c.l.b16 %v4335
    %v4471 = vunpack.c.l.b16 %v4336
    %v4472 = vunpack.c.l.b16 %v4337
    %v4473 = vunpack.c.l.b16 %v4338
    %v4474 = vunpack.c.l.b16 %v4339
    %v4475 = vunpack.c.l.b16 %v4340
    %v4476 = vunpack.c.l.b16 %v4341
    %v4477 = vunpack.c.l.b16 %v4342
    %v4478 = vunpack.c.l.b16 %v4343
    %v4479 = vunpack.c.l.b16 %v4344
    %v4480 = vunpack.c.l.b16 %v4345
    %v4481 = vunpack.c.l.b16 %v4346
    %v4482 = vunpack.c.l.b16 %v4347
    %v4483 = vunpack.c.l.b16 %v4348
    %v4484 = vunpack.c.l.b16 %v4349
    %v4485 = vunpack.c.l.b16 %v4350
    %v4486 = vunpack.c.l.b16 %v4351
    %v4487 = vunpack.c.l.b16 %v4352
    %v4488 = vunpack.c.l.b16 %v4353
    %v4489 = vunpack.c.l.b16 %v4354
    %v4490 = vunpack.c.l.b16 %v4355
    %v4491 = vunpack.c.l.b16 %v4356
    %v4492 = vunpack.c.l.b16 %v4357
    %v4493 = vunpack.c.l.b16 %v4358
    %v4494 = vunpack.c.l.b16 %v4359
    %v4495 = vunpack.c.l.b16 %v4360
    %v4496 = vunpack.c.l.b16 %v4361
    %v4497 = vunpack.c.l.b16 %v4362
    %v4498 = vunpack.c.l.b16 %v4363
    %v4499 = vunpack.c.l.b16 %v4364
    %v4500 = vunpack.c.l.b16 %v4365
    %v4501 = vunpack.c.l.b16 %v4366
    %v4502 = vunpack.c.l.b16 %v4367
    %v4503 = vunpack.c.l.b16 %v4368
    %v4504 = vunpack.c.l.b16 %v4369
    %v4505 = vunpack.c.l.b16 %v4370
    %v4506 = vunpack.c.l.b16 %v4371
    %v4507 = vunpack.c.l.b16 %v4372
    %v4508 = vunpack.c.l.b16 %v4373
    %v4509 = vunpack.c.l.b16 %v4374
    %v4510 = vunpack.c.l.b16 %v4375
    %v4511 = vunpack.c.l.b16 %v4376
    %v4512 = vunpack.c.l.b16 %v4377
    %v4513 = vunpack.c.l.b16 %v4378
    %v4514 = vunpack.c.l.b16 %v4379
    %v4515 = vunpack.c.l.b16 %v4380
    %v4516 = vunpack.c.l.b16 %v4381
    %v4517 = vunpack.c.l.b16 %v4382
    %v4518 = vpack.c.b16 %v4455, %v4454
    %v4519 = vpack.c.b16 %v4457, %v4456
    %v4520 = vpack.c.b16 %v4459, %v4458
    %v4521 = vpack.c.b16 %v4461, %v4460
    %v4522 = vpack.c.b16 %v4463, %v4462
    %v4523 = vpack.c.b16 %v4465, %v4464
    %v4524 = vpack.c.b16 %v4467, %v4466
    %v4525 = vpack.c.b16 %v4469, %v4468
    %v4526 = vpack.c.b16 %v4471, %v4470
    %v4527 = vpack.c.b16 %v4473, %v4472
    %v4528 = vpack.c.b16 %v4475, %v4474
    %v4529 = vpack.c.b16 %v4477, %v4476
    %v4530 = vpack.c.b16 %v4479, %v4478
    %v4531 = vpack.c.b16 %v4481, %v4480
    %v4532 = vpack.c.b16 %v4483, %v4482
    %v4533 = vpack.c.b16 %v4485, %v4484
    %v4534 = vpack.c.b16 %v4487, %v4486
    %v4535 = vpack.c.b16 %v4489, %v4488
    %v4536 = vpack.c.b16 %v4491, %v4490
    %v4537 = vpack.c.b16 %v4493, %v4492
    %v4538 = vpack.c.b16 %v4495, %v4494
    %v4539 = vpack.c.b16 %v4497, %v4496
    %v4540 = vpack.c.b16 %v4499, %v4498
    %v4541 = vpack.c.b16 %v4501, %v4500
    %v4542 = vpack.c.b16 %v4503, %v4502
    %v4543 = vpack.c.b16 %v4505, %v4504
    %v4544 = vpack.c.b16 %v4507, %v4506
    %v4545 = vpack.c.b16 %v4509, %v4508
    %v4546 = vpack.c.b16 %v4511, %v4510
    %v4547 = vpack.c.b16 %v4513, %v4512
    %v4548 = vpack.c.b16 %v4515, %v4514
    %v4549 = vpack.c.b16 %v4517, %v4516
    %4582 = vmatprep.subr.bf16.mxu0 0
    %4583 = vmatpush1.bf16.msra.mxu0 %v4525
    %4584 = vmatprep.subr.bf16.mxu0 0
    %4585 = vmatpush1.bf16.msra.mxu0 %v4524
    %4586 = vmatprep.subr.bf16.mxu0 0
    %4587 = vmatpush1.bf16.msra.mxu0 %v4523
    %4588 = vmatprep.subr.bf16.mxu0 0
    %4589 = vmatpush1.bf16.msra.mxu0 %v4522
    %4590 = vmatprep.subr.bf16.mxu0 0
    %4591 = vmatpush1.bf16.msra.mxu0 %v4521
    %4592 = vmatprep.subr.bf16.mxu0 0
    %4593 = vmatpush1.bf16.msra.mxu0 %v4520
    %4594 = vmatprep.subr.bf16.mxu0 0
    %4595 = vmatpush1.bf16.msra.mxu0 %v4519
    %4596 = vmatprep.subr.bf16.mxu0 0
    %4597 = vmatpush1.bf16.msra.mxu0 %v4518
    %4598 = vmatprep.subr.bf16.mxu0 0
    %4599 = vmatpush2.bf16.msra.mxu0 %v4533
    %4600 = vmatprep.subr.bf16.mxu0 0
    %4601 = vmatpush2.bf16.msra.mxu0 %v4532
    %4602 = vmatprep.subr.bf16.mxu0 0
    %4603 = vmatpush2.bf16.msra.mxu0 %v4531
    %4604 = vmatprep.subr.bf16.mxu0 0
    %4605 = vmatpush2.bf16.msra.mxu0 %v4530
    %4606 = vmatprep.subr.bf16.mxu0 0
    %4607 = vmatpush2.bf16.msra.mxu0 %v4529
    %4608 = vmatprep.subr.bf16.mxu0 0
    %4609 = vmatpush2.bf16.msra.mxu0 %v4528
    %4610 = vmatprep.subr.bf16.mxu0 0
    %4611 = vmatpush2.bf16.msra.mxu0 %v4527
    %4612 = vmatprep.subr.bf16.mxu0 0
    %4613 = vmatpush2.bf16.msra.mxu0 %v4526
    %4614 = vmatprep.mubr.bf16.mxu0 %v4316
    %4615 = vmatmul.mubr.bf16.gmra.mxu0 %v4315
    %v4616 = vpop.f32.mrf.mxu0
    %v4617 = vadd.f32 %v4388, %v4616
    %v4618 = vpop.f32.mrf.mxu0
    %v4619 = vpop.f32.mrf.mxu0
    %v4620 = vpop.f32.mrf.mxu0
    %4621 = vdwg.mxu0
    %4622 = vmatprep.subr.bf16.mxu0 0
    %4623 = vmatpush1.bf16.msra.mxu0 %v4541
    %4624 = vmatprep.subr.bf16.mxu0 0
    %4625 = vmatpush1.bf16.msra.mxu0 %v4540
    %4626 = vmatprep.subr.bf16.mxu0 0
    %4627 = vmatpush1.bf16.msra.mxu0 %v4539
    %4628 = vmatprep.subr.bf16.mxu0 0
    %4629 = vmatpush1.bf16.msra.mxu0 %v4538
    %4630 = vmatprep.subr.bf16.mxu0 0
    %4631 = vmatpush1.bf16.msra.mxu0 %v4537
    %4632 = vmatprep.subr.bf16.mxu0 0
    %4633 = vmatpush1.bf16.msra.mxu0 %v4536
    %4634 = vmatprep.subr.bf16.mxu0 0
    %4635 = vmatpush1.bf16.msra.mxu0 %v4535
    %4636 = vmatprep.subr.bf16.mxu0 0
    %4637 = vmatpush1.bf16.msra.mxu0 %v4534
    %4638 = vmatprep.subr.bf16.mxu0 0
    %4639 = vmatpush2.bf16.msra.mxu0 %v4549
    %4640 = vmatprep.subr.bf16.mxu0 0
    %4641 = vmatpush2.bf16.msra.mxu0 %v4548
    %4642 = vmatprep.subr.bf16.mxu0 0
    %4643 = vmatpush2.bf16.msra.mxu0 %v4547
    %4644 = vmatprep.subr.bf16.mxu0 0
    %4645 = vmatpush2.bf16.msra.mxu0 %v4546
    %4646 = vmatprep.subr.bf16.mxu0 0
    %4647 = vmatpush2.bf16.msra.mxu0 %v4545
    %4648 = vmatprep.subr.bf16.mxu0 0
    %4649 = vmatpush2.bf16.msra.mxu0 %v4544
    %4650 = vmatprep.subr.bf16.mxu0 0
    %4651 = vmatpush2.bf16.msra.mxu0 %v4543
    %4652 = vmatprep.subr.bf16.mxu0 0
    %4653 = vmatpush2.bf16.msra.mxu0 %v4542
    %4654 = vmatprep.mubr.bf16.mxu0 %v4318
    %4655 = vmatmul.mubr.bf16.gmra.mxu0 %v4317
    %v4656 = vpop.f32.mrf.mxu0
    %v4657 = vadd.f32 %v4617, %v4656
    %v4658 = vpop.f32.mrf.mxu0
    %v4659 = vpop.f32.mrf.mxu0
    %v4660 = vpop.f32.mrf.mxu0
    %4661 = vdwg.mxu0
    %v4662 = vmax.f32 %v4657, 0.0
    %v4663 = vpack.c.bf16 %v4662, %v4662
    %v4664 = vld [vmem:[#allocation19] sm:$0xf]
    %v4665 = vld [vmem:[#allocation19 + $0x4] sm:$0xf]
    %v4666 = vld [vmem:[#allocation19 + $0x8] sm:$0xf]
    %v4667 = vld [vmem:[#allocation19 + $0xc] sm:$0xf]
    %v4668 = vld [vmem:[#allocation19 + $0x10] sm:$0xf]
    %v4669 = vld [vmem:[#allocation19 + $0x14] sm:$0xf]
    %v4670 = vld [vmem:[#allocation19 + $0x18] sm:$0xf]
    %v4671 = vld [vmem:[#allocation19 + $0x1c] sm:$0xf]
    %v4672 = vld [vmem:[#allocation19 + $0x20] sm:$0xf]
    %v4673 = vld [vmem:[#allocation19 + $0x24] sm:$0xf]
    %v4674 = vld [vmem:[#allocation19 + $0x28] sm:$0xf]
    %v4675 = vld [vmem:[#allocation19 + $0x2c] sm:$0xf]
    %v4676 = vld [vmem:[#allocation19 + $0x30] sm:$0xf]
    %v4677 = vld [vmem:[#allocation19 + $0x34] sm:$0xf]
    %v4678 = vld [vmem:[#allocation19 + $0x38] sm:$0xf]
    %v4679 = vld [vmem:[#allocation19 + $0x3c] sm:$0xf]
    %v4680 = vld [vmem:[%s22] sm:$0x1]
    %v4682 = vlaneseq
    %v4683 = vshrl.u32 %v4682, 7
    %v4684 = vsub.s32 0, %v4683
    %v4685 = vrot.slane %v4680, %v4684
    %v4703 = vunpack.c.l.b16 %v4664
    %v4704 = vunpack.c.l.b16 %v4665
    %v4705 = vunpack.c.l.b16 %v4666
    %v4706 = vunpack.c.l.b16 %v4667
    %v4707 = vunpack.c.l.b16 %v4668
    %v4708 = vunpack.c.l.b16 %v4669
    %v4709 = vunpack.c.l.b16 %v4670
    %v4710 = vunpack.c.l.b16 %v4671
    %v4711 = vunpack.c.l.b16 %v4672
    %v4712 = vunpack.c.l.b16 %v4673
    %v4713 = vunpack.c.l.b16 %v4674
    %v4714 = vunpack.c.l.b16 %v4675
    %v4715 = vunpack.c.l.b16 %v4676
    %v4716 = vunpack.c.l.b16 %v4677
    %v4717 = vunpack.c.l.b16 %v4678
    %v4718 = vunpack.c.l.b16 %v4679
    %v4719 = vpack.c.b16 %v4704, %v4703
    %v4720 = vpack.c.b16 %v4706, %v4705
    %v4721 = vpack.c.b16 %v4708, %v4707
    %v4722 = vpack.c.b16 %v4710, %v4709
    %v4723 = vpack.c.b16 %v4712, %v4711
    %v4724 = vpack.c.b16 %v4714, %v4713
    %v4725 = vpack.c.b16 %v4716, %v4715
    %v4726 = vpack.c.b16 %v4718, %v4717
    %4735 = vmatprep.subr.bf16.mxu0 0
    %4736 = vmatpush1.bf16.msra.mxu0 %v4726
    %4737 = vmatprep.subr.bf16.mxu0 0
    %4738 = vmatpush1.bf16.msra.mxu0 %v4725
    %4739 = vmatprep.subr.bf16.mxu0 0
    %4740 = vmatpush1.bf16.msra.mxu0 %v4724
    %4741 = vmatprep.subr.bf16.mxu0 0
    %4742 = vmatpush1.bf16.msra.mxu0 %v4723
    %4743 = vmatprep.subr.bf16.mxu0 0
    %4744 = vmatpush1.bf16.msra.mxu0 %v4722
    %4745 = vmatprep.subr.bf16.mxu0 0
    %4746 = vmatpush1.bf16.msra.mxu0 %v4721
    %4747 = vmatprep.subr.bf16.mxu0 0
    %4748 = vmatpush1.bf16.msra.mxu0 %v4720
    %4749 = vmatprep.subr.bf16.mxu0 0
    %4750 = vmatpush1.bf16.msra.mxu0 %v4719
    %4751 = vmatprep.subr.bf16.mxu0 0
    %4752 = vmatpush2.bf16.msra.mxu0 0
    %4753 = vmatprep.subr.bf16.mxu0 0
    %4754 = vmatpush2.bf16.msra.mxu0 0
    %4755 = vmatprep.subr.bf16.mxu0 0
    %4756 = vmatpush2.bf16.msra.mxu0 0
    %4757 = vmatprep.subr.bf16.mxu0 0
    %4758 = vmatpush2.bf16.msra.mxu0 0
    %4759 = vmatprep.subr.bf16.mxu0 0
    %4760 = vmatpush2.bf16.msra.mxu0 0
    %4761 = vmatprep.subr.bf16.mxu0 0
    %4762 = vmatpush2.bf16.msra.mxu0 0
    %4763 = vmatprep.subr.bf16.mxu0 0
    %4764 = vmatpush2.bf16.msra.mxu0 0
    %4765 = vmatprep.subr.bf16.mxu0 0
    %4766 = vmatpush2.bf16.msra.mxu0 0
    %4767 = vmatprep.mubr.bf16.mxu0 0
    %4768 = vmatmul.mubr.bf16.gmra.mxu0 %v4663
    %v4769 = vpop.f32.mrf.mxu0
    %v4770 = vadd.f32 %v4685, %v4769
    %v4771 = vpop.f32.mrf.mxu0
    %v4772 = vpop.f32.mrf.mxu0
    %v4773 = vpop.f32.mrf.mxu0
    %4774 = vdwg.mxu0
    %v4775 = vmax.f32 %v4770, 0.0
    %v4776 = vpack.c.bf16 %v4775, %v4775
    %v4777 = vld [vmem:[#allocation20] sm:$0xf]
    %v4778 = vld [vmem:[#allocation20 + $0x4] sm:$0xf]
    %v4779 = vld [vmem:[#allocation20 + $0x8] sm:$0xf]
    %v4780 = vld [vmem:[#allocation20 + $0xc] sm:$0xf]
    %v4781 = vld [vmem:[#allocation20 + $0x10] sm:$0xf]
    %v4782 = vld [vmem:[#allocation20 + $0x14] sm:$0xf]
    %v4783 = vld [vmem:[#allocation20 + $0x18] sm:$0xf]
    %v4784 = vld [vmem:[#allocation20 + $0x1c] sm:$0xf]
    %v4785 = vld [vmem:[#allocation20 + $0x20] sm:$0xf]
    %v4786 = vld [vmem:[#allocation20 + $0x24] sm:$0xf]
    %v4787 = vld [vmem:[#allocation20 + $0x28] sm:$0xf]
    %v4788 = vld [vmem:[#allocation20 + $0x2c] sm:$0xf]
    %v4789 = vld [vmem:[#allocation20 + $0x30] sm:$0xf]
    %v4790 = vld [vmem:[#allocation20 + $0x34] sm:$0xf]
    %v4791 = vld [vmem:[#allocation20 + $0x38] sm:$0xf]
    %v4792 = vld [vmem:[#allocation20 + $0x3c] sm:$0xf]
    %v4793 = vld [vmem:[%s24] sm:$0x1]
    %v4795 = vlaneseq
    %v4796 = vshrl.u32 %v4795, 7
    %v4797 = vsub.s32 0, %v4796
    %v4798 = vrot.slane %v4793, %v4797
    %v4816 = vunpack.c.l.b16 %v4777
    %v4817 = vunpack.c.l.b16 %v4778
    %v4818 = vunpack.c.l.b16 %v4779
    %v4819 = vunpack.c.l.b16 %v4780
    %v4820 = vunpack.c.l.b16 %v4781
    %v4821 = vunpack.c.l.b16 %v4782
    %v4822 = vunpack.c.l.b16 %v4783
    %v4823 = vunpack.c.l.b16 %v4784
    %v4824 = vunpack.c.l.b16 %v4785
    %v4825 = vunpack.c.l.b16 %v4786
    %v4826 = vunpack.c.l.b16 %v4787
    %v4827 = vunpack.c.l.b16 %v4788
    %v4828 = vunpack.c.l.b16 %v4789
    %v4829 = vunpack.c.l.b16 %v4790
    %v4830 = vunpack.c.l.b16 %v4791
    %v4831 = vunpack.c.l.b16 %v4792
    %v4832 = vpack.c.b16 %v4817, %v4816
    %v4833 = vpack.c.b16 %v4819, %v4818
    %v4834 = vpack.c.b16 %v4821, %v4820
    %v4835 = vpack.c.b16 %v4823, %v4822
    %v4836 = vpack.c.b16 %v4825, %v4824
    %v4837 = vpack.c.b16 %v4827, %v4826
    %v4838 = vpack.c.b16 %v4829, %v4828
    %v4839 = vpack.c.b16 %v4831, %v4830
    %4848 = vmatprep.subr.bf16.mxu0 0
    %4849 = vmatpush1.bf16.msra.mxu0 %v4839
    %4850 = vmatprep.subr.bf16.mxu0 0
    %4851 = vmatpush1.bf16.msra.mxu0 %v4838
    %4852 = vmatprep.subr.bf16.mxu0 0
    %4853 = vmatpush1.bf16.msra.mxu0 %v4837
    %4854 = vmatprep.subr.bf16.mxu0 0
    %4855 = vmatpush1.bf16.msra.mxu0 %v4836
    %4856 = vmatprep.subr.bf16.mxu0 0
    %4857 = vmatpush1.bf16.msra.mxu0 %v4835
    %4858 = vmatprep.subr.bf16.mxu0 0
    %4859 = vmatpush1.bf16.msra.mxu0 %v4834
    %4860 = vmatprep.subr.bf16.mxu0 0
    %4861 = vmatpush1.bf16.msra.mxu0 %v4833
    %4862 = vmatprep.subr.bf16.mxu0 0
    %4863 = vmatpush1.bf16.msra.mxu0 %v4832
    %4864 = vmatprep.subr.bf16.mxu0 0
    %4865 = vmatpush2.bf16.msra.mxu0 0
    %4866 = vmatprep.subr.bf16.mxu0 0
    %4867 = vmatpush2.bf16.msra.mxu0 0
    %4868 = vmatprep.subr.bf16.mxu0 0
    %4869 = vmatpush2.bf16.msra.mxu0 0
    %4870 = vmatprep.subr.bf16.mxu0 0
    %4871 = vmatpush2.bf16.msra.mxu0 0
    %4872 = vmatprep.subr.bf16.mxu0 0
    %4873 = vmatpush2.bf16.msra.mxu0 0
    %4874 = vmatprep.subr.bf16.mxu0 0
    %4875 = vmatpush2.bf16.msra.mxu0 0
    %4876 = vmatprep.subr.bf16.mxu0 0
    %4877 = vmatpush2.bf16.msra.mxu0 0
    %4878 = vmatprep.subr.bf16.mxu0 0
    %4879 = vmatpush2.bf16.msra.mxu0 0
    %4880 = vmatprep.mubr.bf16.mxu0 0
    %4881 = vmatmul.mubr.bf16.gmra.mxu0 %v4776
    %v4882 = vpop.f32.mrf.mxu0
    %v4883 = vadd.f32 %v4798, %v4882
    %v4884 = vpop.f32.mrf.mxu0
    %v4885 = vpop.f32.mrf.mxu0
    %v4886 = vpop.f32.mrf.mxu0
    %4887 = vdwg.mxu0
    %4888 = vst [vmem:[#allocation22] sm:$0x3] %v4883
    // Predicated region
    $region150: #{_forward.1} parent=1 // pred_check
      _
    $region151: #{_forward.1} parent=1 // pred_check_branch
      %4890 = sbr.rel (0) target = $region153
    $region152: #{_forward.1} parent=1 // pred_region
      %s4892 = ssub.s32 32, 32
      %4893 = vsyncadd [#allocation4], %s4892
      %s4895 = sshll.u32 [#allocation22], 4
      %s4896 = int_to_ptr.vmem [resolvable:$true] %s4895
      %4898 = dma.vmem_to_hbm [thread:$0]  %s4896, 32, %s25, [#allocation4]
    $region153: #{_forward.1} parent=1 // pred_fallthru
      _
    // Predicated region
    $region154: #{_forward.1} parent=1 // pred_check
      _
    $region155: #{_forward.1} parent=1 // pred_check_branch
      %4900 = sbr.rel (0) target = $region157
    $region156: #{_forward.1} parent=1 // pred_region
      %4901 = dma.done [#allocation4], 32
    $region157: #{_forward.1} parent=1 // pred_fallthru
      _
    %4902 = vsyncpa [#allocation3], 1
    %4903 = vsyncpa [#allocation6], 1
    %4904 = vsyncpa [#allocation9], 1
    %4905 = vsyncpa [#allocation12], 1
    %4906 = vsyncpa [#allocation15], 1
    %4907 = vsyncpa [#allocation18], 1
    %4908 = vsyncpa [#allocation21], 1
    %4909 = vsyncpa [#allocation4], 1

</llo_original>
